<compile_context>
chip_gen: v6e
topology: v6e:2x2x1
jax: 0.10.0
libtpu: 0.0.40
codegen_flags: <defaults>
</compile_context>

<pallas_src>
import functools

import jax
import jax.numpy as jnp
from jax.experimental import pallas as pl
from jax.experimental.pallas import tpu as pltpu


def _round_up(x, m):
    return ((x + m - 1) // m) * m


# --------------------------------------------------------------------------
# Fused decoder-layer kernel (one grid step == one batch element)
# --------------------------------------------------------------------------

def _make_decoder_kernel(*, T, S_enc, S_plm, E, H, S_pad,
                         has_self_mask, has_self_kpm, has_plm_kpm):
    Dh = E // H
    scale = float(Dh) ** -0.5
    f32 = jnp.float32

    def attend(q, k, v, S, add_mask=None, exact=False):
        """q:(T,E) pre-scaled, k/v:(S,E). Head-batched attention.

        Returns (ctx (T,E), probs (H,T,S))."""
        qh = jnp.transpose(q.reshape(T, H, Dh), (1, 0, 2))   # (H, T, Dh)
        kh = jnp.transpose(k.reshape(S, H, Dh), (1, 0, 2))   # (H, S, Dh)
        vh = jnp.transpose(v.reshape(S, H, Dh), (1, 0, 2))   # (H, S, Dh)
        s = jnp.einsum("htd,hsd->hts", qh, kh, preferred_element_type=f32)
        if add_mask is not None:
            s = s + add_mask
        m = jnp.max(s, axis=-1, keepdims=True)
        e = jnp.exp(s - m)
        den = jnp.sum(e, axis=-1, keepdims=True)
        if exact:
            p = e / den                                       # exact for emitted weights
        else:
            p = e * pl.reciprocal(den, approx=True)           # EUP, off the VALU
        ctx = jnp.einsum("hts,hsd->htd", p, vh, preferred_element_type=f32)
        ctx = jnp.transpose(ctx, (1, 0, 2)).reshape(T, E)
        return ctx, p

    def kernel(*refs):
        it = iter(refs)
        x_ref, enc_ref, plm_ref = next(it), next(it), next(it)
        self_mask_ref = next(it) if has_self_mask else None
        self_kpm_ref = next(it) if has_self_kpm else None
        plm_kpm_ref = next(it) if has_plm_kpm else None
        (self_wqkv, self_bqkv, self_wo, self_bo,
         cross_wq, cross_bq,
         enc_wkv, enc_bkv, plm_wkv, plm_bkv,
         cross_wo, cross_bo,
         fc1_w, fc1_b, fc2_w, fc2_b) = (next(it) for _ in range(16))
        x_out_ref, attn_out_ref = next(it), next(it)

        x0 = x_ref[0].astype(f32)        # (T, E)
        enc = enc_ref[0].astype(f32)     # (S_enc, K_enc)
        plm = plm_ref[0].astype(f32)     # (S_plm, K_plm)

        def proj(x, w, b):
            return jnp.dot(x, w[...], preferred_element_type=f32) + b[...]

        # ---- self attention (fused q|k|v projection) + residual ----
        qkv = proj(x0, self_wqkv, self_bqkv)                  # (T, 3E)
        add_m = self_mask_ref[...][None].astype(f32) if has_self_mask else None
        if has_self_kpm:
            kpm = self_kpm_ref[...].astype(f32)               # (1, 1, T)
            add_m = kpm if add_m is None else add_m + kpm
        ctx_s, _ = attend(qkv[:, :E] * scale, qkv[:, E:2 * E], qkv[:, 2 * E:],
                          T, add_mask=add_m)
        x1 = x0 + proj(ctx_s, self_wo, self_bo)

        # ---- encoder + PLM cross attention (fused q / output projections) ----
        q2 = proj(x1, cross_wq, cross_bq)                     # (T, 2E)
        kv_e = proj(enc, enc_wkv, enc_bkv)                    # (S_enc, 2E)
        kv_p = proj(plm, plm_wkv, plm_bkv)                    # (S_plm, 2E)
        # encoder attention: need_weights=True -> exact softmax division
        ctx_e, p_e = attend(q2[:, :E] * scale, kv_e[:, :E], kv_e[:, E:],
                            S_enc, exact=True)                # kpm forced None
        plm_mask = plm_kpm_ref[...].astype(f32) if has_plm_kpm else None
        ctx_p, _ = attend(q2[:, E:] * scale, kv_p[:, :E], kv_p[:, E:],
                          S_plm, add_mask=plm_mask)

        # head-averaged encoder-attention weights, lane-dense padded full store
        avg = jnp.mean(p_e, axis=0)                           # (T, S_enc)
        if S_pad > S_enc:
            avg = jnp.concatenate(
                [avg, jnp.zeros((T, S_pad - S_enc), f32)], axis=-1)
        attn_out_ref[...] = avg.reshape(1, T, S_pad).astype(attn_out_ref.dtype)

        # eval-mode get_ratio() == [0.5, 0.5]; both output projections fused
        ctx_cat = jnp.concatenate([ctx_e, ctx_p], axis=-1)    # (T, 2E)
        x2 = x1 + 0.5 * proj(ctx_cat, cross_wo, cross_bo)

        # ---- feed-forward + residual ----
        h1 = jnp.maximum(proj(x2, fc1_w, fc1_b), 0.0)
        x3 = x2 + proj(h1, fc2_w, fc2_b)
        x_out_ref[...] = x3.reshape(1, T, E).astype(x_out_ref.dtype)

    return kernel


# --------------------------------------------------------------------------
# Host wrapper: one fused pallas_call, gridded over batch
# --------------------------------------------------------------------------

def decoder_layer_forward(params, x, encoder_out, plm_out,
                          self_attn_mask=None, self_attn_padding_mask=None,
                          plm_padding_mask=None, num_heads=4):
    T, B, E = x.shape
    S_enc, _, K_enc = encoder_out.shape
    S_plm, _, K_plm = plm_out.shape
    assert E % num_heads == 0
    f32 = jnp.float32
    S_pad = _round_up(S_enc, 128)

    # Batch-major 3-D views, NATIVE dtype (cast happens inside the kernel).
    x_b = x.transpose(1, 0, 2)                 # (B, T, E)
    enc_b = encoder_out.transpose(1, 0, 2)     # (B, S_enc, K_enc)
    plm_b = plm_out.transpose(1, 0, 2)         # (B, S_plm, K_plm)

    def additive(m):
        if m is None:
            return None
        if m.dtype == jnp.bool_:               # bool mask -> additive -inf-like
            return jnp.where(m, -1e9, 0.0).astype(f32)
        return m.astype(f32)                   # already an additive float mask

    self_mask = additive(self_attn_mask)                    # (T, T)      or None
    self_kpm = additive(self_attn_padding_mask)             # (B, T)      or None
    plm_kpm = additive(plm_padding_mask)                    # (B, S_plm)  or None
    if self_kpm is not None:
        self_kpm = self_kpm.reshape(B, 1, T)
    if plm_kpm is not None:
        plm_kpm = plm_kpm.reshape(B, 1, S_plm)

    def batch_spec(arr):
        _, d1, d2 = arr.shape
        return pl.BlockSpec((1, d1, d2), lambda b: (b, 0, 0))

    def resident_spec(arr):                    # constant index_map -> stays in VMEM
        nd = arr.ndim
        return pl.BlockSpec(arr.shape, lambda b, nd=nd: (0,) * nd)

    inputs, in_specs = [], []

    def add(arr, spec):
        inputs.append(arr)
        in_specs.append(spec)

    add(x_b, batch_spec(x_b))
    add(enc_b, batch_spec(enc_b))
    add(plm_b, batch_spec(plm_b))
    if self_mask is not None:
        add(self_mask, resident_spec(self_mask))
    if self_kpm is not None:
        add(self_kpm, batch_spec(self_kpm))
    if plm_kpm is not None:
        add(plm_kpm, batch_spec(plm_kpm))
    for name in ("self_wqkv_t", "self_bqkv", "self_wo_t", "self_bo",
                 "cross_wq_t", "cross_bq",
                 "enc_wkv_t", "enc_bkv", "plm_wkv_t", "plm_bkv",
                 "cross_wo_t", "cross_bo",
                 "fc1_wt", "fc1_b", "fc2_wt", "fc2_b"):
        add(params[name], resident_spec(params[name]))

    kernel = _make_decoder_kernel(
        T=T, S_enc=S_enc, S_plm=S_plm, E=E, H=num_heads, S_pad=S_pad,
        has_self_mask=self_mask is not None,
        has_self_kpm=self_kpm is not None,
        has_plm_kpm=plm_kpm is not None,
    )

    x_out, attn_pad = pl.pallas_call(
        kernel,
        out_shape=(jax.ShapeDtypeStruct((B, T, E), x.dtype),
                   jax.ShapeDtypeStruct((B, T, S_pad), f32)),
        grid=(B,),
        in_specs=in_specs,
        out_specs=(pl.BlockSpec((1, T, E), lambda b: (b, 0, 0)),
                   pl.BlockSpec((1, T, S_pad), lambda b: (b, 0, 0))),
        compiler_params=pltpu.CompilerParams(
            dimension_semantics=("parallel",),
            vmem_limit_bytes=32 * 1024 * 1024),
    )(*inputs)

    x_final = x_out.transpose(1, 0, 2)          # back to (T, B, E)
    attn = attn_pad[:, :, :S_enc]               # strip lane padding
    return x_final, attn, None


# --------------------------------------------------------------------------
# Deterministic parameter init (PyTorch layout) + kernel-layout preparation
# --------------------------------------------------------------------------

def init_params(key, E, FFN, enc_dim, plm_dim):
    keys = iter(jax.random.split(key, 32))

    def lin(out_d, in_d):
        w = 0.02 * jax.random.normal(next(keys), (out_d, in_d), jnp.float32)
        b = 0.02 * jax.random.normal(next(keys), (out_d,), jnp.float32)
        return w, b

    def mha(kdim):
        wq, bq = lin(E, E)
        wk, bk = lin(E, kdim)
        wv, bv = lin(E, kdim)
        wo, bo = lin(E, E)
        return dict(wq=wq, bq=bq, wk=wk, bk=bk, wv=wv, bv=bv, wo=wo, bo=bo)

    fc1_w, fc1_b = lin(FFN, E)
    fc2_w, fc2_b = lin(E, FFN)
    # NOTE: the module's LayerNorms are never applied in forward -> omitted.
    return dict(self_attn=mha(E), encoder_attn=mha(enc_dim),
                outside_attn=mha(plm_dim),
                fc1_w=fc1_w, fc1_b=fc1_b, fc2_w=fc2_w, fc2_b=fc2_b)


def prepare_params(tp):
    """One-time conversion to kernel layout: pre-transposed + fused projections."""
    sa, ea, oa = tp["self_attn"], tp["encoder_attn"], tp["outside_attn"]
    return dict(
        # self-attn fused q|k|v (input x0)
        self_wqkv_t=jnp.concatenate([sa["wq"].T, sa["wk"].T, sa["wv"].T], axis=1),
        self_bqkv=jnp.concatenate([sa["bq"], sa["bk"], sa["bv"]]).reshape(1, -1),
        self_wo_t=sa["wo"].T, self_bo=sa["bo"].reshape(1, -1),
        # encoder-attn q | plm-attn q fused (both take x1)
        cross_wq_t=jnp.concatenate([ea["wq"].T, oa["wq"].T], axis=1),
        cross_bq=jnp.concatenate([ea["bq"], oa["bq"]]).reshape(1, -1),
        enc_wkv_t=jnp.concatenate([ea["wk"].T, ea["wv"].T], axis=1),
        enc_bkv=jnp.concatenate([ea["bk"], ea["bv"]]).reshape(1, -1),
        plm_wkv_t=jnp.concatenate([oa["wk"].T, oa["wv"].T], axis=1),
        plm_bkv=jnp.concatenate([oa["bk"], oa["bv"]]).reshape(1, -1),
        # fused cross output projection: [ctx_enc|ctx_plm] @ this == wo_e(.)+wo_p(.)
        cross_wo_t=jnp.concatenate([ea["wo"].T, oa["wo"].T], axis=0),
        cross_bo=(ea["bo"] + oa["bo"]).reshape(1, -1),
        fc1_wt=tp["fc1_w"].T, fc1_b=tp["fc1_b"].reshape(1, -1),
        fc2_wt=tp["fc2_w"].T, fc2_b=tp["fc2_b"].reshape(1, -1),
    )


# --------------------------------------------------------------------------
# Pure-JAX reference (eval-mode semantics of the PyTorch module)
# --------------------------------------------------------------------------

def _reference_forward(raw, x, enc, plm, self_mask, plm_pad_bool, H):
    T, B, E = x.shape
    Dh = E // H
    scale = Dh ** -0.5

    def mha(p, q_in, kv_in, attn_mask=None, kpm_add=None, need_w=False):
        Tq, S = q_in.shape[0], kv_in.shape[0]
        q = (q_in @ p["wq"].T + p["bq"]) * scale
        k = kv_in @ p["wk"].T + p["bk"]
        v = kv_in @ p["wv"].T + p["bv"]
        q = q.transpose(1, 0, 2).reshape(B, Tq, H, Dh).transpose(0, 2, 1, 3)
        k = k.transpose(1, 0, 2).reshape(B, S, H, Dh).transpose(0, 2, 1, 3)
        v = v.transpose(1, 0, 2).reshape(B, S, H, Dh).transpose(0, 2, 1, 3)
        s = jnp.einsum("bhtd,bhsd->bhts", q, k)
        if attn_mask is not None:
            s = s + attn_mask[None, None]
        if kpm_add is not None:
            s = s + kpm_add[:, None, None, :]
        w = jax.nn.softmax(s, axis=-1)
        ctx = jnp.einsum("bhts,bhsd->bhtd", w, v)
        ctx = ctx.transpose(0, 2, 1, 3).reshape(B, Tq, E).transpose(1, 0, 2)
        out = ctx @ p["wo"].T + p["bo"]
        return out, (w.mean(axis=1) if need_w else None)

    x1, _ = mha(raw["self_attn"], x, x, attn_mask=self_mask)
    x1 = x + x1
    a1, attn = mha(raw["encoder_attn"], x1, enc, need_w=True)
    kpm_add = (jnp.where(plm_pad_bool, -1e9, 0.0).astype(jnp.float32)
               if plm_pad_bool is not None else None)
    a2, _ = mha(raw["outside_attn"], x1, plm, kpm_add=kpm_add)
    x2 = x1 + 0.5 * a1 + 0.5 * a2
    h = jax.nn.relu(x2 @ raw["fc1_w"].T + raw["fc1_b"])
    x3 = x2 + h @ raw["fc2_w"].T + raw["fc2_b"]
    return x3, attn


# --------------------------------------------------------------------------
# Demo
# --------------------------------------------------------------------------

if __name__ == "__main__":
    E, H, FFN = 32, 4, 64           # decoder_embed_dim, heads, ffn dim
    ENC_DIM, PLM_DIM = 48, 40       # encoder_embed_dim, plm_encoder_embed_dim
    T, S_ENC, S_PLM, B = 8, 12, 10, 2

    raw = init_params(jax.random.PRNGKey(0), E, FFN, ENC_DIM, PLM_DIM)
    params = prepare_params(raw)

    kx, ke, kp = jax.random.split(jax.random.PRNGKey(1), 3)
    x = jax.random.normal(kx, (T, B, E), jnp.float32)
    encoder_out = jax.random.normal(ke, (S_ENC, B, ENC_DIM), jnp.float32)
    plm_out = jax.random.normal(kp, (S_PLM, B, PLM_DIM), jnp.float32)

    # causal self-attention mask (additive float, as fairseq builds it)
    causal = jnp.where(jnp.triu(jnp.ones((T, T), dtype=bool), k=1),
                       -1e9, 0.0).astype(jnp.float32)
    # plm key-padding mask: last two plm positions are padding
    plm_pad = jnp.zeros((B, S_PLM), dtype=bool).at[:, -2:].set(True)

    fwd = jax.jit(functools.partial(decoder_layer_forward, num_heads=H))
    out, attn, _ = fwd(params, x, encoder_out, plm_out,
                       self_attn_mask=causal,
                       self_attn_padding_mask=None,
                       plm_padding_mask=plm_pad)
    jax.block_until_ready(out)
    jax.block_until_ready(attn)
    assert out.shape == (T, B, E)
    assert attn.shape == (B, T, S_ENC)

    ref_out, ref_attn = _reference_forward(raw, x, encoder_out, plm_out,
                                           causal, plm_pad, H)
    assert jnp.allclose(out, ref_out, rtol=2e-2, atol=2e-2), \
        float(jnp.max(jnp.abs(out - ref_out)))
    assert jnp.allclose(attn, ref_attn, rtol=2e-2, atol=2e-2), \
        float(jnp.max(jnp.abs(attn - ref_attn)))

    print("KERNEL_OK")
</pallas_src>

<mosaic_0001>
module attributes {stable_mosaic.version = 11 : i64} {
  func.func @kernel(%arg0: i32, %arg1: memref<1x8x32xf32, #tpu.memory_space<vmem>>, %arg2: memref<1x12x48xf32, #tpu.memory_space<vmem>>, %arg3: memref<1x10x40xf32, #tpu.memory_space<vmem>>, %arg4: memref<8x8xf32, #tpu.memory_space<vmem>>, %arg5: memref<1x1x10xf32, #tpu.memory_space<vmem>>, %arg6: memref<32x96xf32, #tpu.memory_space<vmem>>, %arg7: memref<1x96xf32, #tpu.memory_space<vmem>>, %arg8: memref<32x32xf32, #tpu.memory_space<vmem>>, %arg9: memref<1x32xf32, #tpu.memory_space<vmem>>, %arg10: memref<32x64xf32, #tpu.memory_space<vmem>>, %arg11: memref<1x64xf32, #tpu.memory_space<vmem>>, %arg12: memref<48x64xf32, #tpu.memory_space<vmem>>, %arg13: memref<1x64xf32, #tpu.memory_space<vmem>>, %arg14: memref<40x64xf32, #tpu.memory_space<vmem>>, %arg15: memref<1x64xf32, #tpu.memory_space<vmem>>, %arg16: memref<64x32xf32, #tpu.memory_space<vmem>>, %arg17: memref<1x32xf32, #tpu.memory_space<vmem>>, %arg18: memref<32x64xf32, #tpu.memory_space<vmem>>, %arg19: memref<1x64xf32, #tpu.memory_space<vmem>>, %arg20: memref<64x32xf32, #tpu.memory_space<vmem>>, %arg21: memref<1x32xf32, #tpu.memory_space<vmem>>, %arg22: memref<1x8x32xf32, #tpu.memory_space<vmem>>, %arg23: memref<1x8x128xf32, #tpu.memory_space<vmem>>) attributes {dimension_semantics = [#tpu.dimension_semantics<parallel>], iteration_bounds = array<i64: 2>, scalar_prefetch = 0 : i64, scratch_operands = 0 : i64, tpu.core_type = #tpu.core_type<tc>, window_params = [{transform_indices = @transform_0, window_bounds = array<i64: 1, 8, 32>}, {transform_indices = @transform_1, window_bounds = array<i64: 1, 12, 48>}, {transform_indices = @transform_2, window_bounds = array<i64: 1, 10, 40>}, {pipeline_mode = #tpu.pipeline_mode<synchronous>, transform_indices = @transform_3, window_bounds = array<i64: 8, 8>}, {transform_indices = @transform_4, window_bounds = array<i64: 1, 1, 10>}, {pipeline_mode = #tpu.pipeline_mode<synchronous>, transform_indices = @transform_5, window_bounds = array<i64: 32, 96>}, {pipeline_mode = #tpu.pipeline_mode<synchronous>, transform_indices = @transform_6, window_bounds = array<i64: 1, 96>}, {pipeline_mode = #tpu.pipeline_mode<synchronous>, transform_indices = @transform_7, window_bounds = array<i64: 32, 32>}, {pipeline_mode = #tpu.pipeline_mode<synchronous>, transform_indices = @transform_8, window_bounds = array<i64: 1, 32>}, {pipeline_mode = #tpu.pipeline_mode<synchronous>, transform_indices = @transform_9, window_bounds = array<i64: 32, 64>}, {pipeline_mode = #tpu.pipeline_mode<synchronous>, transform_indices = @transform_10, window_bounds = array<i64: 1, 64>}, {pipeline_mode = #tpu.pipeline_mode<synchronous>, transform_indices = @transform_11, window_bounds = array<i64: 48, 64>}, {pipeline_mode = #tpu.pipeline_mode<synchronous>, transform_indices = @transform_12, window_bounds = array<i64: 1, 64>}, {pipeline_mode = #tpu.pipeline_mode<synchronous>, transform_indices = @transform_13, window_bounds = array<i64: 40, 64>}, {pipeline_mode = #tpu.pipeline_mode<synchronous>, transform_indices = @transform_14, window_bounds = array<i64: 1, 64>}, {pipeline_mode = #tpu.pipeline_mode<synchronous>, transform_indices = @transform_15, window_bounds = array<i64: 64, 32>}, {pipeline_mode = #tpu.pipeline_mode<synchronous>, transform_indices = @transform_16, window_bounds = array<i64: 1, 32>}, {pipeline_mode = #tpu.pipeline_mode<synchronous>, transform_indices = @transform_17, window_bounds = array<i64: 32, 64>}, {pipeline_mode = #tpu.pipeline_mode<synchronous>, transform_indices = @transform_18, window_bounds = array<i64: 1, 64>}, {pipeline_mode = #tpu.pipeline_mode<synchronous>, transform_indices = @transform_19, window_bounds = array<i64: 64, 32>}, {pipeline_mode = #tpu.pipeline_mode<synchronous>, transform_indices = @transform_20, window_bounds = array<i64: 1, 32>}, {transform_indices = @transform_21, window_bounds = array<i64: 1, 8, 32>}, {transform_indices = @transform_22, window_bounds = array<i64: 1, 8, 128>}]} {
    %c0 = arith.constant 0 : index
    %c0_0 = arith.constant 0 : index
    %c0_1 = arith.constant 0 : index
    %0 = vector.load %arg1[%c0, %c0_0, %c0_1] : memref<1x8x32xf32, #tpu.memory_space<vmem>>, vector<1x8x32xf32>
    %1 = vector.shape_cast %0 : vector<1x8x32xf32> to vector<8x32xf32>
    %c0_2 = arith.constant 0 : index
    %c0_3 = arith.constant 0 : index
    %c0_4 = arith.constant 0 : index
    %2 = vector.load %arg2[%c0_2, %c0_3, %c0_4] : memref<1x12x48xf32, #tpu.memory_space<vmem>>, vector<1x12x48xf32>
    %3 = vector.shape_cast %2 : vector<1x12x48xf32> to vector<12x48xf32>
    %c0_5 = arith.constant 0 : index
    %c0_6 = arith.constant 0 : index
    %c0_7 = arith.constant 0 : index
    %4 = vector.load %arg3[%c0_5, %c0_6, %c0_7] : memref<1x10x40xf32, #tpu.memory_space<vmem>>, vector<1x10x40xf32>
    %5 = vector.shape_cast %4 : vector<1x10x40xf32> to vector<10x40xf32>
    %c0_8 = arith.constant 0 : index
    %c0_9 = arith.constant 0 : index
    %6 = vector.load %arg6[%c0_8, %c0_9] : memref<32x96xf32, #tpu.memory_space<vmem>>, vector<32x96xf32>
    %cst = arith.constant dense<0.000000e+00> : vector<8x96xf32>
    %7 = tpu.matmul %1, %6, %cst {dimension_numbers = #tpu.dot_dimension_numbers<[1], [0], [0], [1], [0, 0, 1, 1], [], []>} : vector<8x32xf32>, vector<32x96xf32>, vector<8x96xf32> -> vector<8x96xf32>
    %c0_10 = arith.constant 0 : index
    %c0_11 = arith.constant 0 : index
    %8 = vector.load %arg7[%c0_10, %c0_11] : memref<1x96xf32, #tpu.memory_space<vmem>>, vector<1x96xf32>
    %9 = vector.broadcast %8 : vector<1x96xf32> to vector<8x96xf32>
    %10 = arith.addf %7, %9 : vector<8x96xf32>
    %c0_12 = arith.constant 0 : index
    %c0_13 = arith.constant 0 : index
    %11 = vector.load %arg4[%c0_12, %c0_13] : memref<8x8xf32, #tpu.memory_space<vmem>>, vector<8x8xf32>
    %12 = vector.shape_cast %11 : vector<8x8xf32> to vector<1x8x8xf32>
    %13 = vector.extract_strided_slice %10 {offsets = [0, 0], sizes = [8, 32], strides = [1, 1]} : vector<8x96xf32> to vector<8x32xf32>
    %cst_14 = arith.constant 0.353553385 : f32
    %14 = vector.broadcast %cst_14 : f32 to vector<8x32xf32>
    %15 = arith.mulf %13, %14 : vector<8x32xf32>
    %16 = vector.extract_strided_slice %10 {offsets = [0, 32], sizes = [8, 32], strides = [1, 1]} : vector<8x96xf32> to vector<8x32xf32>
    %17 = vector.extract_strided_slice %10 {offsets = [0, 64], sizes = [8, 32], strides = [1, 1]} : vector<8x96xf32> to vector<8x32xf32>
    %18 = vector.shape_cast %15 : vector<8x32xf32> to vector<8x4x8xf32>
    %19 = tpu.transpose %18, [1, 0, 2] : vector<8x4x8xf32> -> vector<4x8x8xf32>
    %20 = vector.shape_cast %16 : vector<8x32xf32> to vector<8x4x8xf32>
    %21 = tpu.transpose %20, [1, 0, 2] : vector<8x4x8xf32> -> vector<4x8x8xf32>
    %22 = vector.shape_cast %17 : vector<8x32xf32> to vector<8x4x8xf32>
    %23 = tpu.transpose %22, [1, 0, 2] : vector<8x4x8xf32> -> vector<4x8x8xf32>
    "tpu.trace_start"() <{level = 10 : i32, message = "htd,hsd->hts"}> : () -> ()
    %cst_15 = arith.constant dense<0.000000e+00> : vector<4x8x8xf32>
    %24 = tpu.matmul %19, %21, %cst_15 {dimension_numbers = #tpu.dot_dimension_numbers<[2], [2], [1], [1], [0, 0, 0, 1, 1, 1], [0], [0]>} : vector<4x8x8xf32>, vector<4x8x8xf32>, vector<4x8x8xf32> -> vector<4x8x8xf32>
    "tpu.trace_stop"() : () -> ()
    %25 = vector.broadcast %12 : vector<1x8x8xf32> to vector<4x8x8xf32>
    %26 = arith.addf %24, %25 : vector<4x8x8xf32>
    %cst_16 = arith.constant dense<0xFF800000> : vector<4x8xf32>
    %27 = vector.multi_reduction <maximumf>, %26, %cst_16 [2] : vector<4x8x8xf32> to vector<4x8xf32>
    %28 = vector.shape_cast %27 : vector<4x8xf32> to vector<4x8x1xf32>
    %29 = vector.broadcast %28 : vector<4x8x1xf32> to vector<4x8x8xf32>
    %30 = arith.subf %26, %29 : vector<4x8x8xf32>
    %31 = math.exp %30 : vector<4x8x8xf32>
    %cst_17 = arith.constant dense<0.000000e+00> : vector<4x8xf32>
    %32 = vector.multi_reduction <add>, %31, %cst_17 [2] : vector<4x8x8xf32> to vector<4x8xf32>
    %33 = vector.shape_cast %32 : vector<4x8xf32> to vector<4x8x1xf32>
    %34 = tpu.reciprocal %33 {approx = true} : vector<4x8x1xf32> -> vector<4x8x1xf32>
    %35 = vector.broadcast %34 : vector<4x8x1xf32> to vector<4x8x8xf32>
    %36 = arith.mulf %31, %35 : vector<4x8x8xf32>
    "tpu.trace_start"() <{level = 10 : i32, message = "hts,hsd->htd"}> : () -> ()
    %cst_18 = arith.constant dense<0.000000e+00> : vector<4x8x8xf32>
    %37 = tpu.matmul %36, %23, %cst_18 {dimension_numbers = #tpu.dot_dimension_numbers<[2], [1], [1], [2], [0, 0, 0, 1, 1, 2], [0], [0]>} : vector<4x8x8xf32>, vector<4x8x8xf32>, vector<4x8x8xf32> -> vector<4x8x8xf32>
    "tpu.trace_stop"() : () -> ()
    %38 = tpu.transpose %37, [1, 0, 2] : vector<4x8x8xf32> -> vector<8x4x8xf32>
    %39 = vector.shape_cast %38 : vector<8x4x8xf32> to vector<8x32xf32>
    %c0_19 = arith.constant 0 : index
    %c0_20 = arith.constant 0 : index
    %40 = vector.load %arg8[%c0_19, %c0_20] : memref<32x32xf32, #tpu.memory_space<vmem>>, vector<32x32xf32>
    %cst_21 = arith.constant dense<0.000000e+00> : vector<8x32xf32>
    %41 = tpu.matmul %39, %40, %cst_21 {dimension_numbers = #tpu.dot_dimension_numbers<[1], [0], [0], [1], [0, 0, 1, 1], [], []>} : vector<8x32xf32>, vector<32x32xf32>, vector<8x32xf32> -> vector<8x32xf32>
    %c0_22 = arith.constant 0 : index
    %c0_23 = arith.constant 0 : index
    %42 = vector.load %arg9[%c0_22, %c0_23] : memref<1x32xf32, #tpu.memory_space<vmem>>, vector<1x32xf32>
    %43 = vector.broadcast %42 : vector<1x32xf32> to vector<8x32xf32>
    %44 = arith.addf %41, %43 : vector<8x32xf32>
    %45 = arith.addf %1, %44 : vector<8x32xf32>
    %c0_24 = arith.constant 0 : index
    %c0_25 = arith.constant 0 : index
    %46 = vector.load %arg10[%c0_24, %c0_25] : memref<32x64xf32, #tpu.memory_space<vmem>>, vector<32x64xf32>
    %cst_26 = arith.constant dense<0.000000e+00> : vector<8x64xf32>
    %47 = tpu.matmul %45, %46, %cst_26 {dimension_numbers = #tpu.dot_dimension_numbers<[1], [0], [0], [1], [0, 0, 1, 1], [], []>} : vector<8x32xf32>, vector<32x64xf32>, vector<8x64xf32> -> vector<8x64xf32>
    %c0_27 = arith.constant 0 : index
    %c0_28 = arith.constant 0 : index
    %48 = vector.load %arg11[%c0_27, %c0_28] : memref<1x64xf32, #tpu.memory_space<vmem>>, vector<1x64xf32>
    %49 = vector.broadcast %48 : vector<1x64xf32> to vector<8x64xf32>
    %50 = arith.addf %47, %49 : vector<8x64xf32>
    %c0_29 = arith.constant 0 : index
    %c0_30 = arith.constant 0 : index
    %51 = vector.load %arg12[%c0_29, %c0_30] : memref<48x64xf32, #tpu.memory_space<vmem>>, vector<48x64xf32>
    %cst_31 = arith.constant dense<0.000000e+00> : vector<12x64xf32>
    %52 = tpu.matmul %3, %51, %cst_31 {dimension_numbers = #tpu.dot_dimension_numbers<[1], [0], [0], [1], [0, 0, 1, 1], [], []>} : vector<12x48xf32>, vector<48x64xf32>, vector<12x64xf32> -> vector<12x64xf32>
    %c0_32 = arith.constant 0 : index
    %c0_33 = arith.constant 0 : index
    %53 = vector.load %arg13[%c0_32, %c0_33] : memref<1x64xf32, #tpu.memory_space<vmem>>, vector<1x64xf32>
    %54 = vector.broadcast %53 : vector<1x64xf32> to vector<12x64xf32>
    %55 = arith.addf %52, %54 : vector<12x64xf32>
    %c0_34 = arith.constant 0 : index
    %c0_35 = arith.constant 0 : index
    %56 = vector.load %arg14[%c0_34, %c0_35] : memref<40x64xf32, #tpu.memory_space<vmem>>, vector<40x64xf32>
    %cst_36 = arith.constant dense<0.000000e+00> : vector<10x64xf32>
    %57 = tpu.matmul %5, %56, %cst_36 {dimension_numbers = #tpu.dot_dimension_numbers<[1], [0], [0], [1], [0, 0, 1, 1], [], []>} : vector<10x40xf32>, vector<40x64xf32>, vector<10x64xf32> -> vector<10x64xf32>
    %c0_37 = arith.constant 0 : index
    %c0_38 = arith.constant 0 : index
    %58 = vector.load %arg15[%c0_37, %c0_38] : memref<1x64xf32, #tpu.memory_space<vmem>>, vector<1x64xf32>
    %59 = vector.broadcast %58 : vector<1x64xf32> to vector<10x64xf32>
    %60 = arith.addf %57, %59 : vector<10x64xf32>
    %61 = vector.extract_strided_slice %50 {offsets = [0, 0], sizes = [8, 32], strides = [1, 1]} : vector<8x64xf32> to vector<8x32xf32>
    %cst_39 = arith.constant 0.353553385 : f32
    %62 = vector.broadcast %cst_39 : f32 to vector<8x32xf32>
    %63 = arith.mulf %61, %62 : vector<8x32xf32>
    %64 = vector.extract_strided_slice %55 {offsets = [0, 0], sizes = [12, 32], strides = [1, 1]} : vector<12x64xf32> to vector<12x32xf32>
    %65 = vector.extract_strided_slice %55 {offsets = [0, 32], sizes = [12, 32], strides = [1, 1]} : vector<12x64xf32> to vector<12x32xf32>
    %66 = vector.shape_cast %63 : vector<8x32xf32> to vector<8x4x8xf32>
    %67 = tpu.transpose %66, [1, 0, 2] : vector<8x4x8xf32> -> vector<4x8x8xf32>
    %68 = vector.shape_cast %64 : vector<12x32xf32> to vector<12x4x8xf32>
    %69 = tpu.transpose %68, [1, 0, 2] : vector<12x4x8xf32> -> vector<4x12x8xf32>
    %70 = vector.shape_cast %65 : vector<12x32xf32> to vector<12x4x8xf32>
    %71 = tpu.transpose %70, [1, 0, 2] : vector<12x4x8xf32> -> vector<4x12x8xf32>
    "tpu.trace_start"() <{level = 10 : i32, message = "htd,hsd->hts"}> : () -> ()
    %cst_40 = arith.constant dense<0.000000e+00> : vector<4x8x12xf32>
    %72 = tpu.matmul %67, %69, %cst_40 {dimension_numbers = #tpu.dot_dimension_numbers<[2], [2], [1], [1], [0, 0, 0, 1, 1, 1], [0], [0]>} : vector<4x8x8xf32>, vector<4x12x8xf32>, vector<4x8x12xf32> -> vector<4x8x12xf32>
    "tpu.trace_stop"() : () -> ()
    %cst_41 = arith.constant dense<0xFF800000> : vector<4x8xf32>
    %73 = vector.multi_reduction <maximumf>, %72, %cst_41 [2] : vector<4x8x12xf32> to vector<4x8xf32>
    %74 = vector.shape_cast %73 : vector<4x8xf32> to vector<4x8x1xf32>
    %75 = vector.broadcast %74 : vector<4x8x1xf32> to vector<4x8x12xf32>
    %76 = arith.subf %72, %75 : vector<4x8x12xf32>
    %77 = math.exp %76 : vector<4x8x12xf32>
    %cst_42 = arith.constant dense<0.000000e+00> : vector<4x8xf32>
    %78 = vector.multi_reduction <add>, %77, %cst_42 [2] : vector<4x8x12xf32> to vector<4x8xf32>
    %79 = vector.shape_cast %78 : vector<4x8xf32> to vector<4x8x1xf32>
    %80 = vector.broadcast %79 : vector<4x8x1xf32> to vector<4x8x12xf32>
    %81 = arith.divf %77, %80 : vector<4x8x12xf32>
    "tpu.trace_start"() <{level = 10 : i32, message = "hts,hsd->htd"}> : () -> ()
    %cst_43 = arith.constant dense<0.000000e+00> : vector<4x8x8xf32>
    %82 = tpu.matmul %81, %71, %cst_43 {dimension_numbers = #tpu.dot_dimension_numbers<[2], [1], [1], [2], [0, 0, 0, 1, 1, 2], [0], [0]>} : vector<4x8x12xf32>, vector<4x12x8xf32>, vector<4x8x8xf32> -> vector<4x8x8xf32>
    "tpu.trace_stop"() : () -> ()
    %83 = tpu.transpose %82, [1, 0, 2] : vector<4x8x8xf32> -> vector<8x4x8xf32>
    %84 = vector.shape_cast %83 : vector<8x4x8xf32> to vector<8x32xf32>
    %c0_44 = arith.constant 0 : index
    %c0_45 = arith.constant 0 : index
    %c0_46 = arith.constant 0 : index
    %85 = vector.load %arg5[%c0_44, %c0_45, %c0_46] : memref<1x1x10xf32, #tpu.memory_space<vmem>>, vector<1x1x10xf32>
    %86 = vector.extract_strided_slice %50 {offsets = [0, 32], sizes = [8, 32], strides = [1, 1]} : vector<8x64xf32> to vector<8x32xf32>
    %cst_47 = arith.constant 0.353553385 : f32
    %87 = vector.broadcast %cst_47 : f32 to vector<8x32xf32>
    %88 = arith.mulf %86, %87 : vector<8x32xf32>
    %89 = vector.extract_strided_slice %60 {offsets = [0, 0], sizes = [10, 32], strides = [1, 1]} : vector<10x64xf32> to vector<10x32xf32>
    %90 = vector.extract_strided_slice %60 {offsets = [0, 32], sizes = [10, 32], strides = [1, 1]} : vector<10x64xf32> to vector<10x32xf32>
    %91 = vector.shape_cast %88 : vector<8x32xf32> to vector<8x4x8xf32>
    %92 = tpu.transpose %91, [1, 0, 2] : vector<8x4x8xf32> -> vector<4x8x8xf32>
    %93 = vector.shape_cast %89 : vector<10x32xf32> to vector<10x4x8xf32>
    %94 = tpu.transpose %93, [1, 0, 2] : vector<10x4x8xf32> -> vector<4x10x8xf32>
    %95 = vector.shape_cast %90 : vector<10x32xf32> to vector<10x4x8xf32>
    %96 = tpu.transpose %95, [1, 0, 2] : vector<10x4x8xf32> -> vector<4x10x8xf32>
    "tpu.trace_start"() <{level = 10 : i32, message = "htd,hsd->hts"}> : () -> ()
    %cst_48 = arith.constant dense<0.000000e+00> : vector<4x8x10xf32>
    %97 = tpu.matmul %92, %94, %cst_48 {dimension_numbers = #tpu.dot_dimension_numbers<[2], [2], [1], [1], [0, 0, 0, 1, 1, 1], [0], [0]>} : vector<4x8x8xf32>, vector<4x10x8xf32>, vector<4x8x10xf32> -> vector<4x8x10xf32>
    "tpu.trace_stop"() : () -> ()
    %98 = vector.broadcast %85 : vector<1x1x10xf32> to vector<4x8x10xf32>
    %99 = arith.addf %97, %98 : vector<4x8x10xf32>
    %cst_49 = arith.constant dense<0xFF800000> : vector<4x8xf32>
    %100 = vector.multi_reduction <maximumf>, %99, %cst_49 [2] : vector<4x8x10xf32> to vector<4x8xf32>
    %101 = vector.shape_cast %100 : vector<4x8xf32> to vector<4x8x1xf32>
    %102 = vector.broadcast %101 : vector<4x8x1xf32> to vector<4x8x10xf32>
    %103 = arith.subf %99, %102 : vector<4x8x10xf32>
    %104 = math.exp %103 : vector<4x8x10xf32>
    %cst_50 = arith.constant dense<0.000000e+00> : vector<4x8xf32>
    %105 = vector.multi_reduction <add>, %104, %cst_50 [2] : vector<4x8x10xf32> to vector<4x8xf32>
    %106 = vector.shape_cast %105 : vector<4x8xf32> to vector<4x8x1xf32>
    %107 = tpu.reciprocal %106 {approx = true} : vector<4x8x1xf32> -> vector<4x8x1xf32>
    %108 = vector.broadcast %107 : vector<4x8x1xf32> to vector<4x8x10xf32>
    %109 = arith.mulf %104, %108 : vector<4x8x10xf32>
    "tpu.trace_start"() <{level = 10 : i32, message = "hts,hsd->htd"}> : () -> ()
    %cst_51 = arith.constant dense<0.000000e+00> : vector<4x8x8xf32>
    %110 = tpu.matmul %109, %96, %cst_51 {dimension_numbers = #tpu.dot_dimension_numbers<[2], [1], [1], [2], [0, 0, 0, 1, 1, 2], [0], [0]>} : vector<4x8x10xf32>, vector<4x10x8xf32>, vector<4x8x8xf32> -> vector<4x8x8xf32>
    "tpu.trace_stop"() : () -> ()
    %111 = tpu.transpose %110, [1, 0, 2] : vector<4x8x8xf32> -> vector<8x4x8xf32>
    %112 = vector.shape_cast %111 : vector<8x4x8xf32> to vector<8x32xf32>
    %cst_52 = arith.constant dense<0.000000e+00> : vector<8x12xf32>
    %113 = vector.multi_reduction <add>, %81, %cst_52 [0] : vector<4x8x12xf32> to vector<8x12xf32>
    %cst_53 = arith.constant 4.000000e+00 : f32
    %114 = vector.broadcast %cst_53 : f32 to vector<8x12xf32>
    %115 = arith.divf %113, %114 : vector<8x12xf32>
    %cst_54 = arith.constant 0.000000e+00 : f32
    %116 = vector.broadcast %cst_54 : f32 to vector<8x116xf32>
    %117 = tpu.concatenate %115, %116 in 1 : vector<8x12xf32>, vector<8x116xf32> -> vector<8x128xf32>
    %118 = vector.shape_cast %117 : vector<8x128xf32> to vector<1x8x128xf32>
    %c0_55 = arith.constant 0 : index
    %c0_56 = arith.constant 0 : index
    %c0_57 = arith.constant 0 : index
    %119 = vector.load %arg23[%c0_55, %c0_56, %c0_57] : memref<1x8x128xf32, #tpu.memory_space<vmem>>, vector<1x8x128xf32>
    tpu.vector_store %arg23[%c0_55, %c0_56, %c0_57], %118 {strides = array<i32>} : memref<1x8x128xf32, #tpu.memory_space<vmem>>, vector<1x8x128xf32>,
    %120 = tpu.concatenate %84, %112 in 1 : vector<8x32xf32>, vector<8x32xf32> -> vector<8x64xf32>
    %c0_58 = arith.constant 0 : index
    %c0_59 = arith.constant 0 : index
    %121 = vector.load %arg16[%c0_58, %c0_59] : memref<64x32xf32, #tpu.memory_space<vmem>>, vector<64x32xf32>
    %cst_60 = arith.constant dense<0.000000e+00> : vector<8x32xf32>
    %122 = tpu.matmul %120, %121, %cst_60 {dimension_numbers = #tpu.dot_dimension_numbers<[1], [0], [0], [1], [0, 0, 1, 1], [], []>} : vector<8x64xf32>, vector<64x32xf32>, vector<8x32xf32> -> vector<8x32xf32>
    %c0_61 = arith.constant 0 : index
    %c0_62 = arith.constant 0 : index
    %123 = vector.load %arg17[%c0_61, %c0_62] : memref<1x32xf32, #tpu.memory_space<vmem>>, vector<1x32xf32>
    %124 = vector.broadcast %123 : vector<1x32xf32> to vector<8x32xf32>
    %125 = arith.addf %122, %124 : vector<8x32xf32>
    %cst_63 = arith.constant 5.000000e-01 : f32
    %126 = vector.broadcast %cst_63 : f32 to vector<8x32xf32>
    %127 = arith.mulf %126, %125 : vector<8x32xf32>
    %128 = arith.addf %45, %127 : vector<8x32xf32>
    %c0_64 = arith.constant 0 : index
    %c0_65 = arith.constant 0 : index
    %129 = vector.load %arg18[%c0_64, %c0_65] : memref<32x64xf32, #tpu.memory_space<vmem>>, vector<32x64xf32>
    %cst_66 = arith.constant dense<0.000000e+00> : vector<8x64xf32>
    %130 = tpu.matmul %128, %129, %cst_66 {dimension_numbers = #tpu.dot_dimension_numbers<[1], [0], [0], [1], [0, 0, 1, 1], [], []>} : vector<8x32xf32>, vector<32x64xf32>, vector<8x64xf32> -> vector<8x64xf32>
    %c0_67 = arith.constant 0 : index
    %c0_68 = arith.constant 0 : index
    %131 = vector.load %arg19[%c0_67, %c0_68] : memref<1x64xf32, #tpu.memory_space<vmem>>, vector<1x64xf32>
    %132 = vector.broadcast %131 : vector<1x64xf32> to vector<8x64xf32>
    %133 = arith.addf %130, %132 : vector<8x64xf32>
    %cst_69 = arith.constant 0.000000e+00 : f32
    %134 = vector.broadcast %cst_69 : f32 to vector<8x64xf32>
    %135 = arith.maximumf %133, %134 : vector<8x64xf32>
    %c0_70 = arith.constant 0 : index
    %c0_71 = arith.constant 0 : index
    %136 = vector.load %arg20[%c0_70, %c0_71] : memref<64x32xf32, #tpu.memory_space<vmem>>, vector<64x32xf32>
    %cst_72 = arith.constant dense<0.000000e+00> : vector<8x32xf32>
    %137 = tpu.matmul %135, %136, %cst_72 {dimension_numbers = #tpu.dot_dimension_numbers<[1], [0], [0], [1], [0, 0, 1, 1], [], []>} : vector<8x64xf32>, vector<64x32xf32>, vector<8x32xf32> -> vector<8x32xf32>
    %c0_73 = arith.constant 0 : index
    %c0_74 = arith.constant 0 : index
    %138 = vector.load %arg21[%c0_73, %c0_74] : memref<1x32xf32, #tpu.memory_space<vmem>>, vector<1x32xf32>
    %139 = vector.broadcast %138 : vector<1x32xf32> to vector<8x32xf32>
    %140 = arith.addf %137, %139 : vector<8x32xf32>
    %141 = arith.addf %128, %140 : vector<8x32xf32>
    %142 = vector.shape_cast %141 : vector<8x32xf32> to vector<1x8x32xf32>
    %c0_75 = arith.constant 0 : index
    %c0_76 = arith.constant 0 : index
    %c0_77 = arith.constant 0 : index
    %143 = vector.load %arg22[%c0_75, %c0_76, %c0_77] : memref<1x8x32xf32, #tpu.memory_space<vmem>>, vector<1x8x32xf32>
    tpu.vector_store %arg22[%c0_75, %c0_76, %c0_77], %142 {strides = array<i32>} : memref<1x8x32xf32, #tpu.memory_space<vmem>>, vector<1x8x32xf32>,
    return
  }
  func.func @transform_0(%arg0: i32) -> (i32, i32, i32) {
    %c0_i32 = arith.constant 0 : i32
    %c0_i32_0 = arith.constant 0 : i32
    %c0_i32_1 = arith.constant 0 : i32
    return %arg0, %c0_i32, %c0_i32_0 : i32, i32, i32
  }
  func.func @transform_1(%arg0: i32) -> (i32, i32, i32) {
    %c0_i32 = arith.constant 0 : i32
    %c0_i32_0 = arith.constant 0 : i32
    %c0_i32_1 = arith.constant 0 : i32
    return %arg0, %c0_i32, %c0_i32_0 : i32, i32, i32
  }
  func.func @transform_2(%arg0: i32) -> (i32, i32, i32) {
    %c0_i32 = arith.constant 0 : i32
    %c0_i32_0 = arith.constant 0 : i32
    %c0_i32_1 = arith.constant 0 : i32
    return %arg0, %c0_i32, %c0_i32_0 : i32, i32, i32
  }
  func.func @transform_3(%arg0: i32) -> (i32, i32) {
    %c0_i32 = arith.constant 0 : i32
    %c0_i32_0 = arith.constant 0 : i32
    %c0_i32_1 = arith.constant 0 : i32
    return %c0_i32, %c0_i32_0 : i32, i32
  }
  func.func @transform_4(%arg0: i32) -> (i32, i32, i32) {
    %c0_i32 = arith.constant 0 : i32
    %c0_i32_0 = arith.constant 0 : i32
    %c0_i32_1 = arith.constant 0 : i32
    return %arg0, %c0_i32, %c0_i32_0 : i32, i32, i32
  }
  func.func @transform_5(%arg0: i32) -> (i32, i32) {
    %c0_i32 = arith.constant 0 : i32
    %c0_i32_0 = arith.constant 0 : i32
    %c0_i32_1 = arith.constant 0 : i32
    return %c0_i32, %c0_i32_0 : i32, i32
  }
  func.func @transform_6(%arg0: i32) -> (i32, i32) {
    %c0_i32 = arith.constant 0 : i32
    %c0_i32_0 = arith.constant 0 : i32
    %c0_i32_1 = arith.constant 0 : i32
    return %c0_i32, %c0_i32_0 : i32, i32
  }
  func.func @transform_7(%arg0: i32) -> (i32, i32) {
    %c0_i32 = arith.constant 0 : i32
    %c0_i32_0 = arith.constant 0 : i32
    %c0_i32_1 = arith.constant 0 : i32
    return %c0_i32, %c0_i32_0 : i32, i32
  }
  func.func @transform_8(%arg0: i32) -> (i32, i32) {
    %c0_i32 = arith.constant 0 : i32
    %c0_i32_0 = arith.constant 0 : i32
    %c0_i32_1 = arith.constant 0 : i32
    return %c0_i32, %c0_i32_0 : i32, i32
  }
  func.func @transform_9(%arg0: i32) -> (i32, i32) {
    %c0_i32 = arith.constant 0 : i32
    %c0_i32_0 = arith.constant 0 : i32
    %c0_i32_1 = arith.constant 0 : i32
    return %c0_i32, %c0_i32_0 : i32, i32
  }
  func.func @transform_10(%arg0: i32) -> (i32, i32) {
    %c0_i32 = arith.constant 0 : i32
    %c0_i32_0 = arith.constant 0 : i32
    %c0_i32_1 = arith.constant 0 : i32
    return %c0_i32, %c0_i32_0 : i32, i32
  }
  func.func @transform_11(%arg0: i32) -> (i32, i32) {
    %c0_i32 = arith.constant 0 : i32
    %c0_i32_0 = arith.constant 0 : i32
    %c0_i32_1 = arith.constant 0 : i32
    return %c0_i32, %c0_i32_0 : i32, i32
  }
  func.func @transform_12(%arg0: i32) -> (i32, i32) {
    %c0_i32 = arith.constant 0 : i32
    %c0_i32_0 = arith.constant 0 : i32
    %c0_i32_1 = arith.constant 0 : i32
    return %c0_i32, %c0_i32_0 : i32, i32
  }
  func.func @transform_13(%arg0: i32) -> (i32, i32) {
    %c0_i32 = arith.constant 0 : i32
    %c0_i32_0 = arith.constant 0 : i32
    %c0_i32_1 = arith.constant 0 : i32
    return %c0_i32, %c0_i32_0 : i32, i32
  }
  func.func @transform_14(%arg0: i32) -> (i32, i32) {
    %c0_i32 = arith.constant 0 : i32
    %c0_i32_0 = arith.constant 0 : i32
    %c0_i32_1 = arith.constant 0 : i32
    return %c0_i32, %c0_i32_0 : i32, i32
  }
  func.func @transform_15(%arg0: i32) -> (i32, i32) {
    %c0_i32 = arith.constant 0 : i32
    %c0_i32_0 = arith.constant 0 : i32
    %c0_i32_1 = arith.constant 0 : i32
    return %c0_i32, %c0_i32_0 : i32, i32
  }
  func.func @transform_16(%arg0: i32) -> (i32, i32) {
    %c0_i32 = arith.constant 0 : i32
    %c0_i32_0 = arith.constant 0 : i32
    %c0_i32_1 = arith.constant 0 : i32
    return %c0_i32, %c0_i32_0 : i32, i32
  }
  func.func @transform_17(%arg0: i32) -> (i32, i32) {
    %c0_i32 = arith.constant 0 : i32
    %c0_i32_0 = arith.constant 0 : i32
    %c0_i32_1 = arith.constant 0 : i32
    return %c0_i32, %c0_i32_0 : i32, i32
  }
  func.func @transform_18(%arg0: i32) -> (i32, i32) {
    %c0_i32 = arith.constant 0 : i32
    %c0_i32_0 = arith.constant 0 : i32
    %c0_i32_1 = arith.constant 0 : i32
    return %c0_i32, %c0_i32_0 : i32, i32
  }
  func.func @transform_19(%arg0: i32) -> (i32, i32) {
    %c0_i32 = arith.constant 0 : i32
    %c0_i32_0 = arith.constant 0 : i32
    %c0_i32_1 = arith.constant 0 : i32
    return %c0_i32, %c0_i32_0 : i32, i32
  }
  func.func @transform_20(%arg0: i32) -> (i32, i32) {
    %c0_i32 = arith.constant 0 : i32
    %c0_i32_0 = arith.constant 0 : i32
    %c0_i32_1 = arith.constant 0 : i32
    return %c0_i32, %c0_i32_0 : i32, i32
  }
  func.func @transform_21(%arg0: i32) -> (i32, i32, i32) {
    %c0_i32 = arith.constant 0 : i32
    %c0_i32_0 = arith.constant 0 : i32
    %c0_i32_1 = arith.constant 0 : i32
    return %arg0, %c0_i32, %c0_i32_0 : i32, i32, i32
  }
  func.func @transform_22(%arg0: i32) -> (i32, i32, i32) {
    %c0_i32 = arith.constant 0 : i32
    %c0_i32_0 = arith.constant 0 : i32
    %c0_i32_1 = arith.constant 0 : i32
    return %arg0, %c0_i32, %c0_i32_0 : i32, i32, i32
  }
}

</mosaic_0001>

<llo_original>
// kernel: decoder_layer_forward.1
$region0: #{decoder_layer_forward.1}
  #allocation0 [shape = 'u32[]', space=smem, size = 0x4, offset = 0x4, fixed_abs, tag = 'smem constant byte address 0x4 - core index']
  #allocation1 [shape = 'u32[144,128]{1,0:T(1,128)}', space=vmem, size = 0x12000, scoped, tag = 'internal scratch']
  %s0 = inlined_call_operand.vmem [shape: f32[2,8,32], index: 0, kind: input, shape index: {}]
  %s1 = inlined_call_operand.vmem [shape: f32[2,12,48], index: 1, kind: input, shape index: {}]
  %s2 = inlined_call_operand.vmem [shape: f32[2,10,40], index: 2, kind: input, shape index: {}]
  %s3 = inlined_call_operand.vmem [shape: f32[8,8], index: 3, kind: input, shape index: {}]
  %s4 = inlined_call_operand.vmem [shape: f32[2,1,10], index: 4, kind: input, shape index: {}]
  %s5 = inlined_call_operand.vmem [shape: f32[32,96], index: 5, kind: input, shape index: {}]
  %s6 = inlined_call_operand.vmem [shape: f32[1,96], index: 6, kind: input, shape index: {}]
  %s7 = inlined_call_operand.vmem [shape: f32[32,32], index: 7, kind: input, shape index: {}]
  %s8 = inlined_call_operand.vmem [shape: f32[1,32], index: 8, kind: input, shape index: {}]
  %s9 = inlined_call_operand.vmem [shape: f32[32,64], index: 9, kind: input, shape index: {}]
  %s10 = inlined_call_operand.vmem [shape: f32[1,64], index: 10, kind: input, shape index: {}]
  %s11 = inlined_call_operand.vmem [shape: f32[48,64], index: 11, kind: input, shape index: {}]
  %s12 = inlined_call_operand.vmem [shape: f32[1,64], index: 12, kind: input, shape index: {}]
  %s13 = inlined_call_operand.vmem [shape: f32[40,64], index: 13, kind: input, shape index: {}]
  %s14 = inlined_call_operand.vmem [shape: f32[1,64], index: 14, kind: input, shape index: {}]
  %s15 = inlined_call_operand.vmem [shape: f32[64,32], index: 15, kind: input, shape index: {}]
  %s16 = inlined_call_operand.vmem [shape: f32[1,32], index: 16, kind: input, shape index: {}]
  %s17 = inlined_call_operand.vmem [shape: f32[32,64], index: 17, kind: input, shape index: {}]
  %s18 = inlined_call_operand.vmem [shape: f32[1,64], index: 18, kind: input, shape index: {}]
  %s19 = inlined_call_operand.vmem [shape: f32[64,32], index: 19, kind: input, shape index: {}]
  %s20 = inlined_call_operand.vmem [shape: f32[1,32], index: 20, kind: input, shape index: {}]
  %s21 = inlined_call_operand.vmem [shape: f32[2,8,32], index: 21, kind: output, shape index: {0}]
  %s22 = inlined_call_operand.hbm [shape: f32[2,8,128], index: 22, kind: output, shape index: {1}]
  %23 = xla_tuple %s21, %s22
  %s24 = sld [smem:[#allocation0]]
  $region125: #{decoder_layer_forward.1} parent=0
    _
  %s26 = ssub.s32 1, %s24
  %s27 = scalar_select 0, %s26, %s24
  $region1: #{decoder_layer_forward.1} parent=0
    #allocation2 [shape = 'u8[8192]{0}', space=vmem, size = 0x2000, scoped, tag = 'output window, operand 1']
    #allocation3 [shape = 's32[2]{0}', space=sflag, size = 0x8, scoped, tag = 'scoped memory for decoder_layer_forward.1']
    %28 = vsyncpa [#allocation3], 0
    %s29 = scalar_lea.sflag [#allocation3], 1
    %30 = vsyncpa %s29, 0
    loop: start=0, step=1, limit=4
    $region2: #{decoder_layer_forward.1} parent=1 // loop_pre_header
      _
    $region3: #{decoder_layer_forward.1} parent=1 // loop_header
      %s32 = sphi 0, %s36
      %p33 = scmp.ge.s32.totalorder %s32, 4
      %s42 = sphi 0, %s44
      %s45 = sphi 0, %s42
      %s46 = sphi 0, %s45
      %s62 = sphi 0, %s46
      %s68 = sphi 0, %s70
      %s71 = sphi 0, %s68
      %s72 = sphi 0, %s71
      %s88 = sphi 0, %s72
      %s94 = sphi 0, %s96
      %s97 = sphi 0, %s94
      %s98 = sphi 0, %s97
      %s114 = sphi 0, %s98
      %s118 = sphi 0, %s118
      %s120 = sphi 0, %s118
      %s121 = sphi 0, %s120
      %s135 = sphi 0, %s121
      %s141 = sphi 0, %s143
      %s144 = sphi 0, %s141
      %s145 = sphi 0, %s144
      %s161 = sphi 0, %s145
      %s165 = sphi 0, %s165
      %s167 = sphi 0, %s165
      %s168 = sphi 0, %s167
      %s182 = sphi 0, %s168
      %s186 = sphi 0, %s186
      %s188 = sphi 0, %s186
      %s189 = sphi 0, %s188
      %s203 = sphi 0, %s189
      %s207 = sphi 0, %s207
      %s209 = sphi 0, %s207
      %s210 = sphi 0, %s209
      %s224 = sphi 0, %s210
      %s228 = sphi 0, %s228
      %s230 = sphi 0, %s228
      %s231 = sphi 0, %s230
      %s245 = sphi 0, %s231
      %s249 = sphi 0, %s249
      %s251 = sphi 0, %s249
      %s252 = sphi 0, %s251
      %s266 = sphi 0, %s252
      %s270 = sphi 0, %s270
      %s272 = sphi 0, %s270
      %s273 = sphi 0, %s272
      %s287 = sphi 0, %s273
      %s291 = sphi 0, %s291
      %s293 = sphi 0, %s291
      %s294 = sphi 0, %s293
      %s308 = sphi 0, %s294
      %s312 = sphi 0, %s312
      %s314 = sphi 0, %s312
      %s315 = sphi 0, %s314
      %s329 = sphi 0, %s315
      %s333 = sphi 0, %s333
      %s335 = sphi 0, %s333
      %s336 = sphi 0, %s335
      %s350 = sphi 0, %s336
      %s354 = sphi 0, %s354
      %s356 = sphi 0, %s354
      %s357 = sphi 0, %s356
      %s371 = sphi 0, %s357
      %s375 = sphi 0, %s375
      %s377 = sphi 0, %s375
      %s378 = sphi 0, %s377
      %s392 = sphi 0, %s378
      %s396 = sphi 0, %s396
      %s398 = sphi 0, %s396
      %s399 = sphi 0, %s398
      %s413 = sphi 0, %s399
      %s417 = sphi 0, %s417
      %s419 = sphi 0, %s417
      %s420 = sphi 0, %s419
      %s434 = sphi 0, %s420
      %s438 = sphi 0, %s438
      %s440 = sphi 0, %s438
      %s441 = sphi 0, %s440
      %s455 = sphi 0, %s441
      %s459 = sphi 0, %s459
      %s461 = sphi 0, %s459
      %s462 = sphi 0, %s461
      %s476 = sphi 0, %s462
      %s480 = sphi 0, %s480
      %s482 = sphi 0, %s480
      %s483 = sphi 0, %s482
      %s497 = sphi 0, %s483
      %s503 = sphi 0, %s505
      %s506 = sphi 0, %s503
      %s507 = sphi 0, %s506
      %s523 = sphi 0, %s507
      %s529 = sphi 0, %s531
      %s532 = sphi 0, %s529
      %s533 = sphi 0, %s532
      %s549 = sphi 0, %s533
    $region4: #{decoder_layer_forward.1} parent=1 // loop_header_branch
      %35 = sbr.rel (%p33) target = $region8
    $region5: #{decoder_layer_forward.1} parent=1 // loop_body
      %s37 = ssub.s32 %s32, 1
      %s38 = ssub.s32 %s32, 2
      %s39 = sadd.s32 %s32, 1
      %s40 = ssub.s32 %s32, %s39
      %p41 = scmp.eq.s32.totalorder %s40, 0
      %s43 = sadd.s32 %s42, 1
      %s44 = scalar_select %p41, %s42, %s43
      %p47 = pneg %p41
      %p48 = scmp.eq.s32.totalorder %s32, 1
      %p49 = por %p47, %p48
      %p50 = scmp.ne.s32.totalorder %s42, %s45
      %p51 = scmp.eq.s32.totalorder %s32, 0
      %p52 = por %p50, %p51
      %p53 = scmp.ne.s32.totalorder %s42, %s45
      %p54 = scmp.eq.s32.totalorder %s37, 1
      %p55 = por %p53, %p54
      %p56 = scmp.ne.s32.totalorder %s45, %s46
      %p57 = scmp.eq.s32.totalorder %s37, 0
      %p58 = por %p56, %p57
      %p59 = scmp.ne.s32.totalorder %s45, %s46
      %p60 = scmp.eq.s32.totalorder %s38, 1
      %p61 = por %p59, %p60
      %p63 = scmp.ne.s32.totalorder %s46, %s62
      %p64 = scmp.eq.s32.totalorder %s38, 0
      %p65 = por %p63, %p64
      %s66 = ssub.s32 %s32, %s39
      %p67 = scmp.eq.s32.totalorder %s66, 0
      %s69 = sadd.s32 %s68, 1
      %s70 = scalar_select %p67, %s68, %s69
      %p73 = pneg %p67
      %p74 = scmp.eq.s32.totalorder %s32, 1
      %p75 = por %p73, %p74
      %p76 = scmp.ne.s32.totalorder %s68, %s71
      %p77 = scmp.eq.s32.totalorder %s32, 0
      %p78 = por %p76, %p77
      %p79 = scmp.ne.s32.totalorder %s68, %s71
      %p80 = scmp.eq.s32.totalorder %s37, 1
      %p81 = por %p79, %p80
      %p82 = scmp.ne.s32.totalorder %s71, %s72
      %p83 = scmp.eq.s32.totalorder %s37, 0
      %p84 = por %p82, %p83
      %p85 = scmp.ne.s32.totalorder %s71, %s72
      %p86 = scmp.eq.s32.totalorder %s38, 1
      %p87 = por %p85, %p86
      %p89 = scmp.ne.s32.totalorder %s72, %s88
      %p90 = scmp.eq.s32.totalorder %s38, 0
      %p91 = por %p89, %p90
      %s92 = ssub.s32 %s32, %s39
      %p93 = scmp.eq.s32.totalorder %s92, 0
      %s95 = sadd.s32 %s94, 1
      %s96 = scalar_select %p93, %s94, %s95
      %p99 = pneg %p93
      %p100 = scmp.eq.s32.totalorder %s32, 1
      %p101 = por %p99, %p100
      %p102 = scmp.ne.s32.totalorder %s94, %s97
      %p103 = scmp.eq.s32.totalorder %s32, 0
      %p104 = por %p102, %p103
      %p105 = scmp.ne.s32.totalorder %s94, %s97
      %p106 = scmp.eq.s32.totalorder %s37, 1
      %p107 = por %p105, %p106
      %p108 = scmp.ne.s32.totalorder %s97, %s98
      %p109 = scmp.eq.s32.totalorder %s37, 0
      %p110 = por %p108, %p109
      %p111 = scmp.ne.s32.totalorder %s97, %s98
      %p112 = scmp.eq.s32.totalorder %s38, 1
      %p113 = por %p111, %p112
      %p115 = scmp.ne.s32.totalorder %s98, %s114
      %p116 = scmp.eq.s32.totalorder %s38, 0
      %p117 = por %p115, %p116
      %s119 = sadd.s32 %s118, 1
      %p122 = scmp.eq.s32.totalorder %s32, 1
      %p123 = scmp.ne.s32.totalorder %s118, %s120
      %p124 = scmp.eq.s32.totalorder %s32, 0
      %p125 = por %p123, %p124
      %p126 = scmp.ne.s32.totalorder %s118, %s120
      %p127 = scmp.eq.s32.totalorder %s37, 1
      %p128 = por %p126, %p127
      %p129 = scmp.ne.s32.totalorder %s120, %s121
      %p130 = scmp.eq.s32.totalorder %s37, 0
      %p131 = por %p129, %p130
      %p132 = scmp.ne.s32.totalorder %s120, %s121
      %p133 = scmp.eq.s32.totalorder %s38, 1
      %p134 = por %p132, %p133
      %p136 = scmp.ne.s32.totalorder %s121, %s135
      %p137 = scmp.eq.s32.totalorder %s38, 0
      %p138 = por %p136, %p137
      %s139 = ssub.s32 %s32, %s39
      %p140 = scmp.eq.s32.totalorder %s139, 0
      %s142 = sadd.s32 %s141, 1
      %s143 = scalar_select %p140, %s141, %s142
      %p146 = pneg %p140
      %p147 = scmp.eq.s32.totalorder %s32, 1
      %p148 = por %p146, %p147
      %p149 = scmp.ne.s32.totalorder %s141, %s144
      %p150 = scmp.eq.s32.totalorder %s32, 0
      %p151 = por %p149, %p150
      %p152 = scmp.ne.s32.totalorder %s141, %s144
      %p153 = scmp.eq.s32.totalorder %s37, 1
      %p154 = por %p152, %p153
      %p155 = scmp.ne.s32.totalorder %s144, %s145
      %p156 = scmp.eq.s32.totalorder %s37, 0
      %p157 = por %p155, %p156
      %p158 = scmp.ne.s32.totalorder %s144, %s145
      %p159 = scmp.eq.s32.totalorder %s38, 1
      %p160 = por %p158, %p159
      %p162 = scmp.ne.s32.totalorder %s145, %s161
      %p163 = scmp.eq.s32.totalorder %s38, 0
      %p164 = por %p162, %p163
      %s166 = sadd.s32 %s165, 1
      %p169 = scmp.eq.s32.totalorder %s32, 1
      %p170 = scmp.ne.s32.totalorder %s165, %s167
      %p171 = scmp.eq.s32.totalorder %s32, 0
      %p172 = por %p170, %p171
      %p173 = scmp.ne.s32.totalorder %s165, %s167
      %p174 = scmp.eq.s32.totalorder %s37, 1
      %p175 = por %p173, %p174
      %p176 = scmp.ne.s32.totalorder %s167, %s168
      %p177 = scmp.eq.s32.totalorder %s37, 0
      %p178 = por %p176, %p177
      %p179 = scmp.ne.s32.totalorder %s167, %s168
      %p180 = scmp.eq.s32.totalorder %s38, 1
      %p181 = por %p179, %p180
      %p183 = scmp.ne.s32.totalorder %s168, %s182
      %p184 = scmp.eq.s32.totalorder %s38, 0
      %p185 = por %p183, %p184
      %s187 = sadd.s32 %s186, 1
      %p190 = scmp.eq.s32.totalorder %s32, 1
      %p191 = scmp.ne.s32.totalorder %s186, %s188
      %p192 = scmp.eq.s32.totalorder %s32, 0
      %p193 = por %p191, %p192
      %p194 = scmp.ne.s32.totalorder %s186, %s188
      %p195 = scmp.eq.s32.totalorder %s37, 1
      %p196 = por %p194, %p195
      %p197 = scmp.ne.s32.totalorder %s188, %s189
      %p198 = scmp.eq.s32.totalorder %s37, 0
      %p199 = por %p197, %p198
      %p200 = scmp.ne.s32.totalorder %s188, %s189
      %p201 = scmp.eq.s32.totalorder %s38, 1
      %p202 = por %p200, %p201
      %p204 = scmp.ne.s32.totalorder %s189, %s203
      %p205 = scmp.eq.s32.totalorder %s38, 0
      %p206 = por %p204, %p205
      %s208 = sadd.s32 %s207, 1
      %p211 = scmp.eq.s32.totalorder %s32, 1
      %p212 = scmp.ne.s32.totalorder %s207, %s209
      %p213 = scmp.eq.s32.totalorder %s32, 0
      %p214 = por %p212, %p213
      %p215 = scmp.ne.s32.totalorder %s207, %s209
      %p216 = scmp.eq.s32.totalorder %s37, 1
      %p217 = por %p215, %p216
      %p218 = scmp.ne.s32.totalorder %s209, %s210
      %p219 = scmp.eq.s32.totalorder %s37, 0
      %p220 = por %p218, %p219
      %p221 = scmp.ne.s32.totalorder %s209, %s210
      %p222 = scmp.eq.s32.totalorder %s38, 1
      %p223 = por %p221, %p222
      %p225 = scmp.ne.s32.totalorder %s210, %s224
      %p226 = scmp.eq.s32.totalorder %s38, 0
      %p227 = por %p225, %p226
      %s229 = sadd.s32 %s228, 1
      %p232 = scmp.eq.s32.totalorder %s32, 1
      %p233 = scmp.ne.s32.totalorder %s228, %s230
      %p234 = scmp.eq.s32.totalorder %s32, 0
      %p235 = por %p233, %p234
      %p236 = scmp.ne.s32.totalorder %s228, %s230
      %p237 = scmp.eq.s32.totalorder %s37, 1
      %p238 = por %p236, %p237
      %p239 = scmp.ne.s32.totalorder %s230, %s231
      %p240 = scmp.eq.s32.totalorder %s37, 0
      %p241 = por %p239, %p240
      %p242 = scmp.ne.s32.totalorder %s230, %s231
      %p243 = scmp.eq.s32.totalorder %s38, 1
      %p244 = por %p242, %p243
      %p246 = scmp.ne.s32.totalorder %s231, %s245
      %p247 = scmp.eq.s32.totalorder %s38, 0
      %p248 = por %p246, %p247
      %s250 = sadd.s32 %s249, 1
      %p253 = scmp.eq.s32.totalorder %s32, 1
      %p254 = scmp.ne.s32.totalorder %s249, %s251
      %p255 = scmp.eq.s32.totalorder %s32, 0
      %p256 = por %p254, %p255
      %p257 = scmp.ne.s32.totalorder %s249, %s251
      %p258 = scmp.eq.s32.totalorder %s37, 1
      %p259 = por %p257, %p258
      %p260 = scmp.ne.s32.totalorder %s251, %s252
      %p261 = scmp.eq.s32.totalorder %s37, 0
      %p262 = por %p260, %p261
      %p263 = scmp.ne.s32.totalorder %s251, %s252
      %p264 = scmp.eq.s32.totalorder %s38, 1
      %p265 = por %p263, %p264
      %p267 = scmp.ne.s32.totalorder %s252, %s266
      %p268 = scmp.eq.s32.totalorder %s38, 0
      %p269 = por %p267, %p268
      %s271 = sadd.s32 %s270, 1
      %p274 = scmp.eq.s32.totalorder %s32, 1
      %p275 = scmp.ne.s32.totalorder %s270, %s272
      %p276 = scmp.eq.s32.totalorder %s32, 0
      %p277 = por %p275, %p276
      %p278 = scmp.ne.s32.totalorder %s270, %s272
      %p279 = scmp.eq.s32.totalorder %s37, 1
      %p280 = por %p278, %p279
      %p281 = scmp.ne.s32.totalorder %s272, %s273
      %p282 = scmp.eq.s32.totalorder %s37, 0
      %p283 = por %p281, %p282
      %p284 = scmp.ne.s32.totalorder %s272, %s273
      %p285 = scmp.eq.s32.totalorder %s38, 1
      %p286 = por %p284, %p285
      %p288 = scmp.ne.s32.totalorder %s273, %s287
      %p289 = scmp.eq.s32.totalorder %s38, 0
      %p290 = por %p288, %p289
      %s292 = sadd.s32 %s291, 1
      %p295 = scmp.eq.s32.totalorder %s32, 1
      %p296 = scmp.ne.s32.totalorder %s291, %s293
      %p297 = scmp.eq.s32.totalorder %s32, 0
      %p298 = por %p296, %p297
      %p299 = scmp.ne.s32.totalorder %s291, %s293
      %p300 = scmp.eq.s32.totalorder %s37, 1
      %p301 = por %p299, %p300
      %p302 = scmp.ne.s32.totalorder %s293, %s294
      %p303 = scmp.eq.s32.totalorder %s37, 0
      %p304 = por %p302, %p303
      %p305 = scmp.ne.s32.totalorder %s293, %s294
      %p306 = scmp.eq.s32.totalorder %s38, 1
      %p307 = por %p305, %p306
      %p309 = scmp.ne.s32.totalorder %s294, %s308
      %p310 = scmp.eq.s32.totalorder %s38, 0
      %p311 = por %p309, %p310
      %s313 = sadd.s32 %s312, 1
      %p316 = scmp.eq.s32.totalorder %s32, 1
      %p317 = scmp.ne.s32.totalorder %s312, %s314
      %p318 = scmp.eq.s32.totalorder %s32, 0
      %p319 = por %p317, %p318
      %p320 = scmp.ne.s32.totalorder %s312, %s314
      %p321 = scmp.eq.s32.totalorder %s37, 1
      %p322 = por %p320, %p321
      %p323 = scmp.ne.s32.totalorder %s314, %s315
      %p324 = scmp.eq.s32.totalorder %s37, 0
      %p325 = por %p323, %p324
      %p326 = scmp.ne.s32.totalorder %s314, %s315
      %p327 = scmp.eq.s32.totalorder %s38, 1
      %p328 = por %p326, %p327
      %p330 = scmp.ne.s32.totalorder %s315, %s329
      %p331 = scmp.eq.s32.totalorder %s38, 0
      %p332 = por %p330, %p331
      %s334 = sadd.s32 %s333, 1
      %p337 = scmp.eq.s32.totalorder %s32, 1
      %p338 = scmp.ne.s32.totalorder %s333, %s335
      %p339 = scmp.eq.s32.totalorder %s32, 0
      %p340 = por %p338, %p339
      %p341 = scmp.ne.s32.totalorder %s333, %s335
      %p342 = scmp.eq.s32.totalorder %s37, 1
      %p343 = por %p341, %p342
      %p344 = scmp.ne.s32.totalorder %s335, %s336
      %p345 = scmp.eq.s32.totalorder %s37, 0
      %p346 = por %p344, %p345
      %p347 = scmp.ne.s32.totalorder %s335, %s336
      %p348 = scmp.eq.s32.totalorder %s38, 1
      %p349 = por %p347, %p348
      %p351 = scmp.ne.s32.totalorder %s336, %s350
      %p352 = scmp.eq.s32.totalorder %s38, 0
      %p353 = por %p351, %p352
      %s355 = sadd.s32 %s354, 1
      %p358 = scmp.eq.s32.totalorder %s32, 1
      %p359 = scmp.ne.s32.totalorder %s354, %s356
      %p360 = scmp.eq.s32.totalorder %s32, 0
      %p361 = por %p359, %p360
      %p362 = scmp.ne.s32.totalorder %s354, %s356
      %p363 = scmp.eq.s32.totalorder %s37, 1
      %p364 = por %p362, %p363
      %p365 = scmp.ne.s32.totalorder %s356, %s357
      %p366 = scmp.eq.s32.totalorder %s37, 0
      %p367 = por %p365, %p366
      %p368 = scmp.ne.s32.totalorder %s356, %s357
      %p369 = scmp.eq.s32.totalorder %s38, 1
      %p370 = por %p368, %p369
      %p372 = scmp.ne.s32.totalorder %s357, %s371
      %p373 = scmp.eq.s32.totalorder %s38, 0
      %p374 = por %p372, %p373
      %s376 = sadd.s32 %s375, 1
      %p379 = scmp.eq.s32.totalorder %s32, 1
      %p380 = scmp.ne.s32.totalorder %s375, %s377
      %p381 = scmp.eq.s32.totalorder %s32, 0
      %p382 = por %p380, %p381
      %p383 = scmp.ne.s32.totalorder %s375, %s377
      %p384 = scmp.eq.s32.totalorder %s37, 1
      %p385 = por %p383, %p384
      %p386 = scmp.ne.s32.totalorder %s377, %s378
      %p387 = scmp.eq.s32.totalorder %s37, 0
      %p388 = por %p386, %p387
      %p389 = scmp.ne.s32.totalorder %s377, %s378
      %p390 = scmp.eq.s32.totalorder %s38, 1
      %p391 = por %p389, %p390
      %p393 = scmp.ne.s32.totalorder %s378, %s392
      %p394 = scmp.eq.s32.totalorder %s38, 0
      %p395 = por %p393, %p394
      %s397 = sadd.s32 %s396, 1
      %p400 = scmp.eq.s32.totalorder %s32, 1
      %p401 = scmp.ne.s32.totalorder %s396, %s398
      %p402 = scmp.eq.s32.totalorder %s32, 0
      %p403 = por %p401, %p402
      %p404 = scmp.ne.s32.totalorder %s396, %s398
      %p405 = scmp.eq.s32.totalorder %s37, 1
      %p406 = por %p404, %p405
      %p407 = scmp.ne.s32.totalorder %s398, %s399
      %p408 = scmp.eq.s32.totalorder %s37, 0
      %p409 = por %p407, %p408
      %p410 = scmp.ne.s32.totalorder %s398, %s399
      %p411 = scmp.eq.s32.totalorder %s38, 1
      %p412 = por %p410, %p411
      %p414 = scmp.ne.s32.totalorder %s399, %s413
      %p415 = scmp.eq.s32.totalorder %s38, 0
      %p416 = por %p414, %p415
      %s418 = sadd.s32 %s417, 1
      %p421 = scmp.eq.s32.totalorder %s32, 1
      %p422 = scmp.ne.s32.totalorder %s417, %s419
      %p423 = scmp.eq.s32.totalorder %s32, 0
      %p424 = por %p422, %p423
      %p425 = scmp.ne.s32.totalorder %s417, %s419
      %p426 = scmp.eq.s32.totalorder %s37, 1
      %p427 = por %p425, %p426
      %p428 = scmp.ne.s32.totalorder %s419, %s420
      %p429 = scmp.eq.s32.totalorder %s37, 0
      %p430 = por %p428, %p429
      %p431 = scmp.ne.s32.totalorder %s419, %s420
      %p432 = scmp.eq.s32.totalorder %s38, 1
      %p433 = por %p431, %p432
      %p435 = scmp.ne.s32.totalorder %s420, %s434
      %p436 = scmp.eq.s32.totalorder %s38, 0
      %p437 = por %p435, %p436
      %s439 = sadd.s32 %s438, 1
      %p442 = scmp.eq.s32.totalorder %s32, 1
      %p443 = scmp.ne.s32.totalorder %s438, %s440
      %p444 = scmp.eq.s32.totalorder %s32, 0
      %p445 = por %p443, %p444
      %p446 = scmp.ne.s32.totalorder %s438, %s440
      %p447 = scmp.eq.s32.totalorder %s37, 1
      %p448 = por %p446, %p447
      %p449 = scmp.ne.s32.totalorder %s440, %s441
      %p450 = scmp.eq.s32.totalorder %s37, 0
      %p451 = por %p449, %p450
      %p452 = scmp.ne.s32.totalorder %s440, %s441
      %p453 = scmp.eq.s32.totalorder %s38, 1
      %p454 = por %p452, %p453
      %p456 = scmp.ne.s32.totalorder %s441, %s455
      %p457 = scmp.eq.s32.totalorder %s38, 0
      %p458 = por %p456, %p457
      %s460 = sadd.s32 %s459, 1
      %p463 = scmp.eq.s32.totalorder %s32, 1
      %p464 = scmp.ne.s32.totalorder %s459, %s461
      %p465 = scmp.eq.s32.totalorder %s32, 0
      %p466 = por %p464, %p465
      %p467 = scmp.ne.s32.totalorder %s459, %s461
      %p468 = scmp.eq.s32.totalorder %s37, 1
      %p469 = por %p467, %p468
      %p470 = scmp.ne.s32.totalorder %s461, %s462
      %p471 = scmp.eq.s32.totalorder %s37, 0
      %p472 = por %p470, %p471
      %p473 = scmp.ne.s32.totalorder %s461, %s462
      %p474 = scmp.eq.s32.totalorder %s38, 1
      %p475 = por %p473, %p474
      %p477 = scmp.ne.s32.totalorder %s462, %s476
      %p478 = scmp.eq.s32.totalorder %s38, 0
      %p479 = por %p477, %p478
      %s481 = sadd.s32 %s480, 1
      %p484 = scmp.eq.s32.totalorder %s32, 1
      %p485 = scmp.ne.s32.totalorder %s480, %s482
      %p486 = scmp.eq.s32.totalorder %s32, 0
      %p487 = por %p485, %p486
      %p488 = scmp.ne.s32.totalorder %s480, %s482
      %p489 = scmp.eq.s32.totalorder %s37, 1
      %p490 = por %p488, %p489
      %p491 = scmp.ne.s32.totalorder %s482, %s483
      %p492 = scmp.eq.s32.totalorder %s37, 0
      %p493 = por %p491, %p492
      %p494 = scmp.ne.s32.totalorder %s482, %s483
      %p495 = scmp.eq.s32.totalorder %s38, 1
      %p496 = por %p494, %p495
      %p498 = scmp.ne.s32.totalorder %s483, %s497
      %p499 = scmp.eq.s32.totalorder %s38, 0
      %p500 = por %p498, %p499
      %s501 = ssub.s32 %s32, %s39
      %p502 = scmp.eq.s32.totalorder %s501, 0
      %s504 = sadd.s32 %s503, 1
      %s505 = scalar_select %p502, %s503, %s504
      %p508 = pneg %p502
      %p509 = scmp.eq.s32.totalorder %s32, 1
      %p510 = por %p508, %p509
      %p511 = scmp.ne.s32.totalorder %s503, %s506
      %p512 = scmp.eq.s32.totalorder %s32, 0
      %p513 = por %p511, %p512
      %p514 = scmp.ne.s32.totalorder %s503, %s506
      %p515 = scmp.eq.s32.totalorder %s37, 1
      %p516 = por %p514, %p515
      %p517 = scmp.ne.s32.totalorder %s506, %s507
      %p518 = scmp.eq.s32.totalorder %s37, 0
      %p519 = por %p517, %p518
      %p520 = scmp.ne.s32.totalorder %s506, %s507
      %p521 = scmp.eq.s32.totalorder %s38, 1
      %p522 = por %p520, %p521
      %p524 = scmp.ne.s32.totalorder %s507, %s523
      %p525 = scmp.eq.s32.totalorder %s38, 0
      %p526 = por %p524, %p525
      %s527 = ssub.s32 %s32, %s39
      %p528 = scmp.eq.s32.totalorder %s527, 0
      %s530 = sadd.s32 %s529, 1
      %s531 = scalar_select %p528, %s529, %s530
      %p534 = pneg %p528
      %p535 = scmp.eq.s32.totalorder %s32, 1
      %p536 = por %p534, %p535
      %p537 = scmp.ne.s32.totalorder %s529, %s532
      %p538 = scmp.eq.s32.totalorder %s32, 0
      %p539 = por %p537, %p538
      %p540 = scmp.ne.s32.totalorder %s529, %s532
      %p541 = scmp.eq.s32.totalorder %s37, 1
      %p542 = por %p540, %p541
      %p543 = scmp.ne.s32.totalorder %s532, %s533
      %p544 = scmp.eq.s32.totalorder %s37, 0
      %p545 = por %p543, %p544
      %p546 = scmp.ne.s32.totalorder %s532, %s533
      %p547 = scmp.eq.s32.totalorder %s38, 1
      %p548 = por %p546, %p547
      %p550 = scmp.ne.s32.totalorder %s533, %s549
      %p551 = scmp.eq.s32.totalorder %s38, 0
      %p552 = por %p550, %p551
      %p553 = scmp.le.s32.totalorder 1, %s32
      %p554 = scmp.lt.s32.totalorder %s32, 3
      %p555 = pnand %p553, %p554
      %p556 = pneg %p555
      // Predicated region
      $region9: #{decoder_layer_forward.1} parent=5 // pred_check
        _
      $region10: #{decoder_layer_forward.1} parent=5 // pred_check_branch
        %558 = sbr.rel (%p555) target = $region12
      $region11: #{decoder_layer_forward.1} parent=5 // pred_region
        %s559 = ssub.s32 %s32, 1
        // Predicated region
        $region13: #{decoder_layer_forward.1} parent=11 // pred_check
          %p560 = pneg %p131
        $region14: #{decoder_layer_forward.1} parent=11 // pred_check_branch
          %562 = sbr.rel (%p560) target = $region16
        $region15: #{decoder_layer_forward.1} parent=11 // pred_region
          _
        $region16: #{decoder_layer_forward.1} parent=11 // pred_fallthru
          _
        // Predicated region
        $region17: #{decoder_layer_forward.1} parent=11 // pred_check
          %p563 = pneg %p178
        $region18: #{decoder_layer_forward.1} parent=11 // pred_check_branch
          %565 = sbr.rel (%p563) target = $region20
        $region19: #{decoder_layer_forward.1} parent=11 // pred_region
          _
        $region20: #{decoder_layer_forward.1} parent=11 // pred_fallthru
          _
        // Predicated region
        $region21: #{decoder_layer_forward.1} parent=11 // pred_check
          %p566 = pneg %p199
        $region22: #{decoder_layer_forward.1} parent=11 // pred_check_branch
          %568 = sbr.rel (%p566) target = $region24
        $region23: #{decoder_layer_forward.1} parent=11 // pred_region
          _
        $region24: #{decoder_layer_forward.1} parent=11 // pred_fallthru
          _
        // Predicated region
        $region25: #{decoder_layer_forward.1} parent=11 // pred_check
          %p569 = pneg %p220
        $region26: #{decoder_layer_forward.1} parent=11 // pred_check_branch
          %571 = sbr.rel (%p569) target = $region28
        $region27: #{decoder_layer_forward.1} parent=11 // pred_region
          _
        $region28: #{decoder_layer_forward.1} parent=11 // pred_fallthru
          _
        // Predicated region
        $region29: #{decoder_layer_forward.1} parent=11 // pred_check
          %p572 = pneg %p241
        $region30: #{decoder_layer_forward.1} parent=11 // pred_check_branch
          %574 = sbr.rel (%p572) target = $region32
        $region31: #{decoder_layer_forward.1} parent=11 // pred_region
          _
        $region32: #{decoder_layer_forward.1} parent=11 // pred_fallthru
          _
        // Predicated region
        $region33: #{decoder_layer_forward.1} parent=11 // pred_check
          %p575 = pneg %p262
        $region34: #{decoder_layer_forward.1} parent=11 // pred_check_branch
          %577 = sbr.rel (%p575) target = $region36
        $region35: #{decoder_layer_forward.1} parent=11 // pred_region
          _
        $region36: #{decoder_layer_forward.1} parent=11 // pred_fallthru
          _
        // Predicated region
        $region37: #{decoder_layer_forward.1} parent=11 // pred_check
          %p578 = pneg %p283
        $region38: #{decoder_layer_forward.1} parent=11 // pred_check_branch
          %580 = sbr.rel (%p578) target = $region40
        $region39: #{decoder_layer_forward.1} parent=11 // pred_region
          _
        $region40: #{decoder_layer_forward.1} parent=11 // pred_fallthru
          _
        // Predicated region
        $region41: #{decoder_layer_forward.1} parent=11 // pred_check
          %p581 = pneg %p304
        $region42: #{decoder_layer_forward.1} parent=11 // pred_check_branch
          %583 = sbr.rel (%p581) target = $region44
        $region43: #{decoder_layer_forward.1} parent=11 // pred_region
          _
        $region44: #{decoder_layer_forward.1} parent=11 // pred_fallthru
          _
        // Predicated region
        $region45: #{decoder_layer_forward.1} parent=11 // pred_check
          %p584 = pneg %p325
        $region46: #{decoder_layer_forward.1} parent=11 // pred_check_branch
          %586 = sbr.rel (%p584) target = $region48
        $region47: #{decoder_layer_forward.1} parent=11 // pred_region
          _
        $region48: #{decoder_layer_forward.1} parent=11 // pred_fallthru
          _
        // Predicated region
        $region49: #{decoder_layer_forward.1} parent=11 // pred_check
          %p587 = pneg %p346
        $region50: #{decoder_layer_forward.1} parent=11 // pred_check_branch
          %589 = sbr.rel (%p587) target = $region52
        $region51: #{decoder_layer_forward.1} parent=11 // pred_region
          _
        $region52: #{decoder_layer_forward.1} parent=11 // pred_fallthru
          _
        // Predicated region
        $region53: #{decoder_layer_forward.1} parent=11 // pred_check
          %p590 = pneg %p367
        $region54: #{decoder_layer_forward.1} parent=11 // pred_check_branch
          %592 = sbr.rel (%p590) target = $region56
        $region55: #{decoder_layer_forward.1} parent=11 // pred_region
          _
        $region56: #{decoder_layer_forward.1} parent=11 // pred_fallthru
          _
        // Predicated region
        $region57: #{decoder_layer_forward.1} parent=11 // pred_check
          %p593 = pneg %p388
        $region58: #{decoder_layer_forward.1} parent=11 // pred_check_branch
          %595 = sbr.rel (%p593) target = $region60
        $region59: #{decoder_layer_forward.1} parent=11 // pred_region
          _
        $region60: #{decoder_layer_forward.1} parent=11 // pred_fallthru
          _
        // Predicated region
        $region61: #{decoder_layer_forward.1} parent=11 // pred_check
          %p596 = pneg %p409
        $region62: #{decoder_layer_forward.1} parent=11 // pred_check_branch
          %598 = sbr.rel (%p596) target = $region64
        $region63: #{decoder_layer_forward.1} parent=11 // pred_region
          _
        $region64: #{decoder_layer_forward.1} parent=11 // pred_fallthru
          _
        // Predicated region
        $region65: #{decoder_layer_forward.1} parent=11 // pred_check
          %p599 = pneg %p430
        $region66: #{decoder_layer_forward.1} parent=11 // pred_check_branch
          %601 = sbr.rel (%p599) target = $region68
        $region67: #{decoder_layer_forward.1} parent=11 // pred_region
          _
        $region68: #{decoder_layer_forward.1} parent=11 // pred_fallthru
          _
        // Predicated region
        $region69: #{decoder_layer_forward.1} parent=11 // pred_check
          %p602 = pneg %p451
        $region70: #{decoder_layer_forward.1} parent=11 // pred_check_branch
          %604 = sbr.rel (%p602) target = $region72
        $region71: #{decoder_layer_forward.1} parent=11 // pred_region
          _
        $region72: #{decoder_layer_forward.1} parent=11 // pred_fallthru
          _
        // Predicated region
        $region73: #{decoder_layer_forward.1} parent=11 // pred_check
          %p605 = pneg %p472
        $region74: #{decoder_layer_forward.1} parent=11 // pred_check_branch
          %607 = sbr.rel (%p605) target = $region76
        $region75: #{decoder_layer_forward.1} parent=11 // pred_region
          _
        $region76: #{decoder_layer_forward.1} parent=11 // pred_fallthru
          _
        // Predicated region
        $region77: #{decoder_layer_forward.1} parent=11 // pred_check
          %p608 = pneg %p493
        $region78: #{decoder_layer_forward.1} parent=11 // pred_check_branch
          %610 = sbr.rel (%p608) target = $region80
        $region79: #{decoder_layer_forward.1} parent=11 // pred_region
          _
        $region80: #{decoder_layer_forward.1} parent=11 // pred_fallthru
          _
      $region12: #{decoder_layer_forward.1} parent=5 // pred_fallthru
        _
      %p611 = scmp.lt.s32.totalorder %s32, 2
      // Predicated region
      $region81: #{decoder_layer_forward.1} parent=5 // pred_check
        %p612 = pneg %p611
      $region82: #{decoder_layer_forward.1} parent=5 // pred_check_branch
        %614 = sbr.rel (%p612) target = $region84
      $region83: #{decoder_layer_forward.1} parent=5 // pred_region
        // Predicated region
        $region85: #{decoder_layer_forward.1} parent=83 // pred_check
          %p615 = pneg %p52
        $region86: #{decoder_layer_forward.1} parent=83 // pred_check_branch
          %617 = sbr.rel (%p615) target = $region88
        $region87: #{decoder_layer_forward.1} parent=83 // pred_region
          %p618 = scmp.lt.s32.totalorder %s32, 1
          %s619 = scalar_select %p618, %s32, 1
          %s620 = smul.addr %s619, 8
          %s621 = scalar_lea.vmem %s0, %s620
        $region88: #{decoder_layer_forward.1} parent=83 // pred_fallthru
          _
        // Predicated region
        $region89: #{decoder_layer_forward.1} parent=83 // pred_check
          %p622 = pneg %p78
        $region90: #{decoder_layer_forward.1} parent=83 // pred_check_branch
          %624 = sbr.rel (%p622) target = $region92
        $region91: #{decoder_layer_forward.1} parent=83 // pred_region
          %p625 = scmp.lt.s32.totalorder %s32, 1
          %s626 = scalar_select %p625, %s32, 1
          %s627 = smul.addr %s626, 2
          %s628 = smul.addr %s627, 8
          %s629 = scalar_lea.vmem %s1, %s628
        $region92: #{decoder_layer_forward.1} parent=83 // pred_fallthru
          _
        // Predicated region
        $region93: #{decoder_layer_forward.1} parent=83 // pred_check
          %p630 = pneg %p104
        $region94: #{decoder_layer_forward.1} parent=83 // pred_check_branch
          %632 = sbr.rel (%p630) target = $region96
        $region95: #{decoder_layer_forward.1} parent=83 // pred_region
          %p633 = scmp.lt.s32.totalorder %s32, 1
          %s634 = scalar_select %p633, %s32, 1
          %s635 = smul.addr %s634, 2
          %s636 = smul.addr %s635, 8
          %s637 = scalar_lea.vmem %s2, %s636
        $region96: #{decoder_layer_forward.1} parent=83 // pred_fallthru
          _
        // Predicated region
        $region97: #{decoder_layer_forward.1} parent=83 // pred_check
          %p638 = pneg %p151
        $region98: #{decoder_layer_forward.1} parent=83 // pred_check_branch
          %640 = sbr.rel (%p638) target = $region100
        $region99: #{decoder_layer_forward.1} parent=83 // pred_region
          %p641 = scmp.lt.s32.totalorder %s32, 1
          %s642 = scalar_select %p641, %s32, 1
          %s643 = scalar_lea.vmem %s4, %s642
        $region100: #{decoder_layer_forward.1} parent=83 // pred_fallthru
          _
      $region84: #{decoder_layer_forward.1} parent=5 // pred_fallthru
        _
      %p644 = scmp.le.s32.totalorder 1, %s32
      %p645 = scmp.lt.s32.totalorder %s32, 3
      %p646 = pnand %p644, %p645
      %p647 = pneg %p646
      // Predicated region
      $region101: #{decoder_layer_forward.1} parent=5 // pred_check
        _
      $region102: #{decoder_layer_forward.1} parent=5 // pred_check_branch
        %649 = sbr.rel (%p646) target = $region104
      $region103: #{decoder_layer_forward.1} parent=5 // pred_region
        %s650 = ssub.s32 %s32, 1
        %p651 = scmp.lt.s32.totalorder %s37, 1
        %s652 = scalar_select %p651, %s37, 1
        %s653 = smul.addr %s652, 8
        %s654 = scalar_lea.vmem %s0, %s653
        %p655 = pneg %p58
        %p656 = pneg %p55
        %p657 = scmp.lt.s32.totalorder %s37, 1
        %s658 = scalar_select %p657, %s37, 1
        %s659 = smul.addr %s658, 2
        %s660 = smul.addr %s659, 8
        %s661 = scalar_lea.vmem %s1, %s660
        %p662 = pneg %p84
        %p663 = pneg %p81
        %p664 = scmp.lt.s32.totalorder %s37, 1
        %s665 = scalar_select %p664, %s37, 1
        %s666 = smul.addr %s665, 2
        %s667 = smul.addr %s666, 8
        %s668 = scalar_lea.vmem %s2, %s667
        %p669 = pneg %p110
        %p670 = pneg %p107
        %p671 = pneg %p131
        %p672 = pneg %p128
        %p673 = scmp.lt.s32.totalorder %s37, 1
        %s674 = scalar_select %p673, %s37, 1
        %s675 = scalar_lea.vmem %s4, %s674
        %p676 = pneg %p157
        %p677 = pneg %p154
        %p678 = pneg %p178
        %p679 = pneg %p175
        %p680 = pneg %p199
        %p681 = pneg %p196
        %p682 = pneg %p220
        %p683 = pneg %p217
        %p684 = pneg %p241
        %p685 = pneg %p238
        %p686 = pneg %p262
        %p687 = pneg %p259
        %p688 = pneg %p283
        %p689 = pneg %p280
        %p690 = pneg %p304
        %p691 = pneg %p301
        %p692 = pneg %p325
        %p693 = pneg %p322
        %p694 = pneg %p346
        %p695 = pneg %p343
        %p696 = pneg %p367
        %p697 = pneg %p364
        %p698 = pneg %p388
        %p699 = pneg %p385
        %p700 = pneg %p409
        %p701 = pneg %p406
        %p702 = pneg %p430
        %p703 = pneg %p427
        %p704 = pneg %p451
        %p705 = pneg %p448
        %p706 = pneg %p472
        %p707 = pneg %p469
        %p708 = pneg %p493
        %p709 = pneg %p490
        %p710 = pneg %p519
        %p711 = pneg %p516
        %p712 = scmp.lt.s32.totalorder %s37, 1
        %s713 = scalar_select %p712, %s37, 1
        %s714 = smul.addr %s713, 8
        %s715 = scalar_lea.vmem %s21, %s714
        %p716 = pneg %p545
        %p717 = pneg %p542
        %s718 = sand.u32 %s532, 1
        %s719 = scalar_lea.sflag [#allocation3], %s718
        %s720 = sand.u32 %s532, 1
        %s721 = smul.addr %s720, 8
        %s722 = scalar_lea.vmem [#allocation2], %s721
        %p723 = scmp.lt.s32.totalorder %s37, 1
        %s724 = scalar_select %p723, %s37, 1
        %s725 = smul.addr %s724, 8
        %s726 = scalar_lea.vmem %s0, %s725
        %p727 = scmp.lt.s32.totalorder %s37, 1
        %s728 = scalar_select %p727, %s37, 1
        %s729 = smul.addr %s728, 2
        %s730 = smul.addr %s729, 8
        %s731 = scalar_lea.vmem %s1, %s730
        %p732 = scmp.lt.s32.totalorder %s37, 1
        %s733 = scalar_select %p732, %s37, 1
        %s734 = smul.addr %s733, 2
        %s735 = smul.addr %s734, 8
        %s736 = scalar_lea.vmem %s2, %s735
        %p737 = scmp.lt.s32.totalorder %s37, 1
        %s738 = scalar_select %p737, %s37, 1
        %s739 = scalar_lea.vmem %s4, %s738
        %p740 = scmp.lt.s32.totalorder %s37, 1
        %s741 = scalar_select %p740, %s37, 1
        %s742 = smul.addr %s741, 8
        %s743 = scalar_lea.vmem %s21, %s742
        %v744 = vld [vmem:[%s726] sm:$0xff]
        %v745 = vld [vmem:[%s731] sm:$0xff]
        %v746 = vld [vmem:[%s731 + $0x8] sm:$0xf]
        %v747 = vld [vmem:[%s736] sm:$0xff]
        %v748 = vld [vmem:[%s736 + $0x8] sm:$0x3]
        %v749 = vld [vmem:[%s5] sm:$0xff]
        %v750 = vld [vmem:[%s5 + $0x8] sm:$0xff]
        %v751 = vld [vmem:[%s5 + $0x10] sm:$0xff]
        %v752 = vld [vmem:[%s5 + $0x18] sm:$0xff]
        %v753 = vld [vmem:[%s6] sm:$0x1]
        %v755 = vlaneseq
        %v756 = vshrl.u32 %v755, 7
        %v757 = vsub.s32 0, %v756
        %v758 = vrot.slane %v753, %v757
        %vm760 = vcmask 261120
        %v762 = vsel %vm760, %v744, 0
        %764 = vmatprep.subr.mxu0 0.0
        %765 = vmatpush1.msra.mxu0 0.0
        %766 = vmatprep.subr.mxu0 0.0
        %767 = vmatpush1.msra.mxu0 0.0
        %768 = vmatprep.subr.mxu0 0.0
        %769 = vmatpush1.msra.mxu0 0.0
        %770 = vmatprep.subr.mxu0 0.0
        %771 = vmatpush1.msra.mxu0 0.0
        %772 = vmatprep.subr.mxu0 0.0
        %773 = vmatpush1.msra.mxu0 0.0
        %774 = vmatprep.subr.mxu0 0.0
        %775 = vmatpush1.msra.mxu0 0.0
        %776 = vmatprep.subr.mxu0 0.0
        %777 = vmatpush1.msra.mxu0 0.0
        %778 = vmatprep.subr.mxu0 0.0
        %779 = vmatpush1.msra.mxu0 0.0
        %780 = vmatprep.subr.mxu0 0.0
        %781 = vmatpush1.msra.mxu0 0.0
        %782 = vmatprep.subr.mxu0 0.0
        %783 = vmatpush1.msra.mxu0 0.0
        %784 = vmatprep.subr.mxu0 0.0
        %785 = vmatpush1.msra.mxu0 0.0
        %786 = vmatprep.subr.mxu0 0.0
        %787 = vmatpush1.msra.mxu0 0.0
        %788 = vmatprep.subr.mxu0 0.0
        %789 = vmatpush1.msra.mxu0 %v752
        %790 = vmatprep.subr.mxu0 0.0
        %791 = vmatpush1.msra.mxu0 %v751
        %792 = vmatprep.subr.mxu0 0.0
        %793 = vmatpush1.msra.mxu0 %v750
        %794 = vmatprep.subr.mxu0 0.0
        %795 = vmatpush1.msra.mxu0 %v749
        %796 = vmatprep.subr.mxu0 0.0
        %797 = vmatpush2.msra.mxu0 0.0
        %798 = vmatprep.subr.mxu0 0.0
        %799 = vmatpush2.msra.mxu0 0.0
        %800 = vmatprep.subr.mxu0 0.0
        %801 = vmatpush2.msra.mxu0 0.0
        %802 = vmatprep.subr.mxu0 0.0
        %803 = vmatpush2.msra.mxu0 0.0
        %804 = vmatprep.subr.mxu0 0.0
        %805 = vmatpush2.msra.mxu0 0.0
        %806 = vmatprep.subr.mxu0 0.0
        %807 = vmatpush2.msra.mxu0 0.0
        %808 = vmatprep.subr.mxu0 0.0
        %809 = vmatpush2.msra.mxu0 0.0
        %810 = vmatprep.subr.mxu0 0.0
        %811 = vmatpush2.msra.mxu0 0.0
        %812 = vmatprep.subr.mxu0 0.0
        %813 = vmatpush2.msra.mxu0 0.0
        %814 = vmatprep.subr.mxu0 0.0
        %815 = vmatpush2.msra.mxu0 0.0
        %816 = vmatprep.subr.mxu0 0.0
        %817 = vmatpush2.msra.mxu0 0.0
        %818 = vmatprep.subr.mxu0 0.0
        %819 = vmatpush2.msra.mxu0 0.0
        %820 = vmatprep.subr.mxu0 0.0
        %821 = vmatpush2.msra.mxu0 0.0
        %822 = vmatprep.subr.mxu0 0.0
        %823 = vmatpush2.msra.mxu0 0.0
        %824 = vmatprep.subr.mxu0 0.0
        %825 = vmatpush2.msra.mxu0 0.0
        %826 = vmatprep.subr.mxu0 0.0
        %827 = vmatpush2.msra.mxu0 0.0
        %828 = vmatprep.mubr.f32.mxu0 0.0
        %829 = vmatmul.mubr.f32.gmra.mxu0 %v762
        %v830 = vpop.f32.mrf.mxu0
        %v831 = vadd.f32 %v758, %v830
        %v832 = vpop.f32.mrf.mxu0
        %833 = vdwg.mxu0
        %v834 = vld [vmem:[%s3] sm:$0xff]
        %v835 = vmul.f32 %v831, 0.35355338
        %837 = vrot.lane.b32.xlu0 %v835, 120
        %v838 = vpop.permute.xlu0 %837
        %840 = vrot.lane.b32.xlu0 %v835, 112
        %v841 = vpop.permute.xlu0 %840
        %843 = vrot.lane.b32.xlu0 %v835, 104
        %v844 = vpop.permute.xlu0 %843
        %v846 = vcombine.low %v835, %v841
        %v847 = vcombine.high %v835, %v841
        %v849 = vunpack.c.l.s4 1983009808
        %v850 = vunpack.c.0.s8 %v849
        %v851 = vlaneseq
        %v852 = vshrl.u32 %v851, 7
        %v853 = vsub.s32 %v850, %v852
        %v854 = vrot.slane %v846, %v853
        %v856 = vunpack.c.l.s4 1983009808
        %v857 = vunpack.c.0.s8 %v856
        %v858 = vlaneseq
        %v859 = vshrl.u32 %v858, 7
        %v860 = vsub.s32 %v857, %v859
        %v861 = vrot.slane %v847, %v860
        %v862 = vcombine.low %v838, %v844
        %v863 = vcombine.high %v838, %v844
        %v865 = vunpack.c.l.s4 1983009808
        %v866 = vunpack.c.0.s8 %v865
        %v867 = vlaneseq
        %v868 = vshrl.u32 %v867, 7
        %v869 = vsub.s32 %v866, %v868
        %v870 = vrot.slane %v862, %v869
        %v872 = vunpack.c.l.s4 1983009808
        %v873 = vunpack.c.0.s8 %v872
        %v874 = vlaneseq
        %v875 = vshrl.u32 %v874, 7
        %v876 = vsub.s32 %v873, %v875
        %v877 = vrot.slane %v863, %v876
        %v878 = vcombine.low %v854, %v870
        %v879 = vcombine.high %v854, %v870
        %v881 = vunpack.c.l.s4 1934713408
        %v882 = vunpack.c.0.s8 %v881
        %v883 = vlaneseq
        %v884 = vshrl.u32 %v883, 7
        %v885 = vsub.s32 %v882, %v884
        %v886 = vrot.slane %v878, %v885
        %v888 = vunpack.c.l.s4 1934713408
        %v889 = vunpack.c.0.s8 %v888
        %v890 = vlaneseq
        %v891 = vshrl.u32 %v890, 7
        %v892 = vsub.s32 %v889, %v891
        %v893 = vrot.slane %v879, %v892
        %v894 = vcombine.low %v861, %v877
        %v895 = vcombine.high %v861, %v877
        %v897 = vunpack.c.l.s4 1934713408
        %v898 = vunpack.c.0.s8 %v897
        %v899 = vlaneseq
        %v900 = vshrl.u32 %v899, 7
        %v901 = vsub.s32 %v898, %v900
        %v902 = vrot.slane %v894, %v901
        %v904 = vunpack.c.l.s4 1934713408
        %v905 = vunpack.c.0.s8 %v904
        %v906 = vlaneseq
        %v907 = vshrl.u32 %v906, 7
        %v908 = vsub.s32 %v905, %v907
        %v909 = vrot.slane %v895, %v908
        %v910 = vcombine.high %v886, 0.0
        %v911 = vcombine.high %v893, 0.0
        %v912 = vcombine.high %v902, 0.0
        %v913 = vcombine.high %v909, 0.0
        %v914 = vcombine.low %v886, %v893
        %v916 = vunpack.c.l.s4 1983009808
        %v917 = vunpack.c.0.s8 %v916
        %v918 = vlaneseq
        %v919 = vshrl.u32 %v918, 7
        %v920 = vsub.s32 %v917, %v919
        %v921 = vrot.slane %v914, %v920
        %v922 = vcombine.low %v910, %v911
        %v924 = vunpack.c.l.s4 1983009808
        %v925 = vunpack.c.0.s8 %v924
        %v926 = vlaneseq
        %v927 = vshrl.u32 %v926, 7
        %v928 = vsub.s32 %v925, %v927
        %v929 = vrot.slane %v922, %v928
        %v930 = vcombine.low %v902, %v909
        %v932 = vunpack.c.l.s4 1983009808
        %v933 = vunpack.c.0.s8 %v932
        %v934 = vlaneseq
        %v935 = vshrl.u32 %v934, 7
        %v936 = vsub.s32 %v933, %v935
        %v937 = vrot.slane %v930, %v936
        %v938 = vcombine.low %v912, %v913
        %v940 = vunpack.c.l.s4 1983009808
        %v941 = vunpack.c.0.s8 %v940
        %v942 = vlaneseq
        %v943 = vshrl.u32 %v942, 7
        %v944 = vsub.s32 %v941, %v943
        %v945 = vrot.slane %v938, %v944
        %v946 = vcombine.low %v921, %v929
        %v947 = vcombine.high %v921, %v929
        %v949 = vunpack.c.l.s4 1934713408
        %v950 = vunpack.c.0.s8 %v949
        %v951 = vlaneseq
        %v952 = vshrl.u32 %v951, 7
        %v953 = vsub.s32 %v950, %v952
        %v954 = vrot.slane %v946, %v953
        %v956 = vunpack.c.l.s4 1934713408
        %v957 = vunpack.c.0.s8 %v956
        %v958 = vlaneseq
        %v959 = vshrl.u32 %v958, 7
        %v960 = vsub.s32 %v957, %v959
        %v961 = vrot.slane %v947, %v960
        %v962 = vcombine.low %v937, %v945
        %v963 = vcombine.high %v937, %v945
        %v965 = vunpack.c.l.s4 1934713408
        %v966 = vunpack.c.0.s8 %v965
        %v967 = vlaneseq
        %v968 = vshrl.u32 %v967, 7
        %v969 = vsub.s32 %v966, %v968
        %v970 = vrot.slane %v962, %v969
        %v972 = vunpack.c.l.s4 1934713408
        %v973 = vunpack.c.0.s8 %v972
        %v974 = vlaneseq
        %v975 = vshrl.u32 %v974, 7
        %v976 = vsub.s32 %v973, %v975
        %v977 = vrot.slane %v963, %v976
        %v978 = vcombine.low %v954, %v970
        %v979 = vcombine.high %v954, %v970
        %v980 = vcombine.low %v961, %v977
        %v981 = vcombine.high %v961, %v977
        %983 = vrot.lane.b32.xlu0 %v831, 120
        %v984 = vpop.permute.xlu0 %983
        %985 = vrot.lane.b32.xlu0 %v831, 112
        %v986 = vpop.permute.xlu0 %985
        %987 = vrot.lane.b32.xlu0 %v831, 104
        %v988 = vpop.permute.xlu0 %987
        %989 = vrot.lane.b32.xlu0 %v831, 96
        %v990 = vpop.permute.xlu0 %989
        %991 = vrot.lane.b32.xlu0 %v984, 96
        %v992 = vpop.permute.xlu0 %991
        %993 = vrot.lane.b32.xlu0 %v986, 96
        %v994 = vpop.permute.xlu0 %993
        %995 = vrot.lane.b32.xlu0 %v988, 96
        %v996 = vpop.permute.xlu0 %995
        %v1001 = vcombine.low %v990, %v994
        %v1002 = vcombine.high %v990, %v994
        %v1004 = vunpack.c.l.s4 1983009808
        %v1005 = vunpack.c.0.s8 %v1004
        %v1006 = vlaneseq
        %v1007 = vshrl.u32 %v1006, 7
        %v1008 = vsub.s32 %v1005, %v1007
        %v1009 = vrot.slane %v1001, %v1008
        %v1011 = vunpack.c.l.s4 1983009808
        %v1012 = vunpack.c.0.s8 %v1011
        %v1013 = vlaneseq
        %v1014 = vshrl.u32 %v1013, 7
        %v1015 = vsub.s32 %v1012, %v1014
        %v1016 = vrot.slane %v1002, %v1015
        %v1017 = vcombine.low %v992, %v996
        %v1018 = vcombine.high %v992, %v996
        %v1020 = vunpack.c.l.s4 1983009808
        %v1021 = vunpack.c.0.s8 %v1020
        %v1022 = vlaneseq
        %v1023 = vshrl.u32 %v1022, 7
        %v1024 = vsub.s32 %v1021, %v1023
        %v1025 = vrot.slane %v1017, %v1024
        %v1027 = vunpack.c.l.s4 1983009808
        %v1028 = vunpack.c.0.s8 %v1027
        %v1029 = vlaneseq
        %v1030 = vshrl.u32 %v1029, 7
        %v1031 = vsub.s32 %v1028, %v1030
        %v1032 = vrot.slane %v1018, %v1031
        %v1033 = vcombine.low %v1009, %v1025
        %v1034 = vcombine.high %v1009, %v1025
        %v1036 = vunpack.c.l.s4 1934713408
        %v1037 = vunpack.c.0.s8 %v1036
        %v1038 = vlaneseq
        %v1039 = vshrl.u32 %v1038, 7
        %v1040 = vsub.s32 %v1037, %v1039
        %v1041 = vrot.slane %v1033, %v1040
        %v1043 = vunpack.c.l.s4 1934713408
        %v1044 = vunpack.c.0.s8 %v1043
        %v1045 = vlaneseq
        %v1046 = vshrl.u32 %v1045, 7
        %v1047 = vsub.s32 %v1044, %v1046
        %v1048 = vrot.slane %v1034, %v1047
        %v1049 = vcombine.low %v1016, %v1032
        %v1050 = vcombine.high %v1016, %v1032
        %v1052 = vunpack.c.l.s4 1934713408
        %v1053 = vunpack.c.0.s8 %v1052
        %v1054 = vlaneseq
        %v1055 = vshrl.u32 %v1054, 7
        %v1056 = vsub.s32 %v1053, %v1055
        %v1057 = vrot.slane %v1049, %v1056
        %v1059 = vunpack.c.l.s4 1934713408
        %v1060 = vunpack.c.0.s8 %v1059
        %v1061 = vlaneseq
        %v1062 = vshrl.u32 %v1061, 7
        %v1063 = vsub.s32 %v1060, %v1062
        %v1064 = vrot.slane %v1050, %v1063
        %v1065 = vcombine.high %v1041, 0.0
        %v1066 = vcombine.high %v1048, 0.0
        %v1067 = vcombine.high %v1057, 0.0
        %v1068 = vcombine.high %v1064, 0.0
        %v1069 = vcombine.low %v1041, %v1048
        %v1071 = vunpack.c.l.s4 1983009808
        %v1072 = vunpack.c.0.s8 %v1071
        %v1073 = vlaneseq
        %v1074 = vshrl.u32 %v1073, 7
        %v1075 = vsub.s32 %v1072, %v1074
        %v1076 = vrot.slane %v1069, %v1075
        %v1077 = vcombine.low %v1065, %v1066
        %v1079 = vunpack.c.l.s4 1983009808
        %v1080 = vunpack.c.0.s8 %v1079
        %v1081 = vlaneseq
        %v1082 = vshrl.u32 %v1081, 7
        %v1083 = vsub.s32 %v1080, %v1082
        %v1084 = vrot.slane %v1077, %v1083
        %v1085 = vcombine.low %v1057, %v1064
        %v1087 = vunpack.c.l.s4 1983009808
        %v1088 = vunpack.c.0.s8 %v1087
        %v1089 = vlaneseq
        %v1090 = vshrl.u32 %v1089, 7
        %v1091 = vsub.s32 %v1088, %v1090
        %v1092 = vrot.slane %v1085, %v1091
        %v1093 = vcombine.low %v1067, %v1068
        %v1095 = vunpack.c.l.s4 1983009808
        %v1096 = vunpack.c.0.s8 %v1095
        %v1097 = vlaneseq
        %v1098 = vshrl.u32 %v1097, 7
        %v1099 = vsub.s32 %v1096, %v1098
        %v1100 = vrot.slane %v1093, %v1099
        %v1101 = vcombine.low %v1076, %v1084
        %v1102 = vcombine.high %v1076, %v1084
        %v1104 = vunpack.c.l.s4 1934713408
        %v1105 = vunpack.c.0.s8 %v1104
        %v1106 = vlaneseq
        %v1107 = vshrl.u32 %v1106, 7
        %v1108 = vsub.s32 %v1105, %v1107
        %v1109 = vrot.slane %v1101, %v1108
        %v1111 = vunpack.c.l.s4 1934713408
        %v1112 = vunpack.c.0.s8 %v1111
        %v1113 = vlaneseq
        %v1114 = vshrl.u32 %v1113, 7
        %v1115 = vsub.s32 %v1112, %v1114
        %v1116 = vrot.slane %v1102, %v1115
        %v1117 = vcombine.low %v1092, %v1100
        %v1118 = vcombine.high %v1092, %v1100
        %v1120 = vunpack.c.l.s4 1934713408
        %v1121 = vunpack.c.0.s8 %v1120
        %v1122 = vlaneseq
        %v1123 = vshrl.u32 %v1122, 7
        %v1124 = vsub.s32 %v1121, %v1123
        %v1125 = vrot.slane %v1117, %v1124
        %v1127 = vunpack.c.l.s4 1934713408
        %v1128 = vunpack.c.0.s8 %v1127
        %v1129 = vlaneseq
        %v1130 = vshrl.u32 %v1129, 7
        %v1131 = vsub.s32 %v1128, %v1130
        %v1132 = vrot.slane %v1118, %v1131
        %v1133 = vcombine.low %v1109, %v1125
        %v1134 = vcombine.high %v1109, %v1125
        %v1135 = vcombine.low %v1116, %v1132
        %v1136 = vcombine.high %v1116, %v1132
        %1137 = vrot.lane.b32.xlu0 %v831, 64
        %v1138 = vpop.permute.xlu0 %1137
        %1139 = vrot.lane.b32.xlu0 %v984, 64
        %v1140 = vpop.permute.xlu0 %1139
        %1141 = vrot.lane.b32.xlu0 %v986, 64
        %v1142 = vpop.permute.xlu0 %1141
        %1143 = vrot.lane.b32.xlu0 %v988, 64
        %v1144 = vpop.permute.xlu0 %1143
        %v1149 = vcombine.low %v1138, %v1142
        %v1150 = vcombine.high %v1138, %v1142
        %v1152 = vunpack.c.l.s4 1983009808
        %v1153 = vunpack.c.0.s8 %v1152
        %v1154 = vlaneseq
        %v1155 = vshrl.u32 %v1154, 7
        %v1156 = vsub.s32 %v1153, %v1155
        %v1157 = vrot.slane %v1149, %v1156
        %v1159 = vunpack.c.l.s4 1983009808
        %v1160 = vunpack.c.0.s8 %v1159
        %v1161 = vlaneseq
        %v1162 = vshrl.u32 %v1161, 7
        %v1163 = vsub.s32 %v1160, %v1162
        %v1164 = vrot.slane %v1150, %v1163
        %v1165 = vcombine.low %v1140, %v1144
        %v1166 = vcombine.high %v1140, %v1144
        %v1168 = vunpack.c.l.s4 1983009808
        %v1169 = vunpack.c.0.s8 %v1168
        %v1170 = vlaneseq
        %v1171 = vshrl.u32 %v1170, 7
        %v1172 = vsub.s32 %v1169, %v1171
        %v1173 = vrot.slane %v1165, %v1172
        %v1175 = vunpack.c.l.s4 1983009808
        %v1176 = vunpack.c.0.s8 %v1175
        %v1177 = vlaneseq
        %v1178 = vshrl.u32 %v1177, 7
        %v1179 = vsub.s32 %v1176, %v1178
        %v1180 = vrot.slane %v1166, %v1179
        %v1181 = vcombine.low %v1157, %v1173
        %v1182 = vcombine.high %v1157, %v1173
        %v1184 = vunpack.c.l.s4 1934713408
        %v1185 = vunpack.c.0.s8 %v1184
        %v1186 = vlaneseq
        %v1187 = vshrl.u32 %v1186, 7
        %v1188 = vsub.s32 %v1185, %v1187
        %v1189 = vrot.slane %v1181, %v1188
        %v1191 = vunpack.c.l.s4 1934713408
        %v1192 = vunpack.c.0.s8 %v1191
        %v1193 = vlaneseq
        %v1194 = vshrl.u32 %v1193, 7
        %v1195 = vsub.s32 %v1192, %v1194
        %v1196 = vrot.slane %v1182, %v1195
        %v1197 = vcombine.low %v1164, %v1180
        %v1198 = vcombine.high %v1164, %v1180
        %v1200 = vunpack.c.l.s4 1934713408
        %v1201 = vunpack.c.0.s8 %v1200
        %v1202 = vlaneseq
        %v1203 = vshrl.u32 %v1202, 7
        %v1204 = vsub.s32 %v1201, %v1203
        %v1205 = vrot.slane %v1197, %v1204
        %v1207 = vunpack.c.l.s4 1934713408
        %v1208 = vunpack.c.0.s8 %v1207
        %v1209 = vlaneseq
        %v1210 = vshrl.u32 %v1209, 7
        %v1211 = vsub.s32 %v1208, %v1210
        %v1212 = vrot.slane %v1198, %v1211
        %v1213 = vcombine.high %v1189, 0.0
        %v1214 = vcombine.high %v1196, 0.0
        %v1215 = vcombine.high %v1205, 0.0
        %v1216 = vcombine.high %v1212, 0.0
        %v1217 = vcombine.low %v1189, %v1196
        %v1219 = vunpack.c.l.s4 1983009808
        %v1220 = vunpack.c.0.s8 %v1219
        %v1221 = vlaneseq
        %v1222 = vshrl.u32 %v1221, 7
        %v1223 = vsub.s32 %v1220, %v1222
        %v1224 = vrot.slane %v1217, %v1223
        %v1225 = vcombine.low %v1213, %v1214
        %v1227 = vunpack.c.l.s4 1983009808
        %v1228 = vunpack.c.0.s8 %v1227
        %v1229 = vlaneseq
        %v1230 = vshrl.u32 %v1229, 7
        %v1231 = vsub.s32 %v1228, %v1230
        %v1232 = vrot.slane %v1225, %v1231
        %v1233 = vcombine.low %v1205, %v1212
        %v1235 = vunpack.c.l.s4 1983009808
        %v1236 = vunpack.c.0.s8 %v1235
        %v1237 = vlaneseq
        %v1238 = vshrl.u32 %v1237, 7
        %v1239 = vsub.s32 %v1236, %v1238
        %v1240 = vrot.slane %v1233, %v1239
        %v1241 = vcombine.low %v1215, %v1216
        %v1243 = vunpack.c.l.s4 1983009808
        %v1244 = vunpack.c.0.s8 %v1243
        %v1245 = vlaneseq
        %v1246 = vshrl.u32 %v1245, 7
        %v1247 = vsub.s32 %v1244, %v1246
        %v1248 = vrot.slane %v1241, %v1247
        %v1249 = vcombine.low %v1224, %v1232
        %v1250 = vcombine.high %v1224, %v1232
        %v1252 = vunpack.c.l.s4 1934713408
        %v1253 = vunpack.c.0.s8 %v1252
        %v1254 = vlaneseq
        %v1255 = vshrl.u32 %v1254, 7
        %v1256 = vsub.s32 %v1253, %v1255
        %v1257 = vrot.slane %v1249, %v1256
        %v1259 = vunpack.c.l.s4 1934713408
        %v1260 = vunpack.c.0.s8 %v1259
        %v1261 = vlaneseq
        %v1262 = vshrl.u32 %v1261, 7
        %v1263 = vsub.s32 %v1260, %v1262
        %v1264 = vrot.slane %v1250, %v1263
        %v1265 = vcombine.low %v1240, %v1248
        %v1266 = vcombine.high %v1240, %v1248
        %v1268 = vunpack.c.l.s4 1934713408
        %v1269 = vunpack.c.0.s8 %v1268
        %v1270 = vlaneseq
        %v1271 = vshrl.u32 %v1270, 7
        %v1272 = vsub.s32 %v1269, %v1271
        %v1273 = vrot.slane %v1265, %v1272
        %v1275 = vunpack.c.l.s4 1934713408
        %v1276 = vunpack.c.0.s8 %v1275
        %v1277 = vlaneseq
        %v1278 = vshrl.u32 %v1277, 7
        %v1279 = vsub.s32 %v1276, %v1278
        %v1280 = vrot.slane %v1266, %v1279
        %v1281 = vcombine.low %v1257, %v1273
        %v1282 = vcombine.high %v1257, %v1273
        %v1283 = vcombine.low %v1264, %v1280
        %v1284 = vcombine.high %v1264, %v1280
        %vm1285 = vcmask 64512
        %v1287 = vsel %vm1285, %v978, 0
        %v1290 = vsel %vm1285, %v1133, 0
        %1292 = vmatprep.subr.mxu0 0.0
        %1293 = vmatpush1.xpose.msra.mxu0 0.0
        %1294 = vmatprep.subr.mxu0 0.0
        %1295 = vmatpush1.xpose.msra.mxu0 0.0
        %1296 = vmatprep.subr.mxu0 0.0
        %1297 = vmatpush1.xpose.msra.mxu0 0.0
        %1298 = vmatprep.subr.mxu0 0.0
        %1299 = vmatpush1.xpose.msra.mxu0 0.0
        %1300 = vmatprep.subr.mxu0 0.0
        %1301 = vmatpush1.xpose.msra.mxu0 0.0
        %1302 = vmatprep.subr.mxu0 0.0
        %1303 = vmatpush1.xpose.msra.mxu0 0.0
        %1304 = vmatprep.subr.mxu0 0.0
        %1305 = vmatpush1.xpose.msra.mxu0 0.0
        %1306 = vmatprep.subr.mxu0 0.0
        %1307 = vmatpush1.xpose.msra.mxu0 0.0
        %1308 = vmatprep.subr.mxu0 0.0
        %1309 = vmatpush1.xpose.msra.mxu0 0.0
        %1310 = vmatprep.subr.mxu0 0.0
        %1311 = vmatpush1.xpose.msra.mxu0 0.0
        %1312 = vmatprep.subr.mxu0 0.0
        %1313 = vmatpush1.xpose.msra.mxu0 0.0
        %1314 = vmatprep.subr.mxu0 0.0
        %1315 = vmatpush1.xpose.msra.mxu0 0.0
        %1316 = vmatprep.subr.mxu0 0.0
        %1317 = vmatpush1.xpose.msra.mxu0 0.0
        %1318 = vmatprep.subr.mxu0 0.0
        %1319 = vmatpush1.xpose.msra.mxu0 0.0
        %1320 = vmatprep.subr.mxu0 0.0
        %1321 = vmatpush1.xpose.msra.mxu0 0.0
        %1322 = vmatprep.subr.mxu0 0.0
        %1323 = vmatpush1.xpose.msra.mxu0 %v1290
        %1324 = vmatprep.subr.mxu0 0.0
        %1325 = vmatpush2.xpose.msra.mxu0 0.0
        %1326 = vmatprep.subr.mxu0 0.0
        %1327 = vmatpush2.xpose.msra.mxu0 0.0
        %1328 = vmatprep.subr.mxu0 0.0
        %1329 = vmatpush2.xpose.msra.mxu0 0.0
        %1330 = vmatprep.subr.mxu0 0.0
        %1331 = vmatpush2.xpose.msra.mxu0 0.0
        %1332 = vmatprep.subr.mxu0 0.0
        %1333 = vmatpush2.xpose.msra.mxu0 0.0
        %1334 = vmatprep.subr.mxu0 0.0
        %1335 = vmatpush2.xpose.msra.mxu0 0.0
        %1336 = vmatprep.subr.mxu0 0.0
        %1337 = vmatpush2.xpose.msra.mxu0 0.0
        %1338 = vmatprep.subr.mxu0 0.0
        %1339 = vmatpush2.xpose.msra.mxu0 0.0
        %1340 = vmatprep.subr.mxu0 0.0
        %1341 = vmatpush2.xpose.msra.mxu0 0.0
        %1342 = vmatprep.subr.mxu0 0.0
        %1343 = vmatpush2.xpose.msra.mxu0 0.0
        %1344 = vmatprep.subr.mxu0 0.0
        %1345 = vmatpush2.xpose.msra.mxu0 0.0
        %1346 = vmatprep.subr.mxu0 0.0
        %1347 = vmatpush2.xpose.msra.mxu0 0.0
        %1348 = vmatprep.subr.mxu0 0.0
        %1349 = vmatpush2.xpose.msra.mxu0 0.0
        %1350 = vmatprep.subr.mxu0 0.0
        %1351 = vmatpush2.xpose.msra.mxu0 0.0
        %1352 = vmatprep.subr.mxu0 0.0
        %1353 = vmatpush2.xpose.msra.mxu0 0.0
        %1354 = vmatprep.subr.mxu0 0.0
        %1355 = vmatpush2.xpose.msra.mxu0 0.0
        %1356 = vmatprep.mubr.f32.mxu0 0.0
        %1357 = vmatmul.mubr.f32.gmra.mxu0 %v1287
        %v1358 = vpop.f32.mrf.mxu0
        %v1359 = vadd.f32 %v834, %v1358
        %v1360 = vpop.f32.mrf.mxu0
        %1361 = vdwg.mxu0
        %v1363 = vsel %vm1285, %v979, 0
        %v1366 = vsel %vm1285, %v1134, 0
        %1368 = vmatprep.subr.mxu0 0.0
        %1369 = vmatpush1.xpose.msra.mxu0 0.0
        %1370 = vmatprep.subr.mxu0 0.0
        %1371 = vmatpush1.xpose.msra.mxu0 0.0
        %1372 = vmatprep.subr.mxu0 0.0
        %1373 = vmatpush1.xpose.msra.mxu0 0.0
        %1374 = vmatprep.subr.mxu0 0.0
        %1375 = vmatpush1.xpose.msra.mxu0 0.0
        %1376 = vmatprep.subr.mxu0 0.0
        %1377 = vmatpush1.xpose.msra.mxu0 0.0
        %1378 = vmatprep.subr.mxu0 0.0
        %1379 = vmatpush1.xpose.msra.mxu0 0.0
        %1380 = vmatprep.subr.mxu0 0.0
        %1381 = vmatpush1.xpose.msra.mxu0 0.0
        %1382 = vmatprep.subr.mxu0 0.0
        %1383 = vmatpush1.xpose.msra.mxu0 0.0
        %1384 = vmatprep.subr.mxu0 0.0
        %1385 = vmatpush1.xpose.msra.mxu0 0.0
        %1386 = vmatprep.subr.mxu0 0.0
        %1387 = vmatpush1.xpose.msra.mxu0 0.0
        %1388 = vmatprep.subr.mxu0 0.0
        %1389 = vmatpush1.xpose.msra.mxu0 0.0
        %1390 = vmatprep.subr.mxu0 0.0
        %1391 = vmatpush1.xpose.msra.mxu0 0.0
        %1392 = vmatprep.subr.mxu0 0.0
        %1393 = vmatpush1.xpose.msra.mxu0 0.0
        %1394 = vmatprep.subr.mxu0 0.0
        %1395 = vmatpush1.xpose.msra.mxu0 0.0
        %1396 = vmatprep.subr.mxu0 0.0
        %1397 = vmatpush1.xpose.msra.mxu0 0.0
        %1398 = vmatprep.subr.mxu0 0.0
        %1399 = vmatpush1.xpose.msra.mxu0 %v1366
        %1400 = vmatprep.subr.mxu0 0.0
        %1401 = vmatpush2.xpose.msra.mxu0 0.0
        %1402 = vmatprep.subr.mxu0 0.0
        %1403 = vmatpush2.xpose.msra.mxu0 0.0
        %1404 = vmatprep.subr.mxu0 0.0
        %1405 = vmatpush2.xpose.msra.mxu0 0.0
        %1406 = vmatprep.subr.mxu0 0.0
        %1407 = vmatpush2.xpose.msra.mxu0 0.0
        %1408 = vmatprep.subr.mxu0 0.0
        %1409 = vmatpush2.xpose.msra.mxu0 0.0
        %1410 = vmatprep.subr.mxu0 0.0
        %1411 = vmatpush2.xpose.msra.mxu0 0.0
        %1412 = vmatprep.subr.mxu0 0.0
        %1413 = vmatpush2.xpose.msra.mxu0 0.0
        %1414 = vmatprep.subr.mxu0 0.0
        %1415 = vmatpush2.xpose.msra.mxu0 0.0
        %1416 = vmatprep.subr.mxu0 0.0
        %1417 = vmatpush2.xpose.msra.mxu0 0.0
        %1418 = vmatprep.subr.mxu0 0.0
        %1419 = vmatpush2.xpose.msra.mxu0 0.0
        %1420 = vmatprep.subr.mxu0 0.0
        %1421 = vmatpush2.xpose.msra.mxu0 0.0
        %1422 = vmatprep.subr.mxu0 0.0
        %1423 = vmatpush2.xpose.msra.mxu0 0.0
        %1424 = vmatprep.subr.mxu0 0.0
        %1425 = vmatpush2.xpose.msra.mxu0 0.0
        %1426 = vmatprep.subr.mxu0 0.0
        %1427 = vmatpush2.xpose.msra.mxu0 0.0
        %1428 = vmatprep.subr.mxu0 0.0
        %1429 = vmatpush2.xpose.msra.mxu0 0.0
        %1430 = vmatprep.subr.mxu0 0.0
        %1431 = vmatpush2.xpose.msra.mxu0 0.0
        %1432 = vmatprep.mubr.f32.mxu0 0.0
        %1433 = vmatmul.mubr.f32.gmra.mxu0 %v1363
        %v1434 = vpop.f32.mrf.mxu0
        %v1435 = vadd.f32 %v834, %v1434
        %v1436 = vpop.f32.mrf.mxu0
        %1437 = vdwg.mxu0
        %v1439 = vsel %vm1285, %v980, 0
        %v1442 = vsel %vm1285, %v1135, 0
        %1444 = vmatprep.subr.mxu0 0.0
        %1445 = vmatpush1.xpose.msra.mxu0 0.0
        %1446 = vmatprep.subr.mxu0 0.0
        %1447 = vmatpush1.xpose.msra.mxu0 0.0
        %1448 = vmatprep.subr.mxu0 0.0
        %1449 = vmatpush1.xpose.msra.mxu0 0.0
        %1450 = vmatprep.subr.mxu0 0.0
        %1451 = vmatpush1.xpose.msra.mxu0 0.0
        %1452 = vmatprep.subr.mxu0 0.0
        %1453 = vmatpush1.xpose.msra.mxu0 0.0
        %1454 = vmatprep.subr.mxu0 0.0
        %1455 = vmatpush1.xpose.msra.mxu0 0.0
        %1456 = vmatprep.subr.mxu0 0.0
        %1457 = vmatpush1.xpose.msra.mxu0 0.0
        %1458 = vmatprep.subr.mxu0 0.0
        %1459 = vmatpush1.xpose.msra.mxu0 0.0
        %1460 = vmatprep.subr.mxu0 0.0
        %1461 = vmatpush1.xpose.msra.mxu0 0.0
        %1462 = vmatprep.subr.mxu0 0.0
        %1463 = vmatpush1.xpose.msra.mxu0 0.0
        %1464 = vmatprep.subr.mxu0 0.0
        %1465 = vmatpush1.xpose.msra.mxu0 0.0
        %1466 = vmatprep.subr.mxu0 0.0
        %1467 = vmatpush1.xpose.msra.mxu0 0.0
        %1468 = vmatprep.subr.mxu0 0.0
        %1469 = vmatpush1.xpose.msra.mxu0 0.0
        %1470 = vmatprep.subr.mxu0 0.0
        %1471 = vmatpush1.xpose.msra.mxu0 0.0
        %1472 = vmatprep.subr.mxu0 0.0
        %1473 = vmatpush1.xpose.msra.mxu0 0.0
        %1474 = vmatprep.subr.mxu0 0.0
        %1475 = vmatpush1.xpose.msra.mxu0 %v1442
        %1476 = vmatprep.subr.mxu0 0.0
        %1477 = vmatpush2.xpose.msra.mxu0 0.0
        %1478 = vmatprep.subr.mxu0 0.0
        %1479 = vmatpush2.xpose.msra.mxu0 0.0
        %1480 = vmatprep.subr.mxu0 0.0
        %1481 = vmatpush2.xpose.msra.mxu0 0.0
        %1482 = vmatprep.subr.mxu0 0.0
        %1483 = vmatpush2.xpose.msra.mxu0 0.0
        %1484 = vmatprep.subr.mxu0 0.0
        %1485 = vmatpush2.xpose.msra.mxu0 0.0
        %1486 = vmatprep.subr.mxu0 0.0
        %1487 = vmatpush2.xpose.msra.mxu0 0.0
        %1488 = vmatprep.subr.mxu0 0.0
        %1489 = vmatpush2.xpose.msra.mxu0 0.0
        %1490 = vmatprep.subr.mxu0 0.0
        %1491 = vmatpush2.xpose.msra.mxu0 0.0
        %1492 = vmatprep.subr.mxu0 0.0
        %1493 = vmatpush2.xpose.msra.mxu0 0.0
        %1494 = vmatprep.subr.mxu0 0.0
        %1495 = vmatpush2.xpose.msra.mxu0 0.0
        %1496 = vmatprep.subr.mxu0 0.0
        %1497 = vmatpush2.xpose.msra.mxu0 0.0
        %1498 = vmatprep.subr.mxu0 0.0
        %1499 = vmatpush2.xpose.msra.mxu0 0.0
        %1500 = vmatprep.subr.mxu0 0.0
        %1501 = vmatpush2.xpose.msra.mxu0 0.0
        %1502 = vmatprep.subr.mxu0 0.0
        %1503 = vmatpush2.xpose.msra.mxu0 0.0
        %1504 = vmatprep.subr.mxu0 0.0
        %1505 = vmatpush2.xpose.msra.mxu0 0.0
        %1506 = vmatprep.subr.mxu0 0.0
        %1507 = vmatpush2.xpose.msra.mxu0 0.0
        %1508 = vmatprep.mubr.f32.mxu0 0.0
        %1509 = vmatmul.mubr.f32.gmra.mxu0 %v1439
        %v1510 = vpop.f32.mrf.mxu0
        %v1511 = vadd.f32 %v834, %v1510
        %v1512 = vpop.f32.mrf.mxu0
        %1513 = vdwg.mxu0
        %v1515 = vsel %vm1285, %v981, 0
        %v1518 = vsel %vm1285, %v1136, 0
        %1520 = vmatprep.subr.mxu0 0.0
        %1521 = vmatpush1.xpose.msra.mxu0 0.0
        %1522 = vmatprep.subr.mxu0 0.0
        %1523 = vmatpush1.xpose.msra.mxu0 0.0
        %1524 = vmatprep.subr.mxu0 0.0
        %1525 = vmatpush1.xpose.msra.mxu0 0.0
        %1526 = vmatprep.subr.mxu0 0.0
        %1527 = vmatpush1.xpose.msra.mxu0 0.0
        %1528 = vmatprep.subr.mxu0 0.0
        %1529 = vmatpush1.xpose.msra.mxu0 0.0
        %1530 = vmatprep.subr.mxu0 0.0
        %1531 = vmatpush1.xpose.msra.mxu0 0.0
        %1532 = vmatprep.subr.mxu0 0.0
        %1533 = vmatpush1.xpose.msra.mxu0 0.0
        %1534 = vmatprep.subr.mxu0 0.0
        %1535 = vmatpush1.xpose.msra.mxu0 0.0
        %1536 = vmatprep.subr.mxu0 0.0
        %1537 = vmatpush1.xpose.msra.mxu0 0.0
        %1538 = vmatprep.subr.mxu0 0.0
        %1539 = vmatpush1.xpose.msra.mxu0 0.0
        %1540 = vmatprep.subr.mxu0 0.0
        %1541 = vmatpush1.xpose.msra.mxu0 0.0
        %1542 = vmatprep.subr.mxu0 0.0
        %1543 = vmatpush1.xpose.msra.mxu0 0.0
        %1544 = vmatprep.subr.mxu0 0.0
        %1545 = vmatpush1.xpose.msra.mxu0 0.0
        %1546 = vmatprep.subr.mxu0 0.0
        %1547 = vmatpush1.xpose.msra.mxu0 0.0
        %1548 = vmatprep.subr.mxu0 0.0
        %1549 = vmatpush1.xpose.msra.mxu0 0.0
        %1550 = vmatprep.subr.mxu0 0.0
        %1551 = vmatpush1.xpose.msra.mxu0 %v1518
        %1552 = vmatprep.subr.mxu0 0.0
        %1553 = vmatpush2.xpose.msra.mxu0 0.0
        %1554 = vmatprep.subr.mxu0 0.0
        %1555 = vmatpush2.xpose.msra.mxu0 0.0
        %1556 = vmatprep.subr.mxu0 0.0
        %1557 = vmatpush2.xpose.msra.mxu0 0.0
        %1558 = vmatprep.subr.mxu0 0.0
        %1559 = vmatpush2.xpose.msra.mxu0 0.0
        %1560 = vmatprep.subr.mxu0 0.0
        %1561 = vmatpush2.xpose.msra.mxu0 0.0
        %1562 = vmatprep.subr.mxu0 0.0
        %1563 = vmatpush2.xpose.msra.mxu0 0.0
        %1564 = vmatprep.subr.mxu0 0.0
        %1565 = vmatpush2.xpose.msra.mxu0 0.0
        %1566 = vmatprep.subr.mxu0 0.0
        %1567 = vmatpush2.xpose.msra.mxu0 0.0
        %1568 = vmatprep.subr.mxu0 0.0
        %1569 = vmatpush2.xpose.msra.mxu0 0.0
        %1570 = vmatprep.subr.mxu0 0.0
        %1571 = vmatpush2.xpose.msra.mxu0 0.0
        %1572 = vmatprep.subr.mxu0 0.0
        %1573 = vmatpush2.xpose.msra.mxu0 0.0
        %1574 = vmatprep.subr.mxu0 0.0
        %1575 = vmatpush2.xpose.msra.mxu0 0.0
        %1576 = vmatprep.subr.mxu0 0.0
        %1577 = vmatpush2.xpose.msra.mxu0 0.0
        %1578 = vmatprep.subr.mxu0 0.0
        %1579 = vmatpush2.xpose.msra.mxu0 0.0
        %1580 = vmatprep.subr.mxu0 0.0
        %1581 = vmatpush2.xpose.msra.mxu0 0.0
        %1582 = vmatprep.subr.mxu0 0.0
        %1583 = vmatpush2.xpose.msra.mxu0 0.0
        %1584 = vmatprep.mubr.f32.mxu0 0.0
        %1585 = vmatmul.mubr.f32.gmra.mxu0 %v1515
        %v1586 = vpop.f32.mrf.mxu0
        %v1587 = vadd.f32 %v834, %v1586
        %v1588 = vpop.f32.mrf.mxu0
        %1589 = vdwg.mxu0
        %v1590 = vsel %vm1285, %v1359, -inf
        %1591 = vmax.xlane.f32.xlu0 %v1590
        %v1592 = vpop.xlane.xlu0 %1591
        %v1593 = vsel %vm1285, %v1435, -inf
        %1594 = vmax.xlane.f32.xlu0 %v1593
        %v1595 = vpop.xlane.xlu0 %1594
        %v1596 = vsel %vm1285, %v1511, -inf
        %1597 = vmax.xlane.f32.xlu0 %v1596
        %v1598 = vpop.xlane.xlu0 %1597
        %v1599 = vsel %vm1285, %v1587, -inf
        %1600 = vmax.xlane.f32.xlu0 %v1599
        %v1601 = vpop.xlane.xlu0 %1600
        %v1602 = vsub.f32 %v1359, %v1592
        %v1603 = vsub.f32 %v1435, %v1595
        %v1604 = vsub.f32 %v1511, %v1598
        %v1605 = vsub.f32 %v1587, %v1601
        %v1606 = vmul.f32 %v1602, 1.442695
        %v1607 = vpow.pop %v1606
        %v1608 = vmul.f32 %v1603, 1.442695
        %v1609 = vpow.pop %v1608
        %v1610 = vmul.f32 %v1604, 1.442695
        %v1611 = vpow.pop %v1610
        %v1612 = vmul.f32 %v1605, 1.442695
        %v1613 = vpow.pop %v1612
        %v1614 = vsel %vm1285, %v1607, 0.0
        %1615 = vadd.xlane.f32.xlu0 %v1614
        %v1616 = vpop.xlane.xlu0 %1615
        %v1617 = vsel %vm1285, %v1609, 0.0
        %1618 = vadd.xlane.f32.xlu0 %v1617
        %v1619 = vpop.xlane.xlu0 %1618
        %v1620 = vsel %vm1285, %v1611, 0.0
        %1621 = vadd.xlane.f32.xlu0 %v1620
        %v1622 = vpop.xlane.xlu0 %1621
        %v1623 = vsel %vm1285, %v1613, 0.0
        %1624 = vadd.xlane.f32.xlu0 %v1623
        %v1625 = vpop.xlane.xlu0 %1624
        %v1626 = vrcp.pop %v1616
        %v1627 = vrcp.pop %v1619
        %v1628 = vrcp.pop %v1622
        %v1629 = vrcp.pop %v1625
        %v1630 = vmul.f32 %v1607, %v1626
        %v1631 = vmul.f32 %v1609, %v1627
        %v1632 = vmul.f32 %v1611, %v1628
        %v1633 = vmul.f32 %v1613, %v1629
        %v1635 = vsel %vm1285, %v1630, 0
        %1637 = vmatprep.subr.mxu0 0.0
        %1638 = vmatpush1.msra.mxu0 0.0
        %1639 = vmatprep.subr.mxu0 0.0
        %1640 = vmatpush1.msra.mxu0 0.0
        %1641 = vmatprep.subr.mxu0 0.0
        %1642 = vmatpush1.msra.mxu0 0.0
        %1643 = vmatprep.subr.mxu0 0.0
        %1644 = vmatpush1.msra.mxu0 0.0
        %1645 = vmatprep.subr.mxu0 0.0
        %1646 = vmatpush1.msra.mxu0 0.0
        %1647 = vmatprep.subr.mxu0 0.0
        %1648 = vmatpush1.msra.mxu0 0.0
        %1649 = vmatprep.subr.mxu0 0.0
        %1650 = vmatpush1.msra.mxu0 0.0
        %1651 = vmatprep.subr.mxu0 0.0
        %1652 = vmatpush1.msra.mxu0 0.0
        %1653 = vmatprep.subr.mxu0 0.0
        %1654 = vmatpush1.msra.mxu0 0.0
        %1655 = vmatprep.subr.mxu0 0.0
        %1656 = vmatpush1.msra.mxu0 0.0
        %1657 = vmatprep.subr.mxu0 0.0
        %1658 = vmatpush1.msra.mxu0 0.0
        %1659 = vmatprep.subr.mxu0 0.0
        %1660 = vmatpush1.msra.mxu0 0.0
        %1661 = vmatprep.subr.mxu0 0.0
        %1662 = vmatpush1.msra.mxu0 0.0
        %1663 = vmatprep.subr.mxu0 0.0
        %1664 = vmatpush1.msra.mxu0 0.0
        %1665 = vmatprep.subr.mxu0 0.0
        %1666 = vmatpush1.msra.mxu0 0.0
        %1667 = vmatprep.subr.mxu0 0.0
        %1668 = vmatpush1.msra.mxu0 %v1281
        %1669 = vmatprep.subr.mxu0 0.0
        %1670 = vmatpush2.msra.mxu0 0.0
        %1671 = vmatprep.subr.mxu0 0.0
        %1672 = vmatpush2.msra.mxu0 0.0
        %1673 = vmatprep.subr.mxu0 0.0
        %1674 = vmatpush2.msra.mxu0 0.0
        %1675 = vmatprep.subr.mxu0 0.0
        %1676 = vmatpush2.msra.mxu0 0.0
        %1677 = vmatprep.subr.mxu0 0.0
        %1678 = vmatpush2.msra.mxu0 0.0
        %1679 = vmatprep.subr.mxu0 0.0
        %1680 = vmatpush2.msra.mxu0 0.0
        %1681 = vmatprep.subr.mxu0 0.0
        %1682 = vmatpush2.msra.mxu0 0.0
        %1683 = vmatprep.subr.mxu0 0.0
        %1684 = vmatpush2.msra.mxu0 0.0
        %1685 = vmatprep.subr.mxu0 0.0
        %1686 = vmatpush2.msra.mxu0 0.0
        %1687 = vmatprep.subr.mxu0 0.0
        %1688 = vmatpush2.msra.mxu0 0.0
        %1689 = vmatprep.subr.mxu0 0.0
        %1690 = vmatpush2.msra.mxu0 0.0
        %1691 = vmatprep.subr.mxu0 0.0
        %1692 = vmatpush2.msra.mxu0 0.0
        %1693 = vmatprep.subr.mxu0 0.0
        %1694 = vmatpush2.msra.mxu0 0.0
        %1695 = vmatprep.subr.mxu0 0.0
        %1696 = vmatpush2.msra.mxu0 0.0
        %1697 = vmatprep.subr.mxu0 0.0
        %1698 = vmatpush2.msra.mxu0 0.0
        %1699 = vmatprep.subr.mxu0 0.0
        %1700 = vmatpush2.msra.mxu0 0.0
        %1701 = vmatprep.mubr.f32.mxu0 0.0
        %1702 = vmatmul.mubr.f32.gmra.mxu0 %v1635
        %v1703 = vpop.f32.mrf.mxu0
        %v1704 = vadd.f32 0.0, %v1703
        %v1705 = vpop.f32.mrf.mxu0
        %1706 = vdwg.mxu0
        %v1708 = vsel %vm1285, %v1631, 0
        %1710 = vmatprep.subr.mxu0 0.0
        %1711 = vmatpush1.msra.mxu0 0.0
        %1712 = vmatprep.subr.mxu0 0.0
        %1713 = vmatpush1.msra.mxu0 0.0
        %1714 = vmatprep.subr.mxu0 0.0
        %1715 = vmatpush1.msra.mxu0 0.0
        %1716 = vmatprep.subr.mxu0 0.0
        %1717 = vmatpush1.msra.mxu0 0.0
        %1718 = vmatprep.subr.mxu0 0.0
        %1719 = vmatpush1.msra.mxu0 0.0
        %1720 = vmatprep.subr.mxu0 0.0
        %1721 = vmatpush1.msra.mxu0 0.0
        %1722 = vmatprep.subr.mxu0 0.0
        %1723 = vmatpush1.msra.mxu0 0.0
        %1724 = vmatprep.subr.mxu0 0.0
        %1725 = vmatpush1.msra.mxu0 0.0
        %1726 = vmatprep.subr.mxu0 0.0
        %1727 = vmatpush1.msra.mxu0 0.0
        %1728 = vmatprep.subr.mxu0 0.0
        %1729 = vmatpush1.msra.mxu0 0.0
        %1730 = vmatprep.subr.mxu0 0.0
        %1731 = vmatpush1.msra.mxu0 0.0
        %1732 = vmatprep.subr.mxu0 0.0
        %1733 = vmatpush1.msra.mxu0 0.0
        %1734 = vmatprep.subr.mxu0 0.0
        %1735 = vmatpush1.msra.mxu0 0.0
        %1736 = vmatprep.subr.mxu0 0.0
        %1737 = vmatpush1.msra.mxu0 0.0
        %1738 = vmatprep.subr.mxu0 0.0
        %1739 = vmatpush1.msra.mxu0 0.0
        %1740 = vmatprep.subr.mxu0 0.0
        %1741 = vmatpush1.msra.mxu0 %v1282
        %1742 = vmatprep.subr.mxu0 0.0
        %1743 = vmatpush2.msra.mxu0 0.0
        %1744 = vmatprep.subr.mxu0 0.0
        %1745 = vmatpush2.msra.mxu0 0.0
        %1746 = vmatprep.subr.mxu0 0.0
        %1747 = vmatpush2.msra.mxu0 0.0
        %1748 = vmatprep.subr.mxu0 0.0
        %1749 = vmatpush2.msra.mxu0 0.0
        %1750 = vmatprep.subr.mxu0 0.0
        %1751 = vmatpush2.msra.mxu0 0.0
        %1752 = vmatprep.subr.mxu0 0.0
        %1753 = vmatpush2.msra.mxu0 0.0
        %1754 = vmatprep.subr.mxu0 0.0
        %1755 = vmatpush2.msra.mxu0 0.0
        %1756 = vmatprep.subr.mxu0 0.0
        %1757 = vmatpush2.msra.mxu0 0.0
        %1758 = vmatprep.subr.mxu0 0.0
        %1759 = vmatpush2.msra.mxu0 0.0
        %1760 = vmatprep.subr.mxu0 0.0
        %1761 = vmatpush2.msra.mxu0 0.0
        %1762 = vmatprep.subr.mxu0 0.0
        %1763 = vmatpush2.msra.mxu0 0.0
        %1764 = vmatprep.subr.mxu0 0.0
        %1765 = vmatpush2.msra.mxu0 0.0
        %1766 = vmatprep.subr.mxu0 0.0
        %1767 = vmatpush2.msra.mxu0 0.0
        %1768 = vmatprep.subr.mxu0 0.0
        %1769 = vmatpush2.msra.mxu0 0.0
        %1770 = vmatprep.subr.mxu0 0.0
        %1771 = vmatpush2.msra.mxu0 0.0
        %1772 = vmatprep.subr.mxu0 0.0
        %1773 = vmatpush2.msra.mxu0 0.0
        %1774 = vmatprep.mubr.f32.mxu0 0.0
        %1775 = vmatmul.mubr.f32.gmra.mxu0 %v1708
        %v1776 = vpop.f32.mrf.mxu0
        %v1777 = vadd.f32 0.0, %v1776
        %v1778 = vpop.f32.mrf.mxu0
        %1779 = vdwg.mxu0
        %v1781 = vsel %vm1285, %v1632, 0
        %1783 = vmatprep.subr.mxu0 0.0
        %1784 = vmatpush1.msra.mxu0 0.0
        %1785 = vmatprep.subr.mxu0 0.0
        %1786 = vmatpush1.msra.mxu0 0.0
        %1787 = vmatprep.subr.mxu0 0.0
        %1788 = vmatpush1.msra.mxu0 0.0
        %1789 = vmatprep.subr.mxu0 0.0
        %1790 = vmatpush1.msra.mxu0 0.0
        %1791 = vmatprep.subr.mxu0 0.0
        %1792 = vmatpush1.msra.mxu0 0.0
        %1793 = vmatprep.subr.mxu0 0.0
        %1794 = vmatpush1.msra.mxu0 0.0
        %1795 = vmatprep.subr.mxu0 0.0
        %1796 = vmatpush1.msra.mxu0 0.0
        %1797 = vmatprep.subr.mxu0 0.0
        %1798 = vmatpush1.msra.mxu0 0.0
        %1799 = vmatprep.subr.mxu0 0.0
        %1800 = vmatpush1.msra.mxu0 0.0
        %1801 = vmatprep.subr.mxu0 0.0
        %1802 = vmatpush1.msra.mxu0 0.0
        %1803 = vmatprep.subr.mxu0 0.0
        %1804 = vmatpush1.msra.mxu0 0.0
        %1805 = vmatprep.subr.mxu0 0.0
        %1806 = vmatpush1.msra.mxu0 0.0
        %1807 = vmatprep.subr.mxu0 0.0
        %1808 = vmatpush1.msra.mxu0 0.0
        %1809 = vmatprep.subr.mxu0 0.0
        %1810 = vmatpush1.msra.mxu0 0.0
        %1811 = vmatprep.subr.mxu0 0.0
        %1812 = vmatpush1.msra.mxu0 0.0
        %1813 = vmatprep.subr.mxu0 0.0
        %1814 = vmatpush1.msra.mxu0 %v1283
        %1815 = vmatprep.subr.mxu0 0.0
        %1816 = vmatpush2.msra.mxu0 0.0
        %1817 = vmatprep.subr.mxu0 0.0
        %1818 = vmatpush2.msra.mxu0 0.0
        %1819 = vmatprep.subr.mxu0 0.0
        %1820 = vmatpush2.msra.mxu0 0.0
        %1821 = vmatprep.subr.mxu0 0.0
        %1822 = vmatpush2.msra.mxu0 0.0
        %1823 = vmatprep.subr.mxu0 0.0
        %1824 = vmatpush2.msra.mxu0 0.0
        %1825 = vmatprep.subr.mxu0 0.0
        %1826 = vmatpush2.msra.mxu0 0.0
        %1827 = vmatprep.subr.mxu0 0.0
        %1828 = vmatpush2.msra.mxu0 0.0
        %1829 = vmatprep.subr.mxu0 0.0
        %1830 = vmatpush2.msra.mxu0 0.0
        %1831 = vmatprep.subr.mxu0 0.0
        %1832 = vmatpush2.msra.mxu0 0.0
        %1833 = vmatprep.subr.mxu0 0.0
        %1834 = vmatpush2.msra.mxu0 0.0
        %1835 = vmatprep.subr.mxu0 0.0
        %1836 = vmatpush2.msra.mxu0 0.0
        %1837 = vmatprep.subr.mxu0 0.0
        %1838 = vmatpush2.msra.mxu0 0.0
        %1839 = vmatprep.subr.mxu0 0.0
        %1840 = vmatpush2.msra.mxu0 0.0
        %1841 = vmatprep.subr.mxu0 0.0
        %1842 = vmatpush2.msra.mxu0 0.0
        %1843 = vmatprep.subr.mxu0 0.0
        %1844 = vmatpush2.msra.mxu0 0.0
        %1845 = vmatprep.subr.mxu0 0.0
        %1846 = vmatpush2.msra.mxu0 0.0
        %1847 = vmatprep.mubr.f32.mxu0 0.0
        %1848 = vmatmul.mubr.f32.gmra.mxu0 %v1781
        %v1849 = vpop.f32.mrf.mxu0
        %v1850 = vadd.f32 0.0, %v1849
        %v1851 = vpop.f32.mrf.mxu0
        %1852 = vdwg.mxu0
        %v1854 = vsel %vm1285, %v1633, 0
        %1856 = vmatprep.subr.mxu0 0.0
        %1857 = vmatpush1.msra.mxu0 0.0
        %1858 = vmatprep.subr.mxu0 0.0
        %1859 = vmatpush1.msra.mxu0 0.0
        %1860 = vmatprep.subr.mxu0 0.0
        %1861 = vmatpush1.msra.mxu0 0.0
        %1862 = vmatprep.subr.mxu0 0.0
        %1863 = vmatpush1.msra.mxu0 0.0
        %1864 = vmatprep.subr.mxu0 0.0
        %1865 = vmatpush1.msra.mxu0 0.0
        %1866 = vmatprep.subr.mxu0 0.0
        %1867 = vmatpush1.msra.mxu0 0.0
        %1868 = vmatprep.subr.mxu0 0.0
        %1869 = vmatpush1.msra.mxu0 0.0
        %1870 = vmatprep.subr.mxu0 0.0
        %1871 = vmatpush1.msra.mxu0 0.0
        %1872 = vmatprep.subr.mxu0 0.0
        %1873 = vmatpush1.msra.mxu0 0.0
        %1874 = vmatprep.subr.mxu0 0.0
        %1875 = vmatpush1.msra.mxu0 0.0
        %1876 = vmatprep.subr.mxu0 0.0
        %1877 = vmatpush1.msra.mxu0 0.0
        %1878 = vmatprep.subr.mxu0 0.0
        %1879 = vmatpush1.msra.mxu0 0.0
        %1880 = vmatprep.subr.mxu0 0.0
        %1881 = vmatpush1.msra.mxu0 0.0
        %1882 = vmatprep.subr.mxu0 0.0
        %1883 = vmatpush1.msra.mxu0 0.0
        %1884 = vmatprep.subr.mxu0 0.0
        %1885 = vmatpush1.msra.mxu0 0.0
        %1886 = vmatprep.subr.mxu0 0.0
        %1887 = vmatpush1.msra.mxu0 %v1284
        %1888 = vmatprep.subr.mxu0 0.0
        %1889 = vmatpush2.msra.mxu0 0.0
        %1890 = vmatprep.subr.mxu0 0.0
        %1891 = vmatpush2.msra.mxu0 0.0
        %1892 = vmatprep.subr.mxu0 0.0
        %1893 = vmatpush2.msra.mxu0 0.0
        %1894 = vmatprep.subr.mxu0 0.0
        %1895 = vmatpush2.msra.mxu0 0.0
        %1896 = vmatprep.subr.mxu0 0.0
        %1897 = vmatpush2.msra.mxu0 0.0
        %1898 = vmatprep.subr.mxu0 0.0
        %1899 = vmatpush2.msra.mxu0 0.0
        %1900 = vmatprep.subr.mxu0 0.0
        %1901 = vmatpush2.msra.mxu0 0.0
        %1902 = vmatprep.subr.mxu0 0.0
        %1903 = vmatpush2.msra.mxu0 0.0
        %1904 = vmatprep.subr.mxu0 0.0
        %1905 = vmatpush2.msra.mxu0 0.0
        %1906 = vmatprep.subr.mxu0 0.0
        %1907 = vmatpush2.msra.mxu0 0.0
        %1908 = vmatprep.subr.mxu0 0.0
        %1909 = vmatpush2.msra.mxu0 0.0
        %1910 = vmatprep.subr.mxu0 0.0
        %1911 = vmatpush2.msra.mxu0 0.0
        %1912 = vmatprep.subr.mxu0 0.0
        %1913 = vmatpush2.msra.mxu0 0.0
        %1914 = vmatprep.subr.mxu0 0.0
        %1915 = vmatpush2.msra.mxu0 0.0
        %1916 = vmatprep.subr.mxu0 0.0
        %1917 = vmatpush2.msra.mxu0 0.0
        %1918 = vmatprep.subr.mxu0 0.0
        %1919 = vmatpush2.msra.mxu0 0.0
        %1920 = vmatprep.mubr.f32.mxu0 0.0
        %1921 = vmatmul.mubr.f32.gmra.mxu0 %v1854
        %v1922 = vpop.f32.mrf.mxu0
        %v1923 = vadd.f32 0.0, %v1922
        %v1924 = vpop.f32.mrf.mxu0
        %1925 = vdwg.mxu0
        %v1926 = vcombine.low %v1704, %v1850
        %v1927 = vcombine.high %v1704, %v1850
        %v1929 = vunpack.c.l.s4 1983009808
        %v1930 = vunpack.c.0.s8 %v1929
        %v1931 = vlaneseq
        %v1932 = vshrl.u32 %v1931, 7
        %v1933 = vsub.s32 %v1930, %v1932
        %v1934 = vrot.slane %v1926, %v1933
        %v1936 = vunpack.c.l.s4 1983009808
        %v1937 = vunpack.c.0.s8 %v1936
        %v1938 = vlaneseq
        %v1939 = vshrl.u32 %v1938, 7
        %v1940 = vsub.s32 %v1937, %v1939
        %v1941 = vrot.slane %v1927, %v1940
        %v1942 = vcombine.low %v1777, %v1923
        %v1943 = vcombine.high %v1777, %v1923
        %v1945 = vunpack.c.l.s4 1983009808
        %v1946 = vunpack.c.0.s8 %v1945
        %v1947 = vlaneseq
        %v1948 = vshrl.u32 %v1947, 7
        %v1949 = vsub.s32 %v1946, %v1948
        %v1950 = vrot.slane %v1942, %v1949
        %v1952 = vunpack.c.l.s4 1983009808
        %v1953 = vunpack.c.0.s8 %v1952
        %v1954 = vlaneseq
        %v1955 = vshrl.u32 %v1954, 7
        %v1956 = vsub.s32 %v1953, %v1955
        %v1957 = vrot.slane %v1943, %v1956
        %v1958 = vcombine.low %v1934, %v1950
        %v1959 = vcombine.high %v1934, %v1950
        %v1961 = vunpack.c.l.s4 1934713408
        %v1962 = vunpack.c.0.s8 %v1961
        %v1963 = vlaneseq
        %v1964 = vshrl.u32 %v1963, 7
        %v1965 = vsub.s32 %v1962, %v1964
        %v1966 = vrot.slane %v1958, %v1965
        %v1968 = vunpack.c.l.s4 1934713408
        %v1969 = vunpack.c.0.s8 %v1968
        %v1970 = vlaneseq
        %v1971 = vshrl.u32 %v1970, 7
        %v1972 = vsub.s32 %v1969, %v1971
        %v1973 = vrot.slane %v1959, %v1972
        %v1974 = vcombine.low %v1941, %v1957
        %v1975 = vcombine.high %v1941, %v1957
        %v1977 = vunpack.c.l.s4 1934713408
        %v1978 = vunpack.c.0.s8 %v1977
        %v1979 = vlaneseq
        %v1980 = vshrl.u32 %v1979, 7
        %v1981 = vsub.s32 %v1978, %v1980
        %v1982 = vrot.slane %v1974, %v1981
        %v1984 = vunpack.c.l.s4 1934713408
        %v1985 = vunpack.c.0.s8 %v1984
        %v1986 = vlaneseq
        %v1987 = vshrl.u32 %v1986, 7
        %v1988 = vsub.s32 %v1985, %v1987
        %v1989 = vrot.slane %v1975, %v1988
        %v1990 = vcombine.high %v1966, 0.0
        %v1991 = vcombine.high %v1973, 0.0
        %v1992 = vcombine.high %v1982, 0.0
        %v1993 = vcombine.high %v1989, 0.0
        %v1994 = vcombine.low %v1966, %v1973
        %v1996 = vunpack.c.l.s4 1983009808
        %v1997 = vunpack.c.0.s8 %v1996
        %v1998 = vlaneseq
        %v1999 = vshrl.u32 %v1998, 7
        %v2000 = vsub.s32 %v1997, %v1999
        %v2001 = vrot.slane %v1994, %v2000
        %v2002 = vcombine.low %v1990, %v1991
        %v2004 = vunpack.c.l.s4 1983009808
        %v2005 = vunpack.c.0.s8 %v2004
        %v2006 = vlaneseq
        %v2007 = vshrl.u32 %v2006, 7
        %v2008 = vsub.s32 %v2005, %v2007
        %v2009 = vrot.slane %v2002, %v2008
        %v2010 = vcombine.low %v1982, %v1989
        %v2012 = vunpack.c.l.s4 1983009808
        %v2013 = vunpack.c.0.s8 %v2012
        %v2014 = vlaneseq
        %v2015 = vshrl.u32 %v2014, 7
        %v2016 = vsub.s32 %v2013, %v2015
        %v2017 = vrot.slane %v2010, %v2016
        %v2018 = vcombine.low %v1992, %v1993
        %v2020 = vunpack.c.l.s4 1983009808
        %v2021 = vunpack.c.0.s8 %v2020
        %v2022 = vlaneseq
        %v2023 = vshrl.u32 %v2022, 7
        %v2024 = vsub.s32 %v2021, %v2023
        %v2025 = vrot.slane %v2018, %v2024
        %v2026 = vcombine.low %v2001, %v2009
        %v2027 = vcombine.high %v2001, %v2009
        %v2029 = vunpack.c.l.s4 1934713408
        %v2030 = vunpack.c.0.s8 %v2029
        %v2031 = vlaneseq
        %v2032 = vshrl.u32 %v2031, 7
        %v2033 = vsub.s32 %v2030, %v2032
        %v2034 = vrot.slane %v2026, %v2033
        %v2036 = vunpack.c.l.s4 1934713408
        %v2037 = vunpack.c.0.s8 %v2036
        %v2038 = vlaneseq
        %v2039 = vshrl.u32 %v2038, 7
        %v2040 = vsub.s32 %v2037, %v2039
        %v2041 = vrot.slane %v2027, %v2040
        %v2042 = vcombine.low %v2017, %v2025
        %v2043 = vcombine.high %v2017, %v2025
        %v2045 = vunpack.c.l.s4 1934713408
        %v2046 = vunpack.c.0.s8 %v2045
        %v2047 = vlaneseq
        %v2048 = vshrl.u32 %v2047, 7
        %v2049 = vsub.s32 %v2046, %v2048
        %v2050 = vrot.slane %v2042, %v2049
        %v2052 = vunpack.c.l.s4 1934713408
        %v2053 = vunpack.c.0.s8 %v2052
        %v2054 = vlaneseq
        %v2055 = vshrl.u32 %v2054, 7
        %v2056 = vsub.s32 %v2053, %v2055
        %v2057 = vrot.slane %v2043, %v2056
        %v2058 = vcombine.low %v2034, %v2050
        %v2059 = vcombine.high %v2034, %v2050
        %v2060 = vcombine.low %v2041, %v2057
        %v2061 = vcombine.high %v2041, %v2057
        %2063 = vrot.lane.b32.xlu0 %v2059, 8
        %v2064 = vpop.permute.xlu0 %2063
        %2067 = vrot.lane.b32.xlu0 %v2060, 16
        %v2068 = vpop.permute.xlu0 %2067
        %2071 = vrot.lane.b32.xlu0 %v2061, 24
        %v2072 = vpop.permute.xlu0 %2071
        %v2074 = vsel %vm1285, %v2058, %v2064
        %vm2075 = vcmask 130048
        %v2076 = vsel %vm2075, %v2074, %v2068
        %vm2077 = vcmask 195584
        %v2078 = vsel %vm2077, %v2076, %v2072
        %v2079 = vld [vmem:[%s7] sm:$0xff]
        %v2080 = vld [vmem:[%s7 + $0x8] sm:$0xff]
        %v2081 = vld [vmem:[%s7 + $0x10] sm:$0xff]
        %v2082 = vld [vmem:[%s7 + $0x18] sm:$0xff]
        %v2083 = vld [vmem:[%s8] sm:$0x1]
        %v2085 = vlaneseq
        %v2086 = vshrl.u32 %v2085, 7
        %v2087 = vsub.s32 0, %v2086
        %v2088 = vrot.slane %v2083, %v2087
        %v2091 = vsel %vm760, %v2078, 0
        %2093 = vmatprep.subr.mxu0 0.0
        %2094 = vmatpush1.msra.mxu0 0.0
        %2095 = vmatprep.subr.mxu0 0.0
        %2096 = vmatpush1.msra.mxu0 0.0
        %2097 = vmatprep.subr.mxu0 0.0
        %2098 = vmatpush1.msra.mxu0 0.0
        %2099 = vmatprep.subr.mxu0 0.0
        %2100 = vmatpush1.msra.mxu0 0.0
        %2101 = vmatprep.subr.mxu0 0.0
        %2102 = vmatpush1.msra.mxu0 0.0
        %2103 = vmatprep.subr.mxu0 0.0
        %2104 = vmatpush1.msra.mxu0 0.0
        %2105 = vmatprep.subr.mxu0 0.0
        %2106 = vmatpush1.msra.mxu0 0.0
        %2107 = vmatprep.subr.mxu0 0.0
        %2108 = vmatpush1.msra.mxu0 0.0
        %2109 = vmatprep.subr.mxu0 0.0
        %2110 = vmatpush1.msra.mxu0 0.0
        %2111 = vmatprep.subr.mxu0 0.0
        %2112 = vmatpush1.msra.mxu0 0.0
        %2113 = vmatprep.subr.mxu0 0.0
        %2114 = vmatpush1.msra.mxu0 0.0
        %2115 = vmatprep.subr.mxu0 0.0
        %2116 = vmatpush1.msra.mxu0 0.0
        %2117 = vmatprep.subr.mxu0 0.0
        %2118 = vmatpush1.msra.mxu0 %v2082
        %2119 = vmatprep.subr.mxu0 0.0
        %2120 = vmatpush1.msra.mxu0 %v2081
        %2121 = vmatprep.subr.mxu0 0.0
        %2122 = vmatpush1.msra.mxu0 %v2080
        %2123 = vmatprep.subr.mxu0 0.0
        %2124 = vmatpush1.msra.mxu0 %v2079
        %2125 = vmatprep.subr.mxu0 0.0
        %2126 = vmatpush2.msra.mxu0 0.0
        %2127 = vmatprep.subr.mxu0 0.0
        %2128 = vmatpush2.msra.mxu0 0.0
        %2129 = vmatprep.subr.mxu0 0.0
        %2130 = vmatpush2.msra.mxu0 0.0
        %2131 = vmatprep.subr.mxu0 0.0
        %2132 = vmatpush2.msra.mxu0 0.0
        %2133 = vmatprep.subr.mxu0 0.0
        %2134 = vmatpush2.msra.mxu0 0.0
        %2135 = vmatprep.subr.mxu0 0.0
        %2136 = vmatpush2.msra.mxu0 0.0
        %2137 = vmatprep.subr.mxu0 0.0
        %2138 = vmatpush2.msra.mxu0 0.0
        %2139 = vmatprep.subr.mxu0 0.0
        %2140 = vmatpush2.msra.mxu0 0.0
        %2141 = vmatprep.subr.mxu0 0.0
        %2142 = vmatpush2.msra.mxu0 0.0
        %2143 = vmatprep.subr.mxu0 0.0
        %2144 = vmatpush2.msra.mxu0 0.0
        %2145 = vmatprep.subr.mxu0 0.0
        %2146 = vmatpush2.msra.mxu0 0.0
        %2147 = vmatprep.subr.mxu0 0.0
        %2148 = vmatpush2.msra.mxu0 0.0
        %2149 = vmatprep.subr.mxu0 0.0
        %2150 = vmatpush2.msra.mxu0 0.0
        %2151 = vmatprep.subr.mxu0 0.0
        %2152 = vmatpush2.msra.mxu0 0.0
        %2153 = vmatprep.subr.mxu0 0.0
        %2154 = vmatpush2.msra.mxu0 0.0
        %2155 = vmatprep.subr.mxu0 0.0
        %2156 = vmatpush2.msra.mxu0 0.0
        %2157 = vmatprep.mubr.f32.mxu0 0.0
        %2158 = vmatmul.mubr.f32.gmra.mxu0 %v2091
        %v2159 = vpop.f32.mrf.mxu0
        %v2160 = vadd.f32 %v2088, %v2159
        %v2161 = vpop.f32.mrf.mxu0
        %2162 = vdwg.mxu0
        %v2163 = vadd.f32 %v744, %v2160
        %v2164 = vld [vmem:[%s9] sm:$0xff]
        %v2165 = vld [vmem:[%s9 + $0x8] sm:$0xff]
        %v2166 = vld [vmem:[%s9 + $0x10] sm:$0xff]
        %v2167 = vld [vmem:[%s9 + $0x18] sm:$0xff]
        %v2168 = vld [vmem:[%s10] sm:$0x1]
        %v2170 = vlaneseq
        %v2171 = vshrl.u32 %v2170, 7
        %v2172 = vsub.s32 0, %v2171
        %v2173 = vrot.slane %v2168, %v2172
        %v2176 = vsel %vm760, %v2163, 0
        %2178 = vmatprep.subr.mxu0 0.0
        %2179 = vmatpush1.msra.mxu0 0.0
        %2180 = vmatprep.subr.mxu0 0.0
        %2181 = vmatpush1.msra.mxu0 0.0
        %2182 = vmatprep.subr.mxu0 0.0
        %2183 = vmatpush1.msra.mxu0 0.0
        %2184 = vmatprep.subr.mxu0 0.0
        %2185 = vmatpush1.msra.mxu0 0.0
        %2186 = vmatprep.subr.mxu0 0.0
        %2187 = vmatpush1.msra.mxu0 0.0
        %2188 = vmatprep.subr.mxu0 0.0
        %2189 = vmatpush1.msra.mxu0 0.0
        %2190 = vmatprep.subr.mxu0 0.0
        %2191 = vmatpush1.msra.mxu0 0.0
        %2192 = vmatprep.subr.mxu0 0.0
        %2193 = vmatpush1.msra.mxu0 0.0
        %2194 = vmatprep.subr.mxu0 0.0
        %2195 = vmatpush1.msra.mxu0 0.0
        %2196 = vmatprep.subr.mxu0 0.0
        %2197 = vmatpush1.msra.mxu0 0.0
        %2198 = vmatprep.subr.mxu0 0.0
        %2199 = vmatpush1.msra.mxu0 0.0
        %2200 = vmatprep.subr.mxu0 0.0
        %2201 = vmatpush1.msra.mxu0 0.0
        %2202 = vmatprep.subr.mxu0 0.0
        %2203 = vmatpush1.msra.mxu0 %v2167
        %2204 = vmatprep.subr.mxu0 0.0
        %2205 = vmatpush1.msra.mxu0 %v2166
        %2206 = vmatprep.subr.mxu0 0.0
        %2207 = vmatpush1.msra.mxu0 %v2165
        %2208 = vmatprep.subr.mxu0 0.0
        %2209 = vmatpush1.msra.mxu0 %v2164
        %2210 = vmatprep.subr.mxu0 0.0
        %2211 = vmatpush2.msra.mxu0 0.0
        %2212 = vmatprep.subr.mxu0 0.0
        %2213 = vmatpush2.msra.mxu0 0.0
        %2214 = vmatprep.subr.mxu0 0.0
        %2215 = vmatpush2.msra.mxu0 0.0
        %2216 = vmatprep.subr.mxu0 0.0
        %2217 = vmatpush2.msra.mxu0 0.0
        %2218 = vmatprep.subr.mxu0 0.0
        %2219 = vmatpush2.msra.mxu0 0.0
        %2220 = vmatprep.subr.mxu0 0.0
        %2221 = vmatpush2.msra.mxu0 0.0
        %2222 = vmatprep.subr.mxu0 0.0
        %2223 = vmatpush2.msra.mxu0 0.0
        %2224 = vmatprep.subr.mxu0 0.0
        %2225 = vmatpush2.msra.mxu0 0.0
        %2226 = vmatprep.subr.mxu0 0.0
        %2227 = vmatpush2.msra.mxu0 0.0
        %2228 = vmatprep.subr.mxu0 0.0
        %2229 = vmatpush2.msra.mxu0 0.0
        %2230 = vmatprep.subr.mxu0 0.0
        %2231 = vmatpush2.msra.mxu0 0.0
        %2232 = vmatprep.subr.mxu0 0.0
        %2233 = vmatpush2.msra.mxu0 0.0
        %2234 = vmatprep.subr.mxu0 0.0
        %2235 = vmatpush2.msra.mxu0 0.0
        %2236 = vmatprep.subr.mxu0 0.0
        %2237 = vmatpush2.msra.mxu0 0.0
        %2238 = vmatprep.subr.mxu0 0.0
        %2239 = vmatpush2.msra.mxu0 0.0
        %2240 = vmatprep.subr.mxu0 0.0
        %2241 = vmatpush2.msra.mxu0 0.0
        %2242 = vmatprep.mubr.f32.mxu0 0.0
        %2243 = vmatmul.mubr.f32.gmra.mxu0 %v2176
        %v2244 = vpop.f32.mrf.mxu0
        %v2245 = vadd.f32 %v2173, %v2244
        %v2246 = vpop.f32.mrf.mxu0
        %2247 = vdwg.mxu0
        %v2248 = vld [vmem:[%s11] sm:$0xff]
        %v2249 = vld [vmem:[%s11 + $0x8] sm:$0xff]
        %v2250 = vld [vmem:[%s11 + $0x10] sm:$0xff]
        %v2251 = vld [vmem:[%s11 + $0x18] sm:$0xff]
        %v2252 = vld [vmem:[%s11 + $0x20] sm:$0xff]
        %v2253 = vld [vmem:[%s11 + $0x28] sm:$0xff]
        %v2254 = vld [vmem:[%s12] sm:$0x1]
        %v2256 = vlaneseq
        %v2257 = vshrl.u32 %v2256, 7
        %v2258 = vsub.s32 0, %v2257
        %v2259 = vrot.slane %v2254, %v2258
        %vm2261 = vcmask 392192
        %v2263 = vsel %vm2261, %v745, 0
        %v2266 = vsel %vm2261, %v746, 0
        %2268 = vmatprep.subr.mxu0 0.0
        %2269 = vmatpush1.msra.mxu0 0.0
        %2270 = vmatprep.subr.mxu0 0.0
        %2271 = vmatpush1.msra.mxu0 0.0
        %2272 = vmatprep.subr.mxu0 0.0
        %2273 = vmatpush1.msra.mxu0 0.0
        %2274 = vmatprep.subr.mxu0 0.0
        %2275 = vmatpush1.msra.mxu0 0.0
        %2276 = vmatprep.subr.mxu0 0.0
        %2277 = vmatpush1.msra.mxu0 0.0
        %2278 = vmatprep.subr.mxu0 0.0
        %2279 = vmatpush1.msra.mxu0 0.0
        %2280 = vmatprep.subr.mxu0 0.0
        %2281 = vmatpush1.msra.mxu0 0.0
        %2282 = vmatprep.subr.mxu0 0.0
        %2283 = vmatpush1.msra.mxu0 0.0
        %2284 = vmatprep.subr.mxu0 0.0
        %2285 = vmatpush1.msra.mxu0 0.0
        %2286 = vmatprep.subr.mxu0 0.0
        %2287 = vmatpush1.msra.mxu0 0.0
        %2288 = vmatprep.subr.mxu0 0.0
        %2289 = vmatpush1.msra.mxu0 %v2253
        %2290 = vmatprep.subr.mxu0 0.0
        %2291 = vmatpush1.msra.mxu0 %v2252
        %2292 = vmatprep.subr.mxu0 0.0
        %2293 = vmatpush1.msra.mxu0 %v2251
        %2294 = vmatprep.subr.mxu0 0.0
        %2295 = vmatpush1.msra.mxu0 %v2250
        %2296 = vmatprep.subr.mxu0 0.0
        %2297 = vmatpush1.msra.mxu0 %v2249
        %2298 = vmatprep.subr.mxu0 0.0
        %2299 = vmatpush1.msra.mxu0 %v2248
        %2300 = vmatprep.subr.mxu0 0.0
        %2301 = vmatpush2.msra.mxu0 0.0
        %2302 = vmatprep.subr.mxu0 0.0
        %2303 = vmatpush2.msra.mxu0 0.0
        %2304 = vmatprep.subr.mxu0 0.0
        %2305 = vmatpush2.msra.mxu0 0.0
        %2306 = vmatprep.subr.mxu0 0.0
        %2307 = vmatpush2.msra.mxu0 0.0
        %2308 = vmatprep.subr.mxu0 0.0
        %2309 = vmatpush2.msra.mxu0 0.0
        %2310 = vmatprep.subr.mxu0 0.0
        %2311 = vmatpush2.msra.mxu0 0.0
        %2312 = vmatprep.subr.mxu0 0.0
        %2313 = vmatpush2.msra.mxu0 0.0
        %2314 = vmatprep.subr.mxu0 0.0
        %2315 = vmatpush2.msra.mxu0 0.0
        %2316 = vmatprep.subr.mxu0 0.0
        %2317 = vmatpush2.msra.mxu0 0.0
        %2318 = vmatprep.subr.mxu0 0.0
        %2319 = vmatpush2.msra.mxu0 0.0
        %2320 = vmatprep.subr.mxu0 0.0
        %2321 = vmatpush2.msra.mxu0 0.0
        %2322 = vmatprep.subr.mxu0 0.0
        %2323 = vmatpush2.msra.mxu0 0.0
        %2324 = vmatprep.subr.mxu0 0.0
        %2325 = vmatpush2.msra.mxu0 0.0
        %2326 = vmatprep.subr.mxu0 0.0
        %2327 = vmatpush2.msra.mxu0 0.0
        %2328 = vmatprep.subr.mxu0 0.0
        %2329 = vmatpush2.msra.mxu0 0.0
        %2330 = vmatprep.subr.mxu0 0.0
        %2331 = vmatpush2.msra.mxu0 0.0
        %2332 = vmatprep.mubr.f32.mxu0 0.0
        %2333 = vmatmul.mubr.f32.gmra.mxu0 %v2263
        %v2334 = vpop.f32.mrf.mxu0
        %v2335 = vadd.f32 %v2259, %v2334
        %v2336 = vpop.f32.mrf.mxu0
        %2337 = vmatprep.mubr.f32.mxu0 0.0
        %2338 = vmatmul.mubr.f32.gmra.mxu0 %v2266
        %v2339 = vpop.f32.mrf.mxu0
        %v2340 = vadd.f32 %v2259, %v2339
        %v2341 = vpop.f32.mrf.mxu0
        %2342 = vdwg.mxu0
        %v2343 = vld [vmem:[%s13] sm:$0xff]
        %v2344 = vld [vmem:[%s13 + $0x8] sm:$0xff]
        %v2345 = vld [vmem:[%s13 + $0x10] sm:$0xff]
        %v2346 = vld [vmem:[%s13 + $0x18] sm:$0xff]
        %v2347 = vld [vmem:[%s13 + $0x20] sm:$0xff]
        %v2348 = vld [vmem:[%s14] sm:$0x1]
        %v2350 = vlaneseq
        %v2351 = vshrl.u32 %v2350, 7
        %v2352 = vsub.s32 0, %v2351
        %v2353 = vrot.slane %v2348, %v2352
        %vm2355 = vcmask 326656
        %v2357 = vsel %vm2355, %v747, 0
        %v2360 = vsel %vm2355, %v748, 0
        %2362 = vmatprep.subr.mxu0 0.0
        %2363 = vmatpush1.msra.mxu0 0.0
        %2364 = vmatprep.subr.mxu0 0.0
        %2365 = vmatpush1.msra.mxu0 0.0
        %2366 = vmatprep.subr.mxu0 0.0
        %2367 = vmatpush1.msra.mxu0 0.0
        %2368 = vmatprep.subr.mxu0 0.0
        %2369 = vmatpush1.msra.mxu0 0.0
        %2370 = vmatprep.subr.mxu0 0.0
        %2371 = vmatpush1.msra.mxu0 0.0
        %2372 = vmatprep.subr.mxu0 0.0
        %2373 = vmatpush1.msra.mxu0 0.0
        %2374 = vmatprep.subr.mxu0 0.0
        %2375 = vmatpush1.msra.mxu0 0.0
        %2376 = vmatprep.subr.mxu0 0.0
        %2377 = vmatpush1.msra.mxu0 0.0
        %2378 = vmatprep.subr.mxu0 0.0
        %2379 = vmatpush1.msra.mxu0 0.0
        %2380 = vmatprep.subr.mxu0 0.0
        %2381 = vmatpush1.msra.mxu0 0.0
        %2382 = vmatprep.subr.mxu0 0.0
        %2383 = vmatpush1.msra.mxu0 0.0
        %2384 = vmatprep.subr.mxu0 0.0
        %2385 = vmatpush1.msra.mxu0 %v2347
        %2386 = vmatprep.subr.mxu0 0.0
        %2387 = vmatpush1.msra.mxu0 %v2346
        %2388 = vmatprep.subr.mxu0 0.0
        %2389 = vmatpush1.msra.mxu0 %v2345
        %2390 = vmatprep.subr.mxu0 0.0
        %2391 = vmatpush1.msra.mxu0 %v2344
        %2392 = vmatprep.subr.mxu0 0.0
        %2393 = vmatpush1.msra.mxu0 %v2343
        %2394 = vmatprep.subr.mxu0 0.0
        %2395 = vmatpush2.msra.mxu0 0.0
        %2396 = vmatprep.subr.mxu0 0.0
        %2397 = vmatpush2.msra.mxu0 0.0
        %2398 = vmatprep.subr.mxu0 0.0
        %2399 = vmatpush2.msra.mxu0 0.0
        %2400 = vmatprep.subr.mxu0 0.0
        %2401 = vmatpush2.msra.mxu0 0.0
        %2402 = vmatprep.subr.mxu0 0.0
        %2403 = vmatpush2.msra.mxu0 0.0
        %2404 = vmatprep.subr.mxu0 0.0
        %2405 = vmatpush2.msra.mxu0 0.0
        %2406 = vmatprep.subr.mxu0 0.0
        %2407 = vmatpush2.msra.mxu0 0.0
        %2408 = vmatprep.subr.mxu0 0.0
        %2409 = vmatpush2.msra.mxu0 0.0
        %2410 = vmatprep.subr.mxu0 0.0
        %2411 = vmatpush2.msra.mxu0 0.0
        %2412 = vmatprep.subr.mxu0 0.0
        %2413 = vmatpush2.msra.mxu0 0.0
        %2414 = vmatprep.subr.mxu0 0.0
        %2415 = vmatpush2.msra.mxu0 0.0
        %2416 = vmatprep.subr.mxu0 0.0
        %2417 = vmatpush2.msra.mxu0 0.0
        %2418 = vmatprep.subr.mxu0 0.0
        %2419 = vmatpush2.msra.mxu0 0.0
        %2420 = vmatprep.subr.mxu0 0.0
        %2421 = vmatpush2.msra.mxu0 0.0
        %2422 = vmatprep.subr.mxu0 0.0
        %2423 = vmatpush2.msra.mxu0 0.0
        %2424 = vmatprep.subr.mxu0 0.0
        %2425 = vmatpush2.msra.mxu0 0.0
        %2426 = vmatprep.mubr.f32.mxu0 0.0
        %2427 = vmatmul.mubr.f32.gmra.mxu0 %v2357
        %v2428 = vpop.f32.mrf.mxu0
        %v2429 = vadd.f32 %v2353, %v2428
        %v2430 = vpop.f32.mrf.mxu0
        %2431 = vmatprep.mubr.f32.mxu0 0.0
        %2432 = vmatmul.mubr.f32.gmra.mxu0 %v2360
        %v2433 = vpop.f32.mrf.mxu0
        %v2434 = vadd.f32 %v2353, %v2433
        %v2435 = vpop.f32.mrf.mxu0
        %2436 = vdwg.mxu0
        %v2437 = vmul.f32 %v2245, 0.35355338
        %2439 = vrot.lane.b32.xlu0 %v2437, 120
        %v2440 = vpop.permute.xlu0 %2439
        %2442 = vrot.lane.b32.xlu0 %v2437, 112
        %v2443 = vpop.permute.xlu0 %2442
        %2445 = vrot.lane.b32.xlu0 %v2437, 104
        %v2446 = vpop.permute.xlu0 %2445
        %v2448 = vcombine.low %v2437, %v2443
        %v2449 = vcombine.high %v2437, %v2443
        %v2451 = vunpack.c.l.s4 1983009808
        %v2452 = vunpack.c.0.s8 %v2451
        %v2453 = vlaneseq
        %v2454 = vshrl.u32 %v2453, 7
        %v2455 = vsub.s32 %v2452, %v2454
        %v2456 = vrot.slane %v2448, %v2455
        %v2458 = vunpack.c.l.s4 1983009808
        %v2459 = vunpack.c.0.s8 %v2458
        %v2460 = vlaneseq
        %v2461 = vshrl.u32 %v2460, 7
        %v2462 = vsub.s32 %v2459, %v2461
        %v2463 = vrot.slane %v2449, %v2462
        %v2464 = vcombine.low %v2440, %v2446
        %v2465 = vcombine.high %v2440, %v2446
        %v2467 = vunpack.c.l.s4 1983009808
        %v2468 = vunpack.c.0.s8 %v2467
        %v2469 = vlaneseq
        %v2470 = vshrl.u32 %v2469, 7
        %v2471 = vsub.s32 %v2468, %v2470
        %v2472 = vrot.slane %v2464, %v2471
        %v2474 = vunpack.c.l.s4 1983009808
        %v2475 = vunpack.c.0.s8 %v2474
        %v2476 = vlaneseq
        %v2477 = vshrl.u32 %v2476, 7
        %v2478 = vsub.s32 %v2475, %v2477
        %v2479 = vrot.slane %v2465, %v2478
        %v2480 = vcombine.low %v2456, %v2472
        %v2481 = vcombine.high %v2456, %v2472
        %v2483 = vunpack.c.l.s4 1934713408
        %v2484 = vunpack.c.0.s8 %v2483
        %v2485 = vlaneseq
        %v2486 = vshrl.u32 %v2485, 7
        %v2487 = vsub.s32 %v2484, %v2486
        %v2488 = vrot.slane %v2480, %v2487
        %v2490 = vunpack.c.l.s4 1934713408
        %v2491 = vunpack.c.0.s8 %v2490
        %v2492 = vlaneseq
        %v2493 = vshrl.u32 %v2492, 7
        %v2494 = vsub.s32 %v2491, %v2493
        %v2495 = vrot.slane %v2481, %v2494
        %v2496 = vcombine.low %v2463, %v2479
        %v2497 = vcombine.high %v2463, %v2479
        %v2499 = vunpack.c.l.s4 1934713408
        %v2500 = vunpack.c.0.s8 %v2499
        %v2501 = vlaneseq
        %v2502 = vshrl.u32 %v2501, 7
        %v2503 = vsub.s32 %v2500, %v2502
        %v2504 = vrot.slane %v2496, %v2503
        %v2506 = vunpack.c.l.s4 1934713408
        %v2507 = vunpack.c.0.s8 %v2506
        %v2508 = vlaneseq
        %v2509 = vshrl.u32 %v2508, 7
        %v2510 = vsub.s32 %v2507, %v2509
        %v2511 = vrot.slane %v2497, %v2510
        %v2512 = vcombine.high %v2488, 0.0
        %v2513 = vcombine.high %v2495, 0.0
        %v2514 = vcombine.high %v2504, 0.0
        %v2515 = vcombine.high %v2511, 0.0
        %v2516 = vcombine.low %v2488, %v2495
        %v2518 = vunpack.c.l.s4 1983009808
        %v2519 = vunpack.c.0.s8 %v2518
        %v2520 = vlaneseq
        %v2521 = vshrl.u32 %v2520, 7
        %v2522 = vsub.s32 %v2519, %v2521
        %v2523 = vrot.slane %v2516, %v2522
        %v2524 = vcombine.low %v2512, %v2513
        %v2526 = vunpack.c.l.s4 1983009808
        %v2527 = vunpack.c.0.s8 %v2526
        %v2528 = vlaneseq
        %v2529 = vshrl.u32 %v2528, 7
        %v2530 = vsub.s32 %v2527, %v2529
        %v2531 = vrot.slane %v2524, %v2530
        %v2532 = vcombine.low %v2504, %v2511
        %v2534 = vunpack.c.l.s4 1983009808
        %v2535 = vunpack.c.0.s8 %v2534
        %v2536 = vlaneseq
        %v2537 = vshrl.u32 %v2536, 7
        %v2538 = vsub.s32 %v2535, %v2537
        %v2539 = vrot.slane %v2532, %v2538
        %v2540 = vcombine.low %v2514, %v2515
        %v2542 = vunpack.c.l.s4 1983009808
        %v2543 = vunpack.c.0.s8 %v2542
        %v2544 = vlaneseq
        %v2545 = vshrl.u32 %v2544, 7
        %v2546 = vsub.s32 %v2543, %v2545
        %v2547 = vrot.slane %v2540, %v2546
        %v2548 = vcombine.low %v2523, %v2531
        %v2549 = vcombine.high %v2523, %v2531
        %v2551 = vunpack.c.l.s4 1934713408
        %v2552 = vunpack.c.0.s8 %v2551
        %v2553 = vlaneseq
        %v2554 = vshrl.u32 %v2553, 7
        %v2555 = vsub.s32 %v2552, %v2554
        %v2556 = vrot.slane %v2548, %v2555
        %v2558 = vunpack.c.l.s4 1934713408
        %v2559 = vunpack.c.0.s8 %v2558
        %v2560 = vlaneseq
        %v2561 = vshrl.u32 %v2560, 7
        %v2562 = vsub.s32 %v2559, %v2561
        %v2563 = vrot.slane %v2549, %v2562
        %v2564 = vcombine.low %v2539, %v2547
        %v2565 = vcombine.high %v2539, %v2547
        %v2567 = vunpack.c.l.s4 1934713408
        %v2568 = vunpack.c.0.s8 %v2567
        %v2569 = vlaneseq
        %v2570 = vshrl.u32 %v2569, 7
        %v2571 = vsub.s32 %v2568, %v2570
        %v2572 = vrot.slane %v2564, %v2571
        %v2574 = vunpack.c.l.s4 1934713408
        %v2575 = vunpack.c.0.s8 %v2574
        %v2576 = vlaneseq
        %v2577 = vshrl.u32 %v2576, 7
        %v2578 = vsub.s32 %v2575, %v2577
        %v2579 = vrot.slane %v2565, %v2578
        %v2580 = vcombine.low %v2556, %v2572
        %v2581 = vcombine.high %v2556, %v2572
        %v2582 = vcombine.low %v2563, %v2579
        %v2583 = vcombine.high %v2563, %v2579
        %2586 = vrot.lane.b32.xlu0 %v2335, 120
        %v2587 = vpop.permute.xlu0 %2586
        %2588 = vrot.lane.b32.xlu0 %v2340, 120
        %v2589 = vpop.permute.xlu0 %2588
        %2592 = vrot.lane.b32.xlu0 %v2335, 112
        %v2593 = vpop.permute.xlu0 %2592
        %2594 = vrot.lane.b32.xlu0 %v2340, 112
        %v2595 = vpop.permute.xlu0 %2594
        %2598 = vrot.lane.b32.xlu0 %v2335, 104
        %v2599 = vpop.permute.xlu0 %2598
        %2600 = vrot.lane.b32.xlu0 %v2340, 104
        %v2601 = vpop.permute.xlu0 %2600
        %v2604 = vcombine.low %v2335, %v2593
        %v2605 = vcombine.high %v2335, %v2593
        %v2607 = vunpack.c.l.s4 1983009808
        %v2608 = vunpack.c.0.s8 %v2607
        %v2609 = vlaneseq
        %v2610 = vshrl.u32 %v2609, 7
        %v2611 = vsub.s32 %v2608, %v2610
        %v2612 = vrot.slane %v2604, %v2611
        %v2614 = vunpack.c.l.s4 1983009808
        %v2615 = vunpack.c.0.s8 %v2614
        %v2616 = vlaneseq
        %v2617 = vshrl.u32 %v2616, 7
        %v2618 = vsub.s32 %v2615, %v2617
        %v2619 = vrot.slane %v2605, %v2618
        %v2620 = vcombine.low %v2587, %v2599
        %v2621 = vcombine.high %v2587, %v2599
        %v2623 = vunpack.c.l.s4 1983009808
        %v2624 = vunpack.c.0.s8 %v2623
        %v2625 = vlaneseq
        %v2626 = vshrl.u32 %v2625, 7
        %v2627 = vsub.s32 %v2624, %v2626
        %v2628 = vrot.slane %v2620, %v2627
        %v2630 = vunpack.c.l.s4 1983009808
        %v2631 = vunpack.c.0.s8 %v2630
        %v2632 = vlaneseq
        %v2633 = vshrl.u32 %v2632, 7
        %v2634 = vsub.s32 %v2631, %v2633
        %v2635 = vrot.slane %v2621, %v2634
        %v2636 = vcombine.low %v2612, %v2628
        %v2637 = vcombine.high %v2612, %v2628
        %v2639 = vunpack.c.l.s4 1934713408
        %v2640 = vunpack.c.0.s8 %v2639
        %v2641 = vlaneseq
        %v2642 = vshrl.u32 %v2641, 7
        %v2643 = vsub.s32 %v2640, %v2642
        %v2644 = vrot.slane %v2636, %v2643
        %v2646 = vunpack.c.l.s4 1934713408
        %v2647 = vunpack.c.0.s8 %v2646
        %v2648 = vlaneseq
        %v2649 = vshrl.u32 %v2648, 7
        %v2650 = vsub.s32 %v2647, %v2649
        %v2651 = vrot.slane %v2637, %v2650
        %v2652 = vcombine.low %v2619, %v2635
        %v2653 = vcombine.high %v2619, %v2635
        %v2655 = vunpack.c.l.s4 1934713408
        %v2656 = vunpack.c.0.s8 %v2655
        %v2657 = vlaneseq
        %v2658 = vshrl.u32 %v2657, 7
        %v2659 = vsub.s32 %v2656, %v2658
        %v2660 = vrot.slane %v2652, %v2659
        %v2662 = vunpack.c.l.s4 1934713408
        %v2663 = vunpack.c.0.s8 %v2662
        %v2664 = vlaneseq
        %v2665 = vshrl.u32 %v2664, 7
        %v2666 = vsub.s32 %v2663, %v2665
        %v2667 = vrot.slane %v2653, %v2666
        %v2668 = vcombine.high %v2644, 0.0
        %v2669 = vcombine.high %v2651, 0.0
        %v2670 = vcombine.high %v2660, 0.0
        %v2671 = vcombine.high %v2667, 0.0
        %v2672 = vcombine.low %v2340, %v2595
        %v2674 = vunpack.c.l.s4 1983009808
        %v2675 = vunpack.c.0.s8 %v2674
        %v2676 = vlaneseq
        %v2677 = vshrl.u32 %v2676, 7
        %v2678 = vsub.s32 %v2675, %v2677
        %v2679 = vrot.slane %v2672, %v2678
        %v2680 = vcombine.low %v2589, %v2601
        %v2682 = vunpack.c.l.s4 1983009808
        %v2683 = vunpack.c.0.s8 %v2682
        %v2684 = vlaneseq
        %v2685 = vshrl.u32 %v2684, 7
        %v2686 = vsub.s32 %v2683, %v2685
        %v2687 = vrot.slane %v2680, %v2686
        %v2688 = vcombine.low %v2679, %v2687
        %v2689 = vcombine.high %v2679, %v2687
        %v2691 = vunpack.c.l.s4 1934713408
        %v2692 = vunpack.c.0.s8 %v2691
        %v2693 = vlaneseq
        %v2694 = vshrl.u32 %v2693, 7
        %v2695 = vsub.s32 %v2692, %v2694
        %v2696 = vrot.slane %v2688, %v2695
        %v2698 = vunpack.c.l.s4 1934713408
        %v2699 = vunpack.c.0.s8 %v2698
        %v2700 = vlaneseq
        %v2701 = vshrl.u32 %v2700, 7
        %v2702 = vsub.s32 %v2699, %v2701
        %v2703 = vrot.slane %v2689, %v2702
        %v2704 = vcombine.high %v2696, 0.0
        %v2705 = vcombine.high %v2703, 0.0
        %v2706 = vcombine.low %v2644, %v2651
        %v2708 = vunpack.c.l.s4 1983009808
        %v2709 = vunpack.c.0.s8 %v2708
        %v2710 = vlaneseq
        %v2711 = vshrl.u32 %v2710, 7
        %v2712 = vsub.s32 %v2709, %v2711
        %v2713 = vrot.slane %v2706, %v2712
        %v2714 = vcombine.low %v2668, %v2669
        %v2716 = vunpack.c.l.s4 1983009808
        %v2717 = vunpack.c.0.s8 %v2716
        %v2718 = vlaneseq
        %v2719 = vshrl.u32 %v2718, 7
        %v2720 = vsub.s32 %v2717, %v2719
        %v2721 = vrot.slane %v2714, %v2720
        %v2722 = vcombine.low %v2660, %v2667
        %v2724 = vunpack.c.l.s4 1983009808
        %v2725 = vunpack.c.0.s8 %v2724
        %v2726 = vlaneseq
        %v2727 = vshrl.u32 %v2726, 7
        %v2728 = vsub.s32 %v2725, %v2727
        %v2729 = vrot.slane %v2722, %v2728
        %v2730 = vcombine.low %v2670, %v2671
        %v2732 = vunpack.c.l.s4 1983009808
        %v2733 = vunpack.c.0.s8 %v2732
        %v2734 = vlaneseq
        %v2735 = vshrl.u32 %v2734, 7
        %v2736 = vsub.s32 %v2733, %v2735
        %v2737 = vrot.slane %v2730, %v2736
        %v2738 = vcombine.low %v2713, %v2721
        %v2739 = vcombine.high %v2713, %v2721
        %v2741 = vunpack.c.l.s4 1934713408
        %v2742 = vunpack.c.0.s8 %v2741
        %v2743 = vlaneseq
        %v2744 = vshrl.u32 %v2743, 7
        %v2745 = vsub.s32 %v2742, %v2744
        %v2746 = vrot.slane %v2738, %v2745
        %v2748 = vunpack.c.l.s4 1934713408
        %v2749 = vunpack.c.0.s8 %v2748
        %v2750 = vlaneseq
        %v2751 = vshrl.u32 %v2750, 7
        %v2752 = vsub.s32 %v2749, %v2751
        %v2753 = vrot.slane %v2739, %v2752
        %v2754 = vcombine.low %v2729, %v2737
        %v2755 = vcombine.high %v2729, %v2737
        %v2757 = vunpack.c.l.s4 1934713408
        %v2758 = vunpack.c.0.s8 %v2757
        %v2759 = vlaneseq
        %v2760 = vshrl.u32 %v2759, 7
        %v2761 = vsub.s32 %v2758, %v2760
        %v2762 = vrot.slane %v2754, %v2761
        %v2764 = vunpack.c.l.s4 1934713408
        %v2765 = vunpack.c.0.s8 %v2764
        %v2766 = vlaneseq
        %v2767 = vshrl.u32 %v2766, 7
        %v2768 = vsub.s32 %v2765, %v2767
        %v2769 = vrot.slane %v2755, %v2768
        %v2770 = vcombine.low %v2746, %v2762
        %v2771 = vcombine.high %v2746, %v2762
        %v2772 = vcombine.low %v2753, %v2769
        %v2773 = vcombine.high %v2753, %v2769
        %v2774 = vcombine.low %v2696, %v2703
        %v2776 = vunpack.c.l.s4 1983009808
        %v2777 = vunpack.c.0.s8 %v2776
        %v2778 = vlaneseq
        %v2779 = vshrl.u32 %v2778, 7
        %v2780 = vsub.s32 %v2777, %v2779
        %v2781 = vrot.slane %v2774, %v2780
        %v2782 = vcombine.low %v2704, %v2705
        %v2784 = vunpack.c.l.s4 1983009808
        %v2785 = vunpack.c.0.s8 %v2784
        %v2786 = vlaneseq
        %v2787 = vshrl.u32 %v2786, 7
        %v2788 = vsub.s32 %v2785, %v2787
        %v2789 = vrot.slane %v2782, %v2788
        %v2790 = vcombine.low %v2781, %v2789
        %v2791 = vcombine.high %v2781, %v2789
        %v2793 = vunpack.c.l.s4 1934713408
        %v2794 = vunpack.c.0.s8 %v2793
        %v2795 = vlaneseq
        %v2796 = vshrl.u32 %v2795, 7
        %v2797 = vsub.s32 %v2794, %v2796
        %v2798 = vrot.slane %v2790, %v2797
        %v2800 = vunpack.c.l.s4 1934713408
        %v2801 = vunpack.c.0.s8 %v2800
        %v2802 = vlaneseq
        %v2803 = vshrl.u32 %v2802, 7
        %v2804 = vsub.s32 %v2801, %v2803
        %v2805 = vrot.slane %v2791, %v2804
        %v2806 = vcombine.high %v2798, 0.0
        %v2807 = vcombine.high %v2805, 0.0
        %2808 = vrot.lane.b32.xlu0 %v2335, 96
        %v2809 = vpop.permute.xlu0 %2808
        %2810 = vrot.lane.b32.xlu0 %v2340, 96
        %v2811 = vpop.permute.xlu0 %2810
        %2812 = vrot.lane.b32.xlu0 %v2587, 96
        %v2813 = vpop.permute.xlu0 %2812
        %2814 = vrot.lane.b32.xlu0 %v2589, 96
        %v2815 = vpop.permute.xlu0 %2814
        %2816 = vrot.lane.b32.xlu0 %v2593, 96
        %v2817 = vpop.permute.xlu0 %2816
        %2818 = vrot.lane.b32.xlu0 %v2595, 96
        %v2819 = vpop.permute.xlu0 %2818
        %2820 = vrot.lane.b32.xlu0 %v2599, 96
        %v2821 = vpop.permute.xlu0 %2820
        %2822 = vrot.lane.b32.xlu0 %v2601, 96
        %v2823 = vpop.permute.xlu0 %2822
        %v2832 = vcombine.low %v2809, %v2817
        %v2833 = vcombine.high %v2809, %v2817
        %v2835 = vunpack.c.l.s4 1983009808
        %v2836 = vunpack.c.0.s8 %v2835
        %v2837 = vlaneseq
        %v2838 = vshrl.u32 %v2837, 7
        %v2839 = vsub.s32 %v2836, %v2838
        %v2840 = vrot.slane %v2832, %v2839
        %v2842 = vunpack.c.l.s4 1983009808
        %v2843 = vunpack.c.0.s8 %v2842
        %v2844 = vlaneseq
        %v2845 = vshrl.u32 %v2844, 7
        %v2846 = vsub.s32 %v2843, %v2845
        %v2847 = vrot.slane %v2833, %v2846
        %v2848 = vcombine.low %v2813, %v2821
        %v2849 = vcombine.high %v2813, %v2821
        %v2851 = vunpack.c.l.s4 1983009808
        %v2852 = vunpack.c.0.s8 %v2851
        %v2853 = vlaneseq
        %v2854 = vshrl.u32 %v2853, 7
        %v2855 = vsub.s32 %v2852, %v2854
        %v2856 = vrot.slane %v2848, %v2855
        %v2858 = vunpack.c.l.s4 1983009808
        %v2859 = vunpack.c.0.s8 %v2858
        %v2860 = vlaneseq
        %v2861 = vshrl.u32 %v2860, 7
        %v2862 = vsub.s32 %v2859, %v2861
        %v2863 = vrot.slane %v2849, %v2862
        %v2864 = vcombine.low %v2840, %v2856
        %v2865 = vcombine.high %v2840, %v2856
        %v2867 = vunpack.c.l.s4 1934713408
        %v2868 = vunpack.c.0.s8 %v2867
        %v2869 = vlaneseq
        %v2870 = vshrl.u32 %v2869, 7
        %v2871 = vsub.s32 %v2868, %v2870
        %v2872 = vrot.slane %v2864, %v2871
        %v2874 = vunpack.c.l.s4 1934713408
        %v2875 = vunpack.c.0.s8 %v2874
        %v2876 = vlaneseq
        %v2877 = vshrl.u32 %v2876, 7
        %v2878 = vsub.s32 %v2875, %v2877
        %v2879 = vrot.slane %v2865, %v2878
        %v2880 = vcombine.low %v2847, %v2863
        %v2881 = vcombine.high %v2847, %v2863
        %v2883 = vunpack.c.l.s4 1934713408
        %v2884 = vunpack.c.0.s8 %v2883
        %v2885 = vlaneseq
        %v2886 = vshrl.u32 %v2885, 7
        %v2887 = vsub.s32 %v2884, %v2886
        %v2888 = vrot.slane %v2880, %v2887
        %v2890 = vunpack.c.l.s4 1934713408
        %v2891 = vunpack.c.0.s8 %v2890
        %v2892 = vlaneseq
        %v2893 = vshrl.u32 %v2892, 7
        %v2894 = vsub.s32 %v2891, %v2893
        %v2895 = vrot.slane %v2881, %v2894
        %v2896 = vcombine.high %v2872, 0.0
        %v2897 = vcombine.high %v2879, 0.0
        %v2898 = vcombine.high %v2888, 0.0
        %v2899 = vcombine.high %v2895, 0.0
        %v2900 = vcombine.low %v2811, %v2819
        %v2902 = vunpack.c.l.s4 1983009808
        %v2903 = vunpack.c.0.s8 %v2902
        %v2904 = vlaneseq
        %v2905 = vshrl.u32 %v2904, 7
        %v2906 = vsub.s32 %v2903, %v2905
        %v2907 = vrot.slane %v2900, %v2906
        %v2908 = vcombine.low %v2815, %v2823
        %v2910 = vunpack.c.l.s4 1983009808
        %v2911 = vunpack.c.0.s8 %v2910
        %v2912 = vlaneseq
        %v2913 = vshrl.u32 %v2912, 7
        %v2914 = vsub.s32 %v2911, %v2913
        %v2915 = vrot.slane %v2908, %v2914
        %v2916 = vcombine.low %v2907, %v2915
        %v2917 = vcombine.high %v2907, %v2915
        %v2919 = vunpack.c.l.s4 1934713408
        %v2920 = vunpack.c.0.s8 %v2919
        %v2921 = vlaneseq
        %v2922 = vshrl.u32 %v2921, 7
        %v2923 = vsub.s32 %v2920, %v2922
        %v2924 = vrot.slane %v2916, %v2923
        %v2926 = vunpack.c.l.s4 1934713408
        %v2927 = vunpack.c.0.s8 %v2926
        %v2928 = vlaneseq
        %v2929 = vshrl.u32 %v2928, 7
        %v2930 = vsub.s32 %v2927, %v2929
        %v2931 = vrot.slane %v2917, %v2930
        %v2932 = vcombine.high %v2924, 0.0
        %v2933 = vcombine.high %v2931, 0.0
        %v2934 = vcombine.low %v2872, %v2879
        %v2936 = vunpack.c.l.s4 1983009808
        %v2937 = vunpack.c.0.s8 %v2936
        %v2938 = vlaneseq
        %v2939 = vshrl.u32 %v2938, 7
        %v2940 = vsub.s32 %v2937, %v2939
        %v2941 = vrot.slane %v2934, %v2940
        %v2942 = vcombine.low %v2896, %v2897
        %v2944 = vunpack.c.l.s4 1983009808
        %v2945 = vunpack.c.0.s8 %v2944
        %v2946 = vlaneseq
        %v2947 = vshrl.u32 %v2946, 7
        %v2948 = vsub.s32 %v2945, %v2947
        %v2949 = vrot.slane %v2942, %v2948
        %v2950 = vcombine.low %v2888, %v2895
        %v2952 = vunpack.c.l.s4 1983009808
        %v2953 = vunpack.c.0.s8 %v2952
        %v2954 = vlaneseq
        %v2955 = vshrl.u32 %v2954, 7
        %v2956 = vsub.s32 %v2953, %v2955
        %v2957 = vrot.slane %v2950, %v2956
        %v2958 = vcombine.low %v2898, %v2899
        %v2960 = vunpack.c.l.s4 1983009808
        %v2961 = vunpack.c.0.s8 %v2960
        %v2962 = vlaneseq
        %v2963 = vshrl.u32 %v2962, 7
        %v2964 = vsub.s32 %v2961, %v2963
        %v2965 = vrot.slane %v2958, %v2964
        %v2966 = vcombine.low %v2941, %v2949
        %v2967 = vcombine.high %v2941, %v2949
        %v2969 = vunpack.c.l.s4 1934713408
        %v2970 = vunpack.c.0.s8 %v2969
        %v2971 = vlaneseq
        %v2972 = vshrl.u32 %v2971, 7
        %v2973 = vsub.s32 %v2970, %v2972
        %v2974 = vrot.slane %v2966, %v2973
        %v2976 = vunpack.c.l.s4 1934713408
        %v2977 = vunpack.c.0.s8 %v2976
        %v2978 = vlaneseq
        %v2979 = vshrl.u32 %v2978, 7
        %v2980 = vsub.s32 %v2977, %v2979
        %v2981 = vrot.slane %v2967, %v2980
        %v2982 = vcombine.low %v2957, %v2965
        %v2983 = vcombine.high %v2957, %v2965
        %v2985 = vunpack.c.l.s4 1934713408
        %v2986 = vunpack.c.0.s8 %v2985
        %v2987 = vlaneseq
        %v2988 = vshrl.u32 %v2987, 7
        %v2989 = vsub.s32 %v2986, %v2988
        %v2990 = vrot.slane %v2982, %v2989
        %v2992 = vunpack.c.l.s4 1934713408
        %v2993 = vunpack.c.0.s8 %v2992
        %v2994 = vlaneseq
        %v2995 = vshrl.u32 %v2994, 7
        %v2996 = vsub.s32 %v2993, %v2995
        %v2997 = vrot.slane %v2983, %v2996
        %v2998 = vcombine.low %v2974, %v2990
        %v2999 = vcombine.high %v2974, %v2990
        %v3000 = vcombine.low %v2981, %v2997
        %v3001 = vcombine.high %v2981, %v2997
        %v3002 = vcombine.low %v2924, %v2931
        %v3004 = vunpack.c.l.s4 1983009808
        %v3005 = vunpack.c.0.s8 %v3004
        %v3006 = vlaneseq
        %v3007 = vshrl.u32 %v3006, 7
        %v3008 = vsub.s32 %v3005, %v3007
        %v3009 = vrot.slane %v3002, %v3008
        %v3010 = vcombine.low %v2932, %v2933
        %v3012 = vunpack.c.l.s4 1983009808
        %v3013 = vunpack.c.0.s8 %v3012
        %v3014 = vlaneseq
        %v3015 = vshrl.u32 %v3014, 7
        %v3016 = vsub.s32 %v3013, %v3015
        %v3017 = vrot.slane %v3010, %v3016
        %v3018 = vcombine.low %v3009, %v3017
        %v3019 = vcombine.high %v3009, %v3017
        %v3021 = vunpack.c.l.s4 1934713408
        %v3022 = vunpack.c.0.s8 %v3021
        %v3023 = vlaneseq
        %v3024 = vshrl.u32 %v3023, 7
        %v3025 = vsub.s32 %v3022, %v3024
        %v3026 = vrot.slane %v3018, %v3025
        %v3028 = vunpack.c.l.s4 1934713408
        %v3029 = vunpack.c.0.s8 %v3028
        %v3030 = vlaneseq
        %v3031 = vshrl.u32 %v3030, 7
        %v3032 = vsub.s32 %v3029, %v3031
        %v3033 = vrot.slane %v3019, %v3032
        %v3034 = vcombine.high %v3026, 0.0
        %v3035 = vcombine.high %v3033, 0.0
        %v3037 = vsel %vm1285, %v2580, 0
        %v3040 = vsel %vm1285, %v2770, 0
        %v3043 = vsel %vm1285, %v2798, 0
        %3045 = vmatprep.subr.mxu0 0.0
        %3046 = vmatpush1.xpose.msra.mxu0 0.0
        %3047 = vmatprep.subr.mxu0 0.0
        %3048 = vmatpush1.xpose.msra.mxu0 0.0
        %3049 = vmatprep.subr.mxu0 0.0
        %3050 = vmatpush1.xpose.msra.mxu0 0.0
        %3051 = vmatprep.subr.mxu0 0.0
        %3052 = vmatpush1.xpose.msra.mxu0 0.0
        %3053 = vmatprep.subr.mxu0 0.0
        %3054 = vmatpush1.xpose.msra.mxu0 0.0
        %3055 = vmatprep.subr.mxu0 0.0
        %3056 = vmatpush1.xpose.msra.mxu0 0.0
        %3057 = vmatprep.subr.mxu0 0.0
        %3058 = vmatpush1.xpose.msra.mxu0 0.0
        %3059 = vmatprep.subr.mxu0 0.0
        %3060 = vmatpush1.xpose.msra.mxu0 0.0
        %3061 = vmatprep.subr.mxu0 0.0
        %3062 = vmatpush1.xpose.msra.mxu0 0.0
        %3063 = vmatprep.subr.mxu0 0.0
        %3064 = vmatpush1.xpose.msra.mxu0 0.0
        %3065 = vmatprep.subr.mxu0 0.0
        %3066 = vmatpush1.xpose.msra.mxu0 0.0
        %3067 = vmatprep.subr.mxu0 0.0
        %3068 = vmatpush1.xpose.msra.mxu0 0.0
        %3069 = vmatprep.subr.mxu0 0.0
        %3070 = vmatpush1.xpose.msra.mxu0 0.0
        %3071 = vmatprep.subr.mxu0 0.0
        %3072 = vmatpush1.xpose.msra.mxu0 0.0
        %3073 = vmatprep.subr.mxu0 0.0
        %3074 = vmatpush1.xpose.msra.mxu0 %v3043
        %3075 = vmatprep.subr.mxu0 0.0
        %3076 = vmatpush1.xpose.msra.mxu0 %v3040
        %3077 = vmatprep.subr.mxu0 0.0
        %3078 = vmatpush2.xpose.msra.mxu0 0.0
        %3079 = vmatprep.subr.mxu0 0.0
        %3080 = vmatpush2.xpose.msra.mxu0 0.0
        %3081 = vmatprep.subr.mxu0 0.0
        %3082 = vmatpush2.xpose.msra.mxu0 0.0
        %3083 = vmatprep.subr.mxu0 0.0
        %3084 = vmatpush2.xpose.msra.mxu0 0.0
        %3085 = vmatprep.subr.mxu0 0.0
        %3086 = vmatpush2.xpose.msra.mxu0 0.0
        %3087 = vmatprep.subr.mxu0 0.0
        %3088 = vmatpush2.xpose.msra.mxu0 0.0
        %3089 = vmatprep.subr.mxu0 0.0
        %3090 = vmatpush2.xpose.msra.mxu0 0.0
        %3091 = vmatprep.subr.mxu0 0.0
        %3092 = vmatpush2.xpose.msra.mxu0 0.0
        %3093 = vmatprep.subr.mxu0 0.0
        %3094 = vmatpush2.xpose.msra.mxu0 0.0
        %3095 = vmatprep.subr.mxu0 0.0
        %3096 = vmatpush2.xpose.msra.mxu0 0.0
        %3097 = vmatprep.subr.mxu0 0.0
        %3098 = vmatpush2.xpose.msra.mxu0 0.0
        %3099 = vmatprep.subr.mxu0 0.0
        %3100 = vmatpush2.xpose.msra.mxu0 0.0
        %3101 = vmatprep.subr.mxu0 0.0
        %3102 = vmatpush2.xpose.msra.mxu0 0.0
        %3103 = vmatprep.subr.mxu0 0.0
        %3104 = vmatpush2.xpose.msra.mxu0 0.0
        %3105 = vmatprep.subr.mxu0 0.0
        %3106 = vmatpush2.xpose.msra.mxu0 0.0
        %3107 = vmatprep.subr.mxu0 0.0
        %3108 = vmatpush2.xpose.msra.mxu0 0.0
        %3109 = vmatprep.mubr.f32.mxu0 0.0
        %3110 = vmatmul.mubr.f32.gmra.mxu0 %v3037
        %v3111 = vpop.f32.mrf.mxu0
        %v3112 = vadd.f32 0.0, %v3111
        %v3113 = vpop.f32.mrf.mxu0
        %3114 = vdwg.mxu0
        %v3116 = vsel %vm1285, %v2581, 0
        %v3119 = vsel %vm1285, %v2771, 0
        %v3122 = vsel %vm1285, %v2806, 0
        %3124 = vmatprep.subr.mxu0 0.0
        %3125 = vmatpush1.xpose.msra.mxu0 0.0
        %3126 = vmatprep.subr.mxu0 0.0
        %3127 = vmatpush1.xpose.msra.mxu0 0.0
        %3128 = vmatprep.subr.mxu0 0.0
        %3129 = vmatpush1.xpose.msra.mxu0 0.0
        %3130 = vmatprep.subr.mxu0 0.0
        %3131 = vmatpush1.xpose.msra.mxu0 0.0
        %3132 = vmatprep.subr.mxu0 0.0
        %3133 = vmatpush1.xpose.msra.mxu0 0.0
        %3134 = vmatprep.subr.mxu0 0.0
        %3135 = vmatpush1.xpose.msra.mxu0 0.0
        %3136 = vmatprep.subr.mxu0 0.0
        %3137 = vmatpush1.xpose.msra.mxu0 0.0
        %3138 = vmatprep.subr.mxu0 0.0
        %3139 = vmatpush1.xpose.msra.mxu0 0.0
        %3140 = vmatprep.subr.mxu0 0.0
        %3141 = vmatpush1.xpose.msra.mxu0 0.0
        %3142 = vmatprep.subr.mxu0 0.0
        %3143 = vmatpush1.xpose.msra.mxu0 0.0
        %3144 = vmatprep.subr.mxu0 0.0
        %3145 = vmatpush1.xpose.msra.mxu0 0.0
        %3146 = vmatprep.subr.mxu0 0.0
        %3147 = vmatpush1.xpose.msra.mxu0 0.0
        %3148 = vmatprep.subr.mxu0 0.0
        %3149 = vmatpush1.xpose.msra.mxu0 0.0
        %3150 = vmatprep.subr.mxu0 0.0
        %3151 = vmatpush1.xpose.msra.mxu0 0.0
        %3152 = vmatprep.subr.mxu0 0.0
        %3153 = vmatpush1.xpose.msra.mxu0 %v3122
        %3154 = vmatprep.subr.mxu0 0.0
        %3155 = vmatpush1.xpose.msra.mxu0 %v3119
        %3156 = vmatprep.subr.mxu0 0.0
        %3157 = vmatpush2.xpose.msra.mxu0 0.0
        %3158 = vmatprep.subr.mxu0 0.0
        %3159 = vmatpush2.xpose.msra.mxu0 0.0
        %3160 = vmatprep.subr.mxu0 0.0
        %3161 = vmatpush2.xpose.msra.mxu0 0.0
        %3162 = vmatprep.subr.mxu0 0.0
        %3163 = vmatpush2.xpose.msra.mxu0 0.0
        %3164 = vmatprep.subr.mxu0 0.0
        %3165 = vmatpush2.xpose.msra.mxu0 0.0
        %3166 = vmatprep.subr.mxu0 0.0
        %3167 = vmatpush2.xpose.msra.mxu0 0.0
        %3168 = vmatprep.subr.mxu0 0.0
        %3169 = vmatpush2.xpose.msra.mxu0 0.0
        %3170 = vmatprep.subr.mxu0 0.0
        %3171 = vmatpush2.xpose.msra.mxu0 0.0
        %3172 = vmatprep.subr.mxu0 0.0
        %3173 = vmatpush2.xpose.msra.mxu0 0.0
        %3174 = vmatprep.subr.mxu0 0.0
        %3175 = vmatpush2.xpose.msra.mxu0 0.0
        %3176 = vmatprep.subr.mxu0 0.0
        %3177 = vmatpush2.xpose.msra.mxu0 0.0
        %3178 = vmatprep.subr.mxu0 0.0
        %3179 = vmatpush2.xpose.msra.mxu0 0.0
        %3180 = vmatprep.subr.mxu0 0.0
        %3181 = vmatpush2.xpose.msra.mxu0 0.0
        %3182 = vmatprep.subr.mxu0 0.0
        %3183 = vmatpush2.xpose.msra.mxu0 0.0
        %3184 = vmatprep.subr.mxu0 0.0
        %3185 = vmatpush2.xpose.msra.mxu0 0.0
        %3186 = vmatprep.subr.mxu0 0.0
        %3187 = vmatpush2.xpose.msra.mxu0 0.0
        %3188 = vmatprep.mubr.f32.mxu0 0.0
        %3189 = vmatmul.mubr.f32.gmra.mxu0 %v3116
        %v3190 = vpop.f32.mrf.mxu0
        %v3191 = vadd.f32 0.0, %v3190
        %v3192 = vpop.f32.mrf.mxu0
        %3193 = vdwg.mxu0
        %v3195 = vsel %vm1285, %v2582, 0
        %v3198 = vsel %vm1285, %v2772, 0
        %v3201 = vsel %vm1285, %v2805, 0
        %3203 = vmatprep.subr.mxu0 0.0
        %3204 = vmatpush1.xpose.msra.mxu0 0.0
        %3205 = vmatprep.subr.mxu0 0.0
        %3206 = vmatpush1.xpose.msra.mxu0 0.0
        %3207 = vmatprep.subr.mxu0 0.0
        %3208 = vmatpush1.xpose.msra.mxu0 0.0
        %3209 = vmatprep.subr.mxu0 0.0
        %3210 = vmatpush1.xpose.msra.mxu0 0.0
        %3211 = vmatprep.subr.mxu0 0.0
        %3212 = vmatpush1.xpose.msra.mxu0 0.0
        %3213 = vmatprep.subr.mxu0 0.0
        %3214 = vmatpush1.xpose.msra.mxu0 0.0
        %3215 = vmatprep.subr.mxu0 0.0
        %3216 = vmatpush1.xpose.msra.mxu0 0.0
        %3217 = vmatprep.subr.mxu0 0.0
        %3218 = vmatpush1.xpose.msra.mxu0 0.0
        %3219 = vmatprep.subr.mxu0 0.0
        %3220 = vmatpush1.xpose.msra.mxu0 0.0
        %3221 = vmatprep.subr.mxu0 0.0
        %3222 = vmatpush1.xpose.msra.mxu0 0.0
        %3223 = vmatprep.subr.mxu0 0.0
        %3224 = vmatpush1.xpose.msra.mxu0 0.0
        %3225 = vmatprep.subr.mxu0 0.0
        %3226 = vmatpush1.xpose.msra.mxu0 0.0
        %3227 = vmatprep.subr.mxu0 0.0
        %3228 = vmatpush1.xpose.msra.mxu0 0.0
        %3229 = vmatprep.subr.mxu0 0.0
        %3230 = vmatpush1.xpose.msra.mxu0 0.0
        %3231 = vmatprep.subr.mxu0 0.0
        %3232 = vmatpush1.xpose.msra.mxu0 %v3201
        %3233 = vmatprep.subr.mxu0 0.0
        %3234 = vmatpush1.xpose.msra.mxu0 %v3198
        %3235 = vmatprep.subr.mxu0 0.0
        %3236 = vmatpush2.xpose.msra.mxu0 0.0
        %3237 = vmatprep.subr.mxu0 0.0
        %3238 = vmatpush2.xpose.msra.mxu0 0.0
        %3239 = vmatprep.subr.mxu0 0.0
        %3240 = vmatpush2.xpose.msra.mxu0 0.0
        %3241 = vmatprep.subr.mxu0 0.0
        %3242 = vmatpush2.xpose.msra.mxu0 0.0
        %3243 = vmatprep.subr.mxu0 0.0
        %3244 = vmatpush2.xpose.msra.mxu0 0.0
        %3245 = vmatprep.subr.mxu0 0.0
        %3246 = vmatpush2.xpose.msra.mxu0 0.0
        %3247 = vmatprep.subr.mxu0 0.0
        %3248 = vmatpush2.xpose.msra.mxu0 0.0
        %3249 = vmatprep.subr.mxu0 0.0
        %3250 = vmatpush2.xpose.msra.mxu0 0.0
        %3251 = vmatprep.subr.mxu0 0.0
        %3252 = vmatpush2.xpose.msra.mxu0 0.0
        %3253 = vmatprep.subr.mxu0 0.0
        %3254 = vmatpush2.xpose.msra.mxu0 0.0
        %3255 = vmatprep.subr.mxu0 0.0
        %3256 = vmatpush2.xpose.msra.mxu0 0.0
        %3257 = vmatprep.subr.mxu0 0.0
        %3258 = vmatpush2.xpose.msra.mxu0 0.0
        %3259 = vmatprep.subr.mxu0 0.0
        %3260 = vmatpush2.xpose.msra.mxu0 0.0
        %3261 = vmatprep.subr.mxu0 0.0
        %3262 = vmatpush2.xpose.msra.mxu0 0.0
        %3263 = vmatprep.subr.mxu0 0.0
        %3264 = vmatpush2.xpose.msra.mxu0 0.0
        %3265 = vmatprep.subr.mxu0 0.0
        %3266 = vmatpush2.xpose.msra.mxu0 0.0
        %3267 = vmatprep.mubr.f32.mxu0 0.0
        %3268 = vmatmul.mubr.f32.gmra.mxu0 %v3195
        %v3269 = vpop.f32.mrf.mxu0
        %v3270 = vadd.f32 0.0, %v3269
        %v3271 = vpop.f32.mrf.mxu0
        %3272 = vdwg.mxu0
        %v3274 = vsel %vm1285, %v2583, 0
        %v3277 = vsel %vm1285, %v2773, 0
        %v3280 = vsel %vm1285, %v2807, 0
        %3282 = vmatprep.subr.mxu0 0.0
        %3283 = vmatpush1.xpose.msra.mxu0 0.0
        %3284 = vmatprep.subr.mxu0 0.0
        %3285 = vmatpush1.xpose.msra.mxu0 0.0
        %3286 = vmatprep.subr.mxu0 0.0
        %3287 = vmatpush1.xpose.msra.mxu0 0.0
        %3288 = vmatprep.subr.mxu0 0.0
        %3289 = vmatpush1.xpose.msra.mxu0 0.0
        %3290 = vmatprep.subr.mxu0 0.0
        %3291 = vmatpush1.xpose.msra.mxu0 0.0
        %3292 = vmatprep.subr.mxu0 0.0
        %3293 = vmatpush1.xpose.msra.mxu0 0.0
        %3294 = vmatprep.subr.mxu0 0.0
        %3295 = vmatpush1.xpose.msra.mxu0 0.0
        %3296 = vmatprep.subr.mxu0 0.0
        %3297 = vmatpush1.xpose.msra.mxu0 0.0
        %3298 = vmatprep.subr.mxu0 0.0
        %3299 = vmatpush1.xpose.msra.mxu0 0.0
        %3300 = vmatprep.subr.mxu0 0.0
        %3301 = vmatpush1.xpose.msra.mxu0 0.0
        %3302 = vmatprep.subr.mxu0 0.0
        %3303 = vmatpush1.xpose.msra.mxu0 0.0
        %3304 = vmatprep.subr.mxu0 0.0
        %3305 = vmatpush1.xpose.msra.mxu0 0.0
        %3306 = vmatprep.subr.mxu0 0.0
        %3307 = vmatpush1.xpose.msra.mxu0 0.0
        %3308 = vmatprep.subr.mxu0 0.0
        %3309 = vmatpush1.xpose.msra.mxu0 0.0
        %3310 = vmatprep.subr.mxu0 0.0
        %3311 = vmatpush1.xpose.msra.mxu0 %v3280
        %3312 = vmatprep.subr.mxu0 0.0
        %3313 = vmatpush1.xpose.msra.mxu0 %v3277
        %3314 = vmatprep.subr.mxu0 0.0
        %3315 = vmatpush2.xpose.msra.mxu0 0.0
        %3316 = vmatprep.subr.mxu0 0.0
        %3317 = vmatpush2.xpose.msra.mxu0 0.0
        %3318 = vmatprep.subr.mxu0 0.0
        %3319 = vmatpush2.xpose.msra.mxu0 0.0
        %3320 = vmatprep.subr.mxu0 0.0
        %3321 = vmatpush2.xpose.msra.mxu0 0.0
        %3322 = vmatprep.subr.mxu0 0.0
        %3323 = vmatpush2.xpose.msra.mxu0 0.0
        %3324 = vmatprep.subr.mxu0 0.0
        %3325 = vmatpush2.xpose.msra.mxu0 0.0
        %3326 = vmatprep.subr.mxu0 0.0
        %3327 = vmatpush2.xpose.msra.mxu0 0.0
        %3328 = vmatprep.subr.mxu0 0.0
        %3329 = vmatpush2.xpose.msra.mxu0 0.0
        %3330 = vmatprep.subr.mxu0 0.0
        %3331 = vmatpush2.xpose.msra.mxu0 0.0
        %3332 = vmatprep.subr.mxu0 0.0
        %3333 = vmatpush2.xpose.msra.mxu0 0.0
        %3334 = vmatprep.subr.mxu0 0.0
        %3335 = vmatpush2.xpose.msra.mxu0 0.0
        %3336 = vmatprep.subr.mxu0 0.0
        %3337 = vmatpush2.xpose.msra.mxu0 0.0
        %3338 = vmatprep.subr.mxu0 0.0
        %3339 = vmatpush2.xpose.msra.mxu0 0.0
        %3340 = vmatprep.subr.mxu0 0.0
        %3341 = vmatpush2.xpose.msra.mxu0 0.0
        %3342 = vmatprep.subr.mxu0 0.0
        %3343 = vmatpush2.xpose.msra.mxu0 0.0
        %3344 = vmatprep.subr.mxu0 0.0
        %3345 = vmatpush2.xpose.msra.mxu0 0.0
        %3346 = vmatprep.mubr.f32.mxu0 0.0
        %3347 = vmatmul.mubr.f32.gmra.mxu0 %v3274
        %v3348 = vpop.f32.mrf.mxu0
        %v3349 = vadd.f32 0.0, %v3348
        %v3350 = vpop.f32.mrf.mxu0
        %3351 = vdwg.mxu0
        %vm3352 = vcmask 97280
        %v3353 = vsel %vm3352, %v3112, -inf
        %3354 = vmax.xlane.f32.xlu0 %v3353
        %v3355 = vpop.xlane.xlu0 %3354
        %v3356 = vsel %vm3352, %v3191, -inf
        %3357 = vmax.xlane.f32.xlu0 %v3356
        %v3358 = vpop.xlane.xlu0 %3357
        %v3359 = vsel %vm3352, %v3270, -inf
        %3360 = vmax.xlane.f32.xlu0 %v3359
        %v3361 = vpop.xlane.xlu0 %3360
        %v3362 = vsel %vm3352, %v3349, -inf
        %3363 = vmax.xlane.f32.xlu0 %v3362
        %v3364 = vpop.xlane.xlu0 %3363
        %v3365 = vsub.f32 %v3112, %v3355
        %v3366 = vsub.f32 %v3191, %v3358
        %v3367 = vsub.f32 %v3270, %v3361
        %v3368 = vsub.f32 %v3349, %v3364
        %v3369 = vmul.f32 %v3365, 1.442695
        %v3370 = vpow.pop %v3369
        %v3371 = vmul.f32 %v3366, 1.442695
        %v3372 = vpow.pop %v3371
        %v3373 = vmul.f32 %v3367, 1.442695
        %v3374 = vpow.pop %v3373
        %v3375 = vmul.f32 %v3368, 1.442695
        %v3376 = vpow.pop %v3375
        %v3377 = vsel %vm3352, %v3370, 0.0
        %3378 = vadd.xlane.f32.xlu0 %v3377
        %v3379 = vpop.xlane.xlu0 %3378
        %v3380 = vsel %vm3352, %v3372, 0.0
        %3381 = vadd.xlane.f32.xlu0 %v3380
        %v3382 = vpop.xlane.xlu0 %3381
        %v3383 = vsel %vm3352, %v3374, 0.0
        %3384 = vadd.xlane.f32.xlu0 %v3383
        %v3385 = vpop.xlane.xlu0 %3384
        %v3386 = vsel %vm3352, %v3376, 0.0
        %3387 = vadd.xlane.f32.xlu0 %v3386
        %v3388 = vpop.xlane.xlu0 %3387
        %v3389 = vrcp.pop %v3379
        %v3390 = vmul.f32 %v3370, %v3389
        %v3391 = vrcp.pop %v3382
        %v3392 = vmul.f32 %v3372, %v3391
        %v3393 = vrcp.pop %v3385
        %v3394 = vmul.f32 %v3374, %v3393
        %v3395 = vrcp.pop %v3388
        %v3396 = vmul.f32 %v3376, %v3395
        %v3398 = vsel %vm3352, %v3390, 0
        %vm3400 = vcmask 1043456
        %v3402 = vsel %vm3400, %v3026, 0
        %3404 = vmatprep.subr.mxu0 0.0
        %3405 = vmatpush1.msra.mxu0 0.0
        %3406 = vmatprep.subr.mxu0 0.0
        %3407 = vmatpush1.msra.mxu0 0.0
        %3408 = vmatprep.subr.mxu0 0.0
        %3409 = vmatpush1.msra.mxu0 0.0
        %3410 = vmatprep.subr.mxu0 0.0
        %3411 = vmatpush1.msra.mxu0 0.0
        %3412 = vmatprep.subr.mxu0 0.0
        %3413 = vmatpush1.msra.mxu0 0.0
        %3414 = vmatprep.subr.mxu0 0.0
        %3415 = vmatpush1.msra.mxu0 0.0
        %3416 = vmatprep.subr.mxu0 0.0
        %3417 = vmatpush1.msra.mxu0 0.0
        %3418 = vmatprep.subr.mxu0 0.0
        %3419 = vmatpush1.msra.mxu0 0.0
        %3420 = vmatprep.subr.mxu0 0.0
        %3421 = vmatpush1.msra.mxu0 0.0
        %3422 = vmatprep.subr.mxu0 0.0
        %3423 = vmatpush1.msra.mxu0 0.0
        %3424 = vmatprep.subr.mxu0 0.0
        %3425 = vmatpush1.msra.mxu0 0.0
        %3426 = vmatprep.subr.mxu0 0.0
        %3427 = vmatpush1.msra.mxu0 0.0
        %3428 = vmatprep.subr.mxu0 0.0
        %3429 = vmatpush1.msra.mxu0 0.0
        %3430 = vmatprep.subr.mxu0 0.0
        %3431 = vmatpush1.msra.mxu0 0.0
        %3432 = vmatprep.subr.mxu0 0.0
        %3433 = vmatpush1.msra.mxu0 %v3402
        %3434 = vmatprep.subr.mxu0 0.0
        %3435 = vmatpush1.msra.mxu0 %v2998
        %3436 = vmatprep.subr.mxu0 0.0
        %3437 = vmatpush2.msra.mxu0 0.0
        %3438 = vmatprep.subr.mxu0 0.0
        %3439 = vmatpush2.msra.mxu0 0.0
        %3440 = vmatprep.subr.mxu0 0.0
        %3441 = vmatpush2.msra.mxu0 0.0
        %3442 = vmatprep.subr.mxu0 0.0
        %3443 = vmatpush2.msra.mxu0 0.0
        %3444 = vmatprep.subr.mxu0 0.0
        %3445 = vmatpush2.msra.mxu0 0.0
        %3446 = vmatprep.subr.mxu0 0.0
        %3447 = vmatpush2.msra.mxu0 0.0
        %3448 = vmatprep.subr.mxu0 0.0
        %3449 = vmatpush2.msra.mxu0 0.0
        %3450 = vmatprep.subr.mxu0 0.0
        %3451 = vmatpush2.msra.mxu0 0.0
        %3452 = vmatprep.subr.mxu0 0.0
        %3453 = vmatpush2.msra.mxu0 0.0
        %3454 = vmatprep.subr.mxu0 0.0
        %3455 = vmatpush2.msra.mxu0 0.0
        %3456 = vmatprep.subr.mxu0 0.0
        %3457 = vmatpush2.msra.mxu0 0.0
        %3458 = vmatprep.subr.mxu0 0.0
        %3459 = vmatpush2.msra.mxu0 0.0
        %3460 = vmatprep.subr.mxu0 0.0
        %3461 = vmatpush2.msra.mxu0 0.0
        %3462 = vmatprep.subr.mxu0 0.0
        %3463 = vmatpush2.msra.mxu0 0.0
        %3464 = vmatprep.subr.mxu0 0.0
        %3465 = vmatpush2.msra.mxu0 0.0
        %3466 = vmatprep.subr.mxu0 0.0
        %3467 = vmatpush2.msra.mxu0 0.0
        %3468 = vmatprep.mubr.f32.mxu0 0.0
        %3469 = vmatmul.mubr.f32.gmra.mxu0 %v3398
        %v3470 = vpop.f32.mrf.mxu0
        %v3471 = vadd.f32 0.0, %v3470
        %v3472 = vpop.f32.mrf.mxu0
        %3473 = vdwg.mxu0
        %v3475 = vsel %vm3352, %v3392, 0
        %v3478 = vsel %vm3400, %v3034, 0
        %3480 = vmatprep.subr.mxu0 0.0
        %3481 = vmatpush1.msra.mxu0 0.0
        %3482 = vmatprep.subr.mxu0 0.0
        %3483 = vmatpush1.msra.mxu0 0.0
        %3484 = vmatprep.subr.mxu0 0.0
        %3485 = vmatpush1.msra.mxu0 0.0
        %3486 = vmatprep.subr.mxu0 0.0
        %3487 = vmatpush1.msra.mxu0 0.0
        %3488 = vmatprep.subr.mxu0 0.0
        %3489 = vmatpush1.msra.mxu0 0.0
        %3490 = vmatprep.subr.mxu0 0.0
        %3491 = vmatpush1.msra.mxu0 0.0
        %3492 = vmatprep.subr.mxu0 0.0
        %3493 = vmatpush1.msra.mxu0 0.0
        %3494 = vmatprep.subr.mxu0 0.0
        %3495 = vmatpush1.msra.mxu0 0.0
        %3496 = vmatprep.subr.mxu0 0.0
        %3497 = vmatpush1.msra.mxu0 0.0
        %3498 = vmatprep.subr.mxu0 0.0
        %3499 = vmatpush1.msra.mxu0 0.0
        %3500 = vmatprep.subr.mxu0 0.0
        %3501 = vmatpush1.msra.mxu0 0.0
        %3502 = vmatprep.subr.mxu0 0.0
        %3503 = vmatpush1.msra.mxu0 0.0
        %3504 = vmatprep.subr.mxu0 0.0
        %3505 = vmatpush1.msra.mxu0 0.0
        %3506 = vmatprep.subr.mxu0 0.0
        %3507 = vmatpush1.msra.mxu0 0.0
        %3508 = vmatprep.subr.mxu0 0.0
        %3509 = vmatpush1.msra.mxu0 %v3478
        %3510 = vmatprep.subr.mxu0 0.0
        %3511 = vmatpush1.msra.mxu0 %v2999
        %3512 = vmatprep.subr.mxu0 0.0
        %3513 = vmatpush2.msra.mxu0 0.0
        %3514 = vmatprep.subr.mxu0 0.0
        %3515 = vmatpush2.msra.mxu0 0.0
        %3516 = vmatprep.subr.mxu0 0.0
        %3517 = vmatpush2.msra.mxu0 0.0
        %3518 = vmatprep.subr.mxu0 0.0
        %3519 = vmatpush2.msra.mxu0 0.0
        %3520 = vmatprep.subr.mxu0 0.0
        %3521 = vmatpush2.msra.mxu0 0.0
        %3522 = vmatprep.subr.mxu0 0.0
        %3523 = vmatpush2.msra.mxu0 0.0
        %3524 = vmatprep.subr.mxu0 0.0
        %3525 = vmatpush2.msra.mxu0 0.0
        %3526 = vmatprep.subr.mxu0 0.0
        %3527 = vmatpush2.msra.mxu0 0.0
        %3528 = vmatprep.subr.mxu0 0.0
        %3529 = vmatpush2.msra.mxu0 0.0
        %3530 = vmatprep.subr.mxu0 0.0
        %3531 = vmatpush2.msra.mxu0 0.0
        %3532 = vmatprep.subr.mxu0 0.0
        %3533 = vmatpush2.msra.mxu0 0.0
        %3534 = vmatprep.subr.mxu0 0.0
        %3535 = vmatpush2.msra.mxu0 0.0
        %3536 = vmatprep.subr.mxu0 0.0
        %3537 = vmatpush2.msra.mxu0 0.0
        %3538 = vmatprep.subr.mxu0 0.0
        %3539 = vmatpush2.msra.mxu0 0.0
        %3540 = vmatprep.subr.mxu0 0.0
        %3541 = vmatpush2.msra.mxu0 0.0
        %3542 = vmatprep.subr.mxu0 0.0
        %3543 = vmatpush2.msra.mxu0 0.0
        %3544 = vmatprep.mubr.f32.mxu0 0.0
        %3545 = vmatmul.mubr.f32.gmra.mxu0 %v3475
        %v3546 = vpop.f32.mrf.mxu0
        %v3547 = vadd.f32 0.0, %v3546
        %v3548 = vpop.f32.mrf.mxu0
        %3549 = vdwg.mxu0
        %v3551 = vsel %vm3352, %v3394, 0
        %v3554 = vsel %vm3400, %v3033, 0
        %3556 = vmatprep.subr.mxu0 0.0
        %3557 = vmatpush1.msra.mxu0 0.0
        %3558 = vmatprep.subr.mxu0 0.0
        %3559 = vmatpush1.msra.mxu0 0.0
        %3560 = vmatprep.subr.mxu0 0.0
        %3561 = vmatpush1.msra.mxu0 0.0
        %3562 = vmatprep.subr.mxu0 0.0
        %3563 = vmatpush1.msra.mxu0 0.0
        %3564 = vmatprep.subr.mxu0 0.0
        %3565 = vmatpush1.msra.mxu0 0.0
        %3566 = vmatprep.subr.mxu0 0.0
        %3567 = vmatpush1.msra.mxu0 0.0
        %3568 = vmatprep.subr.mxu0 0.0
        %3569 = vmatpush1.msra.mxu0 0.0
        %3570 = vmatprep.subr.mxu0 0.0
        %3571 = vmatpush1.msra.mxu0 0.0
        %3572 = vmatprep.subr.mxu0 0.0
        %3573 = vmatpush1.msra.mxu0 0.0
        %3574 = vmatprep.subr.mxu0 0.0
        %3575 = vmatpush1.msra.mxu0 0.0
        %3576 = vmatprep.subr.mxu0 0.0
        %3577 = vmatpush1.msra.mxu0 0.0
        %3578 = vmatprep.subr.mxu0 0.0
        %3579 = vmatpush1.msra.mxu0 0.0
        %3580 = vmatprep.subr.mxu0 0.0
        %3581 = vmatpush1.msra.mxu0 0.0
        %3582 = vmatprep.subr.mxu0 0.0
        %3583 = vmatpush1.msra.mxu0 0.0
        %3584 = vmatprep.subr.mxu0 0.0
        %3585 = vmatpush1.msra.mxu0 %v3554
        %3586 = vmatprep.subr.mxu0 0.0
        %3587 = vmatpush1.msra.mxu0 %v3000
        %3588 = vmatprep.subr.mxu0 0.0
        %3589 = vmatpush2.msra.mxu0 0.0
        %3590 = vmatprep.subr.mxu0 0.0
        %3591 = vmatpush2.msra.mxu0 0.0
        %3592 = vmatprep.subr.mxu0 0.0
        %3593 = vmatpush2.msra.mxu0 0.0
        %3594 = vmatprep.subr.mxu0 0.0
        %3595 = vmatpush2.msra.mxu0 0.0
        %3596 = vmatprep.subr.mxu0 0.0
        %3597 = vmatpush2.msra.mxu0 0.0
        %3598 = vmatprep.subr.mxu0 0.0
        %3599 = vmatpush2.msra.mxu0 0.0
        %3600 = vmatprep.subr.mxu0 0.0
        %3601 = vmatpush2.msra.mxu0 0.0
        %3602 = vmatprep.subr.mxu0 0.0
        %3603 = vmatpush2.msra.mxu0 0.0
        %3604 = vmatprep.subr.mxu0 0.0
        %3605 = vmatpush2.msra.mxu0 0.0
        %3606 = vmatprep.subr.mxu0 0.0
        %3607 = vmatpush2.msra.mxu0 0.0
        %3608 = vmatprep.subr.mxu0 0.0
        %3609 = vmatpush2.msra.mxu0 0.0
        %3610 = vmatprep.subr.mxu0 0.0
        %3611 = vmatpush2.msra.mxu0 0.0
        %3612 = vmatprep.subr.mxu0 0.0
        %3613 = vmatpush2.msra.mxu0 0.0
        %3614 = vmatprep.subr.mxu0 0.0
        %3615 = vmatpush2.msra.mxu0 0.0
        %3616 = vmatprep.subr.mxu0 0.0
        %3617 = vmatpush2.msra.mxu0 0.0
        %3618 = vmatprep.subr.mxu0 0.0
        %3619 = vmatpush2.msra.mxu0 0.0
        %3620 = vmatprep.mubr.f32.mxu0 0.0
        %3621 = vmatmul.mubr.f32.gmra.mxu0 %v3551
        %v3622 = vpop.f32.mrf.mxu0
        %v3623 = vadd.f32 0.0, %v3622
        %v3624 = vpop.f32.mrf.mxu0
        %3625 = vdwg.mxu0
        %v3627 = vsel %vm3352, %v3396, 0
        %v3630 = vsel %vm3400, %v3035, 0
        %3632 = vmatprep.subr.mxu0 0.0
        %3633 = vmatpush1.msra.mxu0 0.0
        %3634 = vmatprep.subr.mxu0 0.0
        %3635 = vmatpush1.msra.mxu0 0.0
        %3636 = vmatprep.subr.mxu0 0.0
        %3637 = vmatpush1.msra.mxu0 0.0
        %3638 = vmatprep.subr.mxu0 0.0
        %3639 = vmatpush1.msra.mxu0 0.0
        %3640 = vmatprep.subr.mxu0 0.0
        %3641 = vmatpush1.msra.mxu0 0.0
        %3642 = vmatprep.subr.mxu0 0.0
        %3643 = vmatpush1.msra.mxu0 0.0
        %3644 = vmatprep.subr.mxu0 0.0
        %3645 = vmatpush1.msra.mxu0 0.0
        %3646 = vmatprep.subr.mxu0 0.0
        %3647 = vmatpush1.msra.mxu0 0.0
        %3648 = vmatprep.subr.mxu0 0.0
        %3649 = vmatpush1.msra.mxu0 0.0
        %3650 = vmatprep.subr.mxu0 0.0
        %3651 = vmatpush1.msra.mxu0 0.0
        %3652 = vmatprep.subr.mxu0 0.0
        %3653 = vmatpush1.msra.mxu0 0.0
        %3654 = vmatprep.subr.mxu0 0.0
        %3655 = vmatpush1.msra.mxu0 0.0
        %3656 = vmatprep.subr.mxu0 0.0
        %3657 = vmatpush1.msra.mxu0 0.0
        %3658 = vmatprep.subr.mxu0 0.0
        %3659 = vmatpush1.msra.mxu0 0.0
        %3660 = vmatprep.subr.mxu0 0.0
        %3661 = vmatpush1.msra.mxu0 %v3630
        %3662 = vmatprep.subr.mxu0 0.0
        %3663 = vmatpush1.msra.mxu0 %v3001
        %3664 = vmatprep.subr.mxu0 0.0
        %3665 = vmatpush2.msra.mxu0 0.0
        %3666 = vmatprep.subr.mxu0 0.0
        %3667 = vmatpush2.msra.mxu0 0.0
        %3668 = vmatprep.subr.mxu0 0.0
        %3669 = vmatpush2.msra.mxu0 0.0
        %3670 = vmatprep.subr.mxu0 0.0
        %3671 = vmatpush2.msra.mxu0 0.0
        %3672 = vmatprep.subr.mxu0 0.0
        %3673 = vmatpush2.msra.mxu0 0.0
        %3674 = vmatprep.subr.mxu0 0.0
        %3675 = vmatpush2.msra.mxu0 0.0
        %3676 = vmatprep.subr.mxu0 0.0
        %3677 = vmatpush2.msra.mxu0 0.0
        %3678 = vmatprep.subr.mxu0 0.0
        %3679 = vmatpush2.msra.mxu0 0.0
        %3680 = vmatprep.subr.mxu0 0.0
        %3681 = vmatpush2.msra.mxu0 0.0
        %3682 = vmatprep.subr.mxu0 0.0
        %3683 = vmatpush2.msra.mxu0 0.0
        %3684 = vmatprep.subr.mxu0 0.0
        %3685 = vmatpush2.msra.mxu0 0.0
        %3686 = vmatprep.subr.mxu0 0.0
        %3687 = vmatpush2.msra.mxu0 0.0
        %3688 = vmatprep.subr.mxu0 0.0
        %3689 = vmatpush2.msra.mxu0 0.0
        %3690 = vmatprep.subr.mxu0 0.0
        %3691 = vmatpush2.msra.mxu0 0.0
        %3692 = vmatprep.subr.mxu0 0.0
        %3693 = vmatpush2.msra.mxu0 0.0
        %3694 = vmatprep.subr.mxu0 0.0
        %3695 = vmatpush2.msra.mxu0 0.0
        %3696 = vmatprep.mubr.f32.mxu0 0.0
        %3697 = vmatmul.mubr.f32.gmra.mxu0 %v3627
        %v3698 = vpop.f32.mrf.mxu0
        %v3699 = vadd.f32 0.0, %v3698
        %v3700 = vpop.f32.mrf.mxu0
        %3701 = vdwg.mxu0
        %v3702 = vcombine.low %v3471, %v3623
        %v3703 = vcombine.high %v3471, %v3623
        %v3705 = vunpack.c.l.s4 1983009808
        %v3706 = vunpack.c.0.s8 %v3705
        %v3707 = vlaneseq
        %v3708 = vshrl.u32 %v3707, 7
        %v3709 = vsub.s32 %v3706, %v3708
        %v3710 = vrot.slane %v3702, %v3709
        %v3712 = vunpack.c.l.s4 1983009808
        %v3713 = vunpack.c.0.s8 %v3712
        %v3714 = vlaneseq
        %v3715 = vshrl.u32 %v3714, 7
        %v3716 = vsub.s32 %v3713, %v3715
        %v3717 = vrot.slane %v3703, %v3716
        %v3718 = vcombine.low %v3547, %v3699
        %v3719 = vcombine.high %v3547, %v3699
        %v3721 = vunpack.c.l.s4 1983009808
        %v3722 = vunpack.c.0.s8 %v3721
        %v3723 = vlaneseq
        %v3724 = vshrl.u32 %v3723, 7
        %v3725 = vsub.s32 %v3722, %v3724
        %v3726 = vrot.slane %v3718, %v3725
        %v3728 = vunpack.c.l.s4 1983009808
        %v3729 = vunpack.c.0.s8 %v3728
        %v3730 = vlaneseq
        %v3731 = vshrl.u32 %v3730, 7
        %v3732 = vsub.s32 %v3729, %v3731
        %v3733 = vrot.slane %v3719, %v3732
        %v3734 = vcombine.low %v3710, %v3726
        %v3735 = vcombine.high %v3710, %v3726
        %v3737 = vunpack.c.l.s4 1934713408
        %v3738 = vunpack.c.0.s8 %v3737
        %v3739 = vlaneseq
        %v3740 = vshrl.u32 %v3739, 7
        %v3741 = vsub.s32 %v3738, %v3740
        %v3742 = vrot.slane %v3734, %v3741
        %v3744 = vunpack.c.l.s4 1934713408
        %v3745 = vunpack.c.0.s8 %v3744
        %v3746 = vlaneseq
        %v3747 = vshrl.u32 %v3746, 7
        %v3748 = vsub.s32 %v3745, %v3747
        %v3749 = vrot.slane %v3735, %v3748
        %v3750 = vcombine.low %v3717, %v3733
        %v3751 = vcombine.high %v3717, %v3733
        %v3753 = vunpack.c.l.s4 1934713408
        %v3754 = vunpack.c.0.s8 %v3753
        %v3755 = vlaneseq
        %v3756 = vshrl.u32 %v3755, 7
        %v3757 = vsub.s32 %v3754, %v3756
        %v3758 = vrot.slane %v3750, %v3757
        %v3760 = vunpack.c.l.s4 1934713408
        %v3761 = vunpack.c.0.s8 %v3760
        %v3762 = vlaneseq
        %v3763 = vshrl.u32 %v3762, 7
        %v3764 = vsub.s32 %v3761, %v3763
        %v3765 = vrot.slane %v3751, %v3764
        %v3766 = vcombine.high %v3742, 0.0
        %v3767 = vcombine.high %v3749, 0.0
        %v3768 = vcombine.high %v3758, 0.0
        %v3769 = vcombine.high %v3765, 0.0
        %v3770 = vcombine.low %v3742, %v3749
        %v3772 = vunpack.c.l.s4 1983009808
        %v3773 = vunpack.c.0.s8 %v3772
        %v3774 = vlaneseq
        %v3775 = vshrl.u32 %v3774, 7
        %v3776 = vsub.s32 %v3773, %v3775
        %v3777 = vrot.slane %v3770, %v3776
        %v3778 = vcombine.low %v3766, %v3767
        %v3780 = vunpack.c.l.s4 1983009808
        %v3781 = vunpack.c.0.s8 %v3780
        %v3782 = vlaneseq
        %v3783 = vshrl.u32 %v3782, 7
        %v3784 = vsub.s32 %v3781, %v3783
        %v3785 = vrot.slane %v3778, %v3784
        %v3786 = vcombine.low %v3758, %v3765
        %v3788 = vunpack.c.l.s4 1983009808
        %v3789 = vunpack.c.0.s8 %v3788
        %v3790 = vlaneseq
        %v3791 = vshrl.u32 %v3790, 7
        %v3792 = vsub.s32 %v3789, %v3791
        %v3793 = vrot.slane %v3786, %v3792
        %v3794 = vcombine.low %v3768, %v3769
        %v3796 = vunpack.c.l.s4 1983009808
        %v3797 = vunpack.c.0.s8 %v3796
        %v3798 = vlaneseq
        %v3799 = vshrl.u32 %v3798, 7
        %v3800 = vsub.s32 %v3797, %v3799
        %v3801 = vrot.slane %v3794, %v3800
        %v3802 = vcombine.low %v3777, %v3785
        %v3803 = vcombine.high %v3777, %v3785
        %v3805 = vunpack.c.l.s4 1934713408
        %v3806 = vunpack.c.0.s8 %v3805
        %v3807 = vlaneseq
        %v3808 = vshrl.u32 %v3807, 7
        %v3809 = vsub.s32 %v3806, %v3808
        %v3810 = vrot.slane %v3802, %v3809
        %v3812 = vunpack.c.l.s4 1934713408
        %v3813 = vunpack.c.0.s8 %v3812
        %v3814 = vlaneseq
        %v3815 = vshrl.u32 %v3814, 7
        %v3816 = vsub.s32 %v3813, %v3815
        %v3817 = vrot.slane %v3803, %v3816
        %v3818 = vcombine.low %v3793, %v3801
        %v3819 = vcombine.high %v3793, %v3801
        %v3821 = vunpack.c.l.s4 1934713408
        %v3822 = vunpack.c.0.s8 %v3821
        %v3823 = vlaneseq
        %v3824 = vshrl.u32 %v3823, 7
        %v3825 = vsub.s32 %v3822, %v3824
        %v3826 = vrot.slane %v3818, %v3825
        %v3828 = vunpack.c.l.s4 1934713408
        %v3829 = vunpack.c.0.s8 %v3828
        %v3830 = vlaneseq
        %v3831 = vshrl.u32 %v3830, 7
        %v3832 = vsub.s32 %v3829, %v3831
        %v3833 = vrot.slane %v3819, %v3832
        %v3834 = vcombine.low %v3810, %v3826
        %v3835 = vcombine.high %v3810, %v3826
        %v3836 = vcombine.low %v3817, %v3833
        %v3837 = vcombine.high %v3817, %v3833
        %3839 = vrot.lane.b32.xlu0 %v3835, 8
        %v3840 = vpop.permute.xlu0 %3839
        %3843 = vrot.lane.b32.xlu0 %v3836, 16
        %v3844 = vpop.permute.xlu0 %3843
        %3847 = vrot.lane.b32.xlu0 %v3837, 24
        %v3848 = vpop.permute.xlu0 %3847
        %v3850 = vsel %vm1285, %v3834, %v3840
        %v3851 = vsel %vm2075, %v3850, %v3844
        %v3852 = vsel %vm2077, %v3851, %v3848
        %v3853 = vld [vmem:[%s739] sm:$0x1]
        %3854 = vrot.lane.b32.xlu0 %v2437, 96
        %v3855 = vpop.permute.xlu0 %3854
        %3856 = vrot.lane.b32.xlu0 %v2440, 96
        %v3857 = vpop.permute.xlu0 %3856
        %3858 = vrot.lane.b32.xlu0 %v2443, 96
        %v3859 = vpop.permute.xlu0 %3858
        %3860 = vrot.lane.b32.xlu0 %v2446, 96
        %v3861 = vpop.permute.xlu0 %3860
        %v3866 = vcombine.low %v3855, %v3859
        %v3867 = vcombine.high %v3855, %v3859
        %v3869 = vunpack.c.l.s4 1983009808
        %v3870 = vunpack.c.0.s8 %v3869
        %v3871 = vlaneseq
        %v3872 = vshrl.u32 %v3871, 7
        %v3873 = vsub.s32 %v3870, %v3872
        %v3874 = vrot.slane %v3866, %v3873
        %v3876 = vunpack.c.l.s4 1983009808
        %v3877 = vunpack.c.0.s8 %v3876
        %v3878 = vlaneseq
        %v3879 = vshrl.u32 %v3878, 7
        %v3880 = vsub.s32 %v3877, %v3879
        %v3881 = vrot.slane %v3867, %v3880
        %v3882 = vcombine.low %v3857, %v3861
        %v3883 = vcombine.high %v3857, %v3861
        %v3885 = vunpack.c.l.s4 1983009808
        %v3886 = vunpack.c.0.s8 %v3885
        %v3887 = vlaneseq
        %v3888 = vshrl.u32 %v3887, 7
        %v3889 = vsub.s32 %v3886, %v3888
        %v3890 = vrot.slane %v3882, %v3889
        %v3892 = vunpack.c.l.s4 1983009808
        %v3893 = vunpack.c.0.s8 %v3892
        %v3894 = vlaneseq
        %v3895 = vshrl.u32 %v3894, 7
        %v3896 = vsub.s32 %v3893, %v3895
        %v3897 = vrot.slane %v3883, %v3896
        %v3898 = vcombine.low %v3874, %v3890
        %v3899 = vcombine.high %v3874, %v3890
        %v3901 = vunpack.c.l.s4 1934713408
        %v3902 = vunpack.c.0.s8 %v3901
        %v3903 = vlaneseq
        %v3904 = vshrl.u32 %v3903, 7
        %v3905 = vsub.s32 %v3902, %v3904
        %v3906 = vrot.slane %v3898, %v3905
        %v3908 = vunpack.c.l.s4 1934713408
        %v3909 = vunpack.c.0.s8 %v3908
        %v3910 = vlaneseq
        %v3911 = vshrl.u32 %v3910, 7
        %v3912 = vsub.s32 %v3909, %v3911
        %v3913 = vrot.slane %v3899, %v3912
        %v3914 = vcombine.low %v3881, %v3897
        %v3915 = vcombine.high %v3881, %v3897
        %v3917 = vunpack.c.l.s4 1934713408
        %v3918 = vunpack.c.0.s8 %v3917
        %v3919 = vlaneseq
        %v3920 = vshrl.u32 %v3919, 7
        %v3921 = vsub.s32 %v3918, %v3920
        %v3922 = vrot.slane %v3914, %v3921
        %v3924 = vunpack.c.l.s4 1934713408
        %v3925 = vunpack.c.0.s8 %v3924
        %v3926 = vlaneseq
        %v3927 = vshrl.u32 %v3926, 7
        %v3928 = vsub.s32 %v3925, %v3927
        %v3929 = vrot.slane %v3915, %v3928
        %v3930 = vcombine.high %v3906, 0.0
        %v3931 = vcombine.high %v3913, 0.0
        %v3932 = vcombine.high %v3922, 0.0
        %v3933 = vcombine.high %v3929, 0.0
        %v3934 = vcombine.low %v3906, %v3913
        %v3936 = vunpack.c.l.s4 1983009808
        %v3937 = vunpack.c.0.s8 %v3936
        %v3938 = vlaneseq
        %v3939 = vshrl.u32 %v3938, 7
        %v3940 = vsub.s32 %v3937, %v3939
        %v3941 = vrot.slane %v3934, %v3940
        %v3942 = vcombine.low %v3930, %v3931
        %v3944 = vunpack.c.l.s4 1983009808
        %v3945 = vunpack.c.0.s8 %v3944
        %v3946 = vlaneseq
        %v3947 = vshrl.u32 %v3946, 7
        %v3948 = vsub.s32 %v3945, %v3947
        %v3949 = vrot.slane %v3942, %v3948
        %v3950 = vcombine.low %v3922, %v3929
        %v3952 = vunpack.c.l.s4 1983009808
        %v3953 = vunpack.c.0.s8 %v3952
        %v3954 = vlaneseq
        %v3955 = vshrl.u32 %v3954, 7
        %v3956 = vsub.s32 %v3953, %v3955
        %v3957 = vrot.slane %v3950, %v3956
        %v3958 = vcombine.low %v3932, %v3933
        %v3960 = vunpack.c.l.s4 1983009808
        %v3961 = vunpack.c.0.s8 %v3960
        %v3962 = vlaneseq
        %v3963 = vshrl.u32 %v3962, 7
        %v3964 = vsub.s32 %v3961, %v3963
        %v3965 = vrot.slane %v3958, %v3964
        %v3966 = vcombine.low %v3941, %v3949
        %v3967 = vcombine.high %v3941, %v3949
        %v3969 = vunpack.c.l.s4 1934713408
        %v3970 = vunpack.c.0.s8 %v3969
        %v3971 = vlaneseq
        %v3972 = vshrl.u32 %v3971, 7
        %v3973 = vsub.s32 %v3970, %v3972
        %v3974 = vrot.slane %v3966, %v3973
        %v3976 = vunpack.c.l.s4 1934713408
        %v3977 = vunpack.c.0.s8 %v3976
        %v3978 = vlaneseq
        %v3979 = vshrl.u32 %v3978, 7
        %v3980 = vsub.s32 %v3977, %v3979
        %v3981 = vrot.slane %v3967, %v3980
        %v3982 = vcombine.low %v3957, %v3965
        %v3983 = vcombine.high %v3957, %v3965
        %v3985 = vunpack.c.l.s4 1934713408
        %v3986 = vunpack.c.0.s8 %v3985
        %v3987 = vlaneseq
        %v3988 = vshrl.u32 %v3987, 7
        %v3989 = vsub.s32 %v3986, %v3988
        %v3990 = vrot.slane %v3982, %v3989
        %v3992 = vunpack.c.l.s4 1934713408
        %v3993 = vunpack.c.0.s8 %v3992
        %v3994 = vlaneseq
        %v3995 = vshrl.u32 %v3994, 7
        %v3996 = vsub.s32 %v3993, %v3995
        %v3997 = vrot.slane %v3983, %v3996
        %v3998 = vcombine.low %v3974, %v3990
        %v3999 = vcombine.high %v3974, %v3990
        %v4000 = vcombine.low %v3981, %v3997
        %v4001 = vcombine.high %v3981, %v3997
        %4004 = vrot.lane.b32.xlu0 %v2429, 120
        %v4005 = vpop.permute.xlu0 %4004
        %4006 = vrot.lane.b32.xlu0 %v2434, 120
        %v4007 = vpop.permute.xlu0 %4006
        %4010 = vrot.lane.b32.xlu0 %v2429, 112
        %v4011 = vpop.permute.xlu0 %4010
        %4012 = vrot.lane.b32.xlu0 %v2434, 112
        %v4013 = vpop.permute.xlu0 %4012
        %4016 = vrot.lane.b32.xlu0 %v2429, 104
        %v4017 = vpop.permute.xlu0 %4016
        %4018 = vrot.lane.b32.xlu0 %v2434, 104
        %v4019 = vpop.permute.xlu0 %4018
        %v4022 = vcombine.low %v2429, %v4011
        %v4023 = vcombine.high %v2429, %v4011
        %v4025 = vunpack.c.l.s4 1983009808
        %v4026 = vunpack.c.0.s8 %v4025
        %v4027 = vlaneseq
        %v4028 = vshrl.u32 %v4027, 7
        %v4029 = vsub.s32 %v4026, %v4028
        %v4030 = vrot.slane %v4022, %v4029
        %v4032 = vunpack.c.l.s4 1983009808
        %v4033 = vunpack.c.0.s8 %v4032
        %v4034 = vlaneseq
        %v4035 = vshrl.u32 %v4034, 7
        %v4036 = vsub.s32 %v4033, %v4035
        %v4037 = vrot.slane %v4023, %v4036
        %v4038 = vcombine.low %v4005, %v4017
        %v4039 = vcombine.high %v4005, %v4017
        %v4041 = vunpack.c.l.s4 1983009808
        %v4042 = vunpack.c.0.s8 %v4041
        %v4043 = vlaneseq
        %v4044 = vshrl.u32 %v4043, 7
        %v4045 = vsub.s32 %v4042, %v4044
        %v4046 = vrot.slane %v4038, %v4045
        %v4048 = vunpack.c.l.s4 1983009808
        %v4049 = vunpack.c.0.s8 %v4048
        %v4050 = vlaneseq
        %v4051 = vshrl.u32 %v4050, 7
        %v4052 = vsub.s32 %v4049, %v4051
        %v4053 = vrot.slane %v4039, %v4052
        %v4054 = vcombine.low %v4030, %v4046
        %v4055 = vcombine.high %v4030, %v4046
        %v4057 = vunpack.c.l.s4 1934713408
        %v4058 = vunpack.c.0.s8 %v4057
        %v4059 = vlaneseq
        %v4060 = vshrl.u32 %v4059, 7
        %v4061 = vsub.s32 %v4058, %v4060
        %v4062 = vrot.slane %v4054, %v4061
        %v4064 = vunpack.c.l.s4 1934713408
        %v4065 = vunpack.c.0.s8 %v4064
        %v4066 = vlaneseq
        %v4067 = vshrl.u32 %v4066, 7
        %v4068 = vsub.s32 %v4065, %v4067
        %v4069 = vrot.slane %v4055, %v4068
        %v4070 = vcombine.low %v4037, %v4053
        %v4071 = vcombine.high %v4037, %v4053
        %v4073 = vunpack.c.l.s4 1934713408
        %v4074 = vunpack.c.0.s8 %v4073
        %v4075 = vlaneseq
        %v4076 = vshrl.u32 %v4075, 7
        %v4077 = vsub.s32 %v4074, %v4076
        %v4078 = vrot.slane %v4070, %v4077
        %v4080 = vunpack.c.l.s4 1934713408
        %v4081 = vunpack.c.0.s8 %v4080
        %v4082 = vlaneseq
        %v4083 = vshrl.u32 %v4082, 7
        %v4084 = vsub.s32 %v4081, %v4083
        %v4085 = vrot.slane %v4071, %v4084
        %v4086 = vcombine.high %v4062, 0.0
        %v4087 = vcombine.high %v4069, 0.0
        %v4088 = vcombine.high %v4078, 0.0
        %v4089 = vcombine.high %v4085, 0.0
        %v4090 = vcombine.low %v2434, %v4013
        %v4092 = vunpack.c.l.s4 1983009808
        %v4093 = vunpack.c.0.s8 %v4092
        %v4094 = vlaneseq
        %v4095 = vshrl.u32 %v4094, 7
        %v4096 = vsub.s32 %v4093, %v4095
        %v4097 = vrot.slane %v4090, %v4096
        %v4098 = vcombine.low %v4007, %v4019
        %v4100 = vunpack.c.l.s4 1983009808
        %v4101 = vunpack.c.0.s8 %v4100
        %v4102 = vlaneseq
        %v4103 = vshrl.u32 %v4102, 7
        %v4104 = vsub.s32 %v4101, %v4103
        %v4105 = vrot.slane %v4098, %v4104
        %v4106 = vcombine.low %v4097, %v4105
        %v4108 = vunpack.c.l.s4 1934713408
        %v4109 = vunpack.c.0.s8 %v4108
        %v4110 = vlaneseq
        %v4111 = vshrl.u32 %v4110, 7
        %v4112 = vsub.s32 %v4109, %v4111
        %v4113 = vrot.slane %v4106, %v4112
        %v4114 = vcombine.low %v4062, %v4069
        %v4116 = vunpack.c.l.s4 1983009808
        %v4117 = vunpack.c.0.s8 %v4116
        %v4118 = vlaneseq
        %v4119 = vshrl.u32 %v4118, 7
        %v4120 = vsub.s32 %v4117, %v4119
        %v4121 = vrot.slane %v4114, %v4120
        %v4122 = vcombine.low %v4086, %v4087
        %v4124 = vunpack.c.l.s4 1983009808
        %v4125 = vunpack.c.0.s8 %v4124
        %v4126 = vlaneseq
        %v4127 = vshrl.u32 %v4126, 7
        %v4128 = vsub.s32 %v4125, %v4127
        %v4129 = vrot.slane %v4122, %v4128
        %v4130 = vcombine.low %v4078, %v4085
        %v4132 = vunpack.c.l.s4 1983009808
        %v4133 = vunpack.c.0.s8 %v4132
        %v4134 = vlaneseq
        %v4135 = vshrl.u32 %v4134, 7
        %v4136 = vsub.s32 %v4133, %v4135
        %v4137 = vrot.slane %v4130, %v4136
        %v4138 = vcombine.low %v4088, %v4089
        %v4140 = vunpack.c.l.s4 1983009808
        %v4141 = vunpack.c.0.s8 %v4140
        %v4142 = vlaneseq
        %v4143 = vshrl.u32 %v4142, 7
        %v4144 = vsub.s32 %v4141, %v4143
        %v4145 = vrot.slane %v4138, %v4144
        %v4146 = vcombine.low %v4121, %v4129
        %v4147 = vcombine.high %v4121, %v4129
        %v4149 = vunpack.c.l.s4 1934713408
        %v4150 = vunpack.c.0.s8 %v4149
        %v4151 = vlaneseq
        %v4152 = vshrl.u32 %v4151, 7
        %v4153 = vsub.s32 %v4150, %v4152
        %v4154 = vrot.slane %v4146, %v4153
        %v4156 = vunpack.c.l.s4 1934713408
        %v4157 = vunpack.c.0.s8 %v4156
        %v4158 = vlaneseq
        %v4159 = vshrl.u32 %v4158, 7
        %v4160 = vsub.s32 %v4157, %v4159
        %v4161 = vrot.slane %v4147, %v4160
        %v4162 = vcombine.low %v4137, %v4145
        %v4163 = vcombine.high %v4137, %v4145
        %v4165 = vunpack.c.l.s4 1934713408
        %v4166 = vunpack.c.0.s8 %v4165
        %v4167 = vlaneseq
        %v4168 = vshrl.u32 %v4167, 7
        %v4169 = vsub.s32 %v4166, %v4168
        %v4170 = vrot.slane %v4162, %v4169
        %v4172 = vunpack.c.l.s4 1934713408
        %v4173 = vunpack.c.0.s8 %v4172
        %v4174 = vlaneseq
        %v4175 = vshrl.u32 %v4174, 7
        %v4176 = vsub.s32 %v4173, %v4175
        %v4177 = vrot.slane %v4163, %v4176
        %v4178 = vcombine.low %v4154, %v4170
        %v4179 = vcombine.high %v4154, %v4170
        %v4180 = vcombine.low %v4161, %v4177
        %v4181 = vcombine.high %v4161, %v4177
        %v4183 = vunpack.c.l.s4 1983009808
        %v4184 = vunpack.c.0.s8 %v4183
        %v4185 = vlaneseq
        %v4186 = vshrl.u32 %v4185, 7
        %v4187 = vsub.s32 %v4184, %v4186
        %v4188 = vrot.slane %v4113, %v4187
        %v4189 = vcombine.high %v4113, 0.0
        %v4191 = vunpack.c.l.s4 1983009808
        %v4192 = vunpack.c.0.s8 %v4191
        %v4193 = vlaneseq
        %v4194 = vshrl.u32 %v4193, 7
        %v4195 = vsub.s32 %v4192, %v4194
        %v4196 = vrot.slane %v4189, %v4195
        %v4197 = vcombine.low %v4188, %v4196
        %v4198 = vcombine.high %v4188, %v4196
        %v4200 = vunpack.c.l.s4 1934713408
        %v4201 = vunpack.c.0.s8 %v4200
        %v4202 = vlaneseq
        %v4203 = vshrl.u32 %v4202, 7
        %v4204 = vsub.s32 %v4201, %v4203
        %v4205 = vrot.slane %v4197, %v4204
        %v4207 = vunpack.c.l.s4 1934713408
        %v4208 = vunpack.c.0.s8 %v4207
        %v4209 = vlaneseq
        %v4210 = vshrl.u32 %v4209, 7
        %v4211 = vsub.s32 %v4208, %v4210
        %v4212 = vrot.slane %v4198, %v4211
        %v4213 = vcombine.high %v4205, 0.0
        %v4214 = vcombine.high %v4212, 0.0
        %4215 = vrot.lane.b32.xlu0 %v2429, 96
        %v4216 = vpop.permute.xlu0 %4215
        %4217 = vrot.lane.b32.xlu0 %v2434, 96
        %v4218 = vpop.permute.xlu0 %4217
        %4219 = vrot.lane.b32.xlu0 %v4005, 96
        %v4220 = vpop.permute.xlu0 %4219
        %4221 = vrot.lane.b32.xlu0 %v4007, 96
        %v4222 = vpop.permute.xlu0 %4221
        %4223 = vrot.lane.b32.xlu0 %v4011, 96
        %v4224 = vpop.permute.xlu0 %4223
        %4225 = vrot.lane.b32.xlu0 %v4013, 96
        %v4226 = vpop.permute.xlu0 %4225
        %4227 = vrot.lane.b32.xlu0 %v4017, 96
        %v4228 = vpop.permute.xlu0 %4227
        %4229 = vrot.lane.b32.xlu0 %v4019, 96
        %v4230 = vpop.permute.xlu0 %4229
        %v4239 = vcombine.low %v4216, %v4224
        %v4240 = vcombine.high %v4216, %v4224
        %v4242 = vunpack.c.l.s4 1983009808
        %v4243 = vunpack.c.0.s8 %v4242
        %v4244 = vlaneseq
        %v4245 = vshrl.u32 %v4244, 7
        %v4246 = vsub.s32 %v4243, %v4245
        %v4247 = vrot.slane %v4239, %v4246
        %v4249 = vunpack.c.l.s4 1983009808
        %v4250 = vunpack.c.0.s8 %v4249
        %v4251 = vlaneseq
        %v4252 = vshrl.u32 %v4251, 7
        %v4253 = vsub.s32 %v4250, %v4252
        %v4254 = vrot.slane %v4240, %v4253
        %v4255 = vcombine.low %v4220, %v4228
        %v4256 = vcombine.high %v4220, %v4228
        %v4258 = vunpack.c.l.s4 1983009808
        %v4259 = vunpack.c.0.s8 %v4258
        %v4260 = vlaneseq
        %v4261 = vshrl.u32 %v4260, 7
        %v4262 = vsub.s32 %v4259, %v4261
        %v4263 = vrot.slane %v4255, %v4262
        %v4265 = vunpack.c.l.s4 1983009808
        %v4266 = vunpack.c.0.s8 %v4265
        %v4267 = vlaneseq
        %v4268 = vshrl.u32 %v4267, 7
        %v4269 = vsub.s32 %v4266, %v4268
        %v4270 = vrot.slane %v4256, %v4269
        %v4271 = vcombine.low %v4247, %v4263
        %v4272 = vcombine.high %v4247, %v4263
        %v4274 = vunpack.c.l.s4 1934713408
        %v4275 = vunpack.c.0.s8 %v4274
        %v4276 = vlaneseq
        %v4277 = vshrl.u32 %v4276, 7
        %v4278 = vsub.s32 %v4275, %v4277
        %v4279 = vrot.slane %v4271, %v4278
        %v4281 = vunpack.c.l.s4 1934713408
        %v4282 = vunpack.c.0.s8 %v4281
        %v4283 = vlaneseq
        %v4284 = vshrl.u32 %v4283, 7
        %v4285 = vsub.s32 %v4282, %v4284
        %v4286 = vrot.slane %v4272, %v4285
        %v4287 = vcombine.low %v4254, %v4270
        %v4288 = vcombine.high %v4254, %v4270
        %v4290 = vunpack.c.l.s4 1934713408
        %v4291 = vunpack.c.0.s8 %v4290
        %v4292 = vlaneseq
        %v4293 = vshrl.u32 %v4292, 7
        %v4294 = vsub.s32 %v4291, %v4293
        %v4295 = vrot.slane %v4287, %v4294
        %v4297 = vunpack.c.l.s4 1934713408
        %v4298 = vunpack.c.0.s8 %v4297
        %v4299 = vlaneseq
        %v4300 = vshrl.u32 %v4299, 7
        %v4301 = vsub.s32 %v4298, %v4300
        %v4302 = vrot.slane %v4288, %v4301
        %v4303 = vcombine.high %v4279, 0.0
        %v4304 = vcombine.high %v4286, 0.0
        %v4305 = vcombine.high %v4295, 0.0
        %v4306 = vcombine.high %v4302, 0.0
        %v4307 = vcombine.low %v4218, %v4226
        %v4309 = vunpack.c.l.s4 1983009808
        %v4310 = vunpack.c.0.s8 %v4309
        %v4311 = vlaneseq
        %v4312 = vshrl.u32 %v4311, 7
        %v4313 = vsub.s32 %v4310, %v4312
        %v4314 = vrot.slane %v4307, %v4313
        %v4315 = vcombine.low %v4222, %v4230
        %v4317 = vunpack.c.l.s4 1983009808
        %v4318 = vunpack.c.0.s8 %v4317
        %v4319 = vlaneseq
        %v4320 = vshrl.u32 %v4319, 7
        %v4321 = vsub.s32 %v4318, %v4320
        %v4322 = vrot.slane %v4315, %v4321
        %v4323 = vcombine.low %v4314, %v4322
        %v4325 = vunpack.c.l.s4 1934713408
        %v4326 = vunpack.c.0.s8 %v4325
        %v4327 = vlaneseq
        %v4328 = vshrl.u32 %v4327, 7
        %v4329 = vsub.s32 %v4326, %v4328
        %v4330 = vrot.slane %v4323, %v4329
        %v4331 = vcombine.low %v4279, %v4286
        %v4333 = vunpack.c.l.s4 1983009808
        %v4334 = vunpack.c.0.s8 %v4333
        %v4335 = vlaneseq
        %v4336 = vshrl.u32 %v4335, 7
        %v4337 = vsub.s32 %v4334, %v4336
        %v4338 = vrot.slane %v4331, %v4337
        %v4339 = vcombine.low %v4303, %v4304
        %v4341 = vunpack.c.l.s4 1983009808
        %v4342 = vunpack.c.0.s8 %v4341
        %v4343 = vlaneseq
        %v4344 = vshrl.u32 %v4343, 7
        %v4345 = vsub.s32 %v4342, %v4344
        %v4346 = vrot.slane %v4339, %v4345
        %v4347 = vcombine.low %v4295, %v4302
        %v4349 = vunpack.c.l.s4 1983009808
        %v4350 = vunpack.c.0.s8 %v4349
        %v4351 = vlaneseq
        %v4352 = vshrl.u32 %v4351, 7
        %v4353 = vsub.s32 %v4350, %v4352
        %v4354 = vrot.slane %v4347, %v4353
        %v4355 = vcombine.low %v4305, %v4306
        %v4357 = vunpack.c.l.s4 1983009808
        %v4358 = vunpack.c.0.s8 %v4357
        %v4359 = vlaneseq
        %v4360 = vshrl.u32 %v4359, 7
        %v4361 = vsub.s32 %v4358, %v4360
        %v4362 = vrot.slane %v4355, %v4361
        %v4363 = vcombine.low %v4338, %v4346
        %v4364 = vcombine.high %v4338, %v4346
        %v4366 = vunpack.c.l.s4 1934713408
        %v4367 = vunpack.c.0.s8 %v4366
        %v4368 = vlaneseq
        %v4369 = vshrl.u32 %v4368, 7
        %v4370 = vsub.s32 %v4367, %v4369
        %v4371 = vrot.slane %v4363, %v4370
        %v4373 = vunpack.c.l.s4 1934713408
        %v4374 = vunpack.c.0.s8 %v4373
        %v4375 = vlaneseq
        %v4376 = vshrl.u32 %v4375, 7
        %v4377 = vsub.s32 %v4374, %v4376
        %v4378 = vrot.slane %v4364, %v4377
        %v4379 = vcombine.low %v4354, %v4362
        %v4380 = vcombine.high %v4354, %v4362
        %v4382 = vunpack.c.l.s4 1934713408
        %v4383 = vunpack.c.0.s8 %v4382
        %v4384 = vlaneseq
        %v4385 = vshrl.u32 %v4384, 7
        %v4386 = vsub.s32 %v4383, %v4385
        %v4387 = vrot.slane %v4379, %v4386
        %v4389 = vunpack.c.l.s4 1934713408
        %v4390 = vunpack.c.0.s8 %v4389
        %v4391 = vlaneseq
        %v4392 = vshrl.u32 %v4391, 7
        %v4393 = vsub.s32 %v4390, %v4392
        %v4394 = vrot.slane %v4380, %v4393
        %v4395 = vcombine.low %v4371, %v4387
        %v4396 = vcombine.high %v4371, %v4387
        %v4397 = vcombine.low %v4378, %v4394
        %v4398 = vcombine.high %v4378, %v4394
        %v4400 = vunpack.c.l.s4 1983009808
        %v4401 = vunpack.c.0.s8 %v4400
        %v4402 = vlaneseq
        %v4403 = vshrl.u32 %v4402, 7
        %v4404 = vsub.s32 %v4401, %v4403
        %v4405 = vrot.slane %v4330, %v4404
        %v4406 = vcombine.high %v4330, 0.0
        %v4408 = vunpack.c.l.s4 1983009808
        %v4409 = vunpack.c.0.s8 %v4408
        %v4410 = vlaneseq
        %v4411 = vshrl.u32 %v4410, 7
        %v4412 = vsub.s32 %v4409, %v4411
        %v4413 = vrot.slane %v4406, %v4412
        %v4414 = vcombine.low %v4405, %v4413
        %v4415 = vcombine.high %v4405, %v4413
        %v4417 = vunpack.c.l.s4 1934713408
        %v4418 = vunpack.c.0.s8 %v4417
        %v4419 = vlaneseq
        %v4420 = vshrl.u32 %v4419, 7
        %v4421 = vsub.s32 %v4418, %v4420
        %v4422 = vrot.slane %v4414, %v4421
        %v4424 = vunpack.c.l.s4 1934713408
        %v4425 = vunpack.c.0.s8 %v4424
        %v4426 = vlaneseq
        %v4427 = vshrl.u32 %v4426, 7
        %v4428 = vsub.s32 %v4425, %v4427
        %v4429 = vrot.slane %v4415, %v4428
        %v4430 = vcombine.high %v4422, 0.0
        %v4431 = vcombine.high %v4429, 0.0
        %v4433 = vlaneseq
        %v4434 = vshrl.u32 %v4433, 7
        %v4435 = vsub.s32 0, %v4434
        %v4436 = vrot.slane %v3853, %v4435
        %v4439 = vsel %vm1285, %v3998, 0
        %v4442 = vsel %vm1285, %v4178, 0
        %v4445 = vsel %vm1285, %v4205, 0
        %4447 = vmatprep.subr.mxu0 0.0
        %4448 = vmatpush1.xpose.msra.mxu0 0.0
        %4449 = vmatprep.subr.mxu0 0.0
        %4450 = vmatpush1.xpose.msra.mxu0 0.0
        %4451 = vmatprep.subr.mxu0 0.0
        %4452 = vmatpush1.xpose.msra.mxu0 0.0
        %4453 = vmatprep.subr.mxu0 0.0
        %4454 = vmatpush1.xpose.msra.mxu0 0.0
        %4455 = vmatprep.subr.mxu0 0.0
        %4456 = vmatpush1.xpose.msra.mxu0 0.0
        %4457 = vmatprep.subr.mxu0 0.0
        %4458 = vmatpush1.xpose.msra.mxu0 0.0
        %4459 = vmatprep.subr.mxu0 0.0
        %4460 = vmatpush1.xpose.msra.mxu0 0.0
        %4461 = vmatprep.subr.mxu0 0.0
        %4462 = vmatpush1.xpose.msra.mxu0 0.0
        %4463 = vmatprep.subr.mxu0 0.0
        %4464 = vmatpush1.xpose.msra.mxu0 0.0
        %4465 = vmatprep.subr.mxu0 0.0
        %4466 = vmatpush1.xpose.msra.mxu0 0.0
        %4467 = vmatprep.subr.mxu0 0.0
        %4468 = vmatpush1.xpose.msra.mxu0 0.0
        %4469 = vmatprep.subr.mxu0 0.0
        %4470 = vmatpush1.xpose.msra.mxu0 0.0
        %4471 = vmatprep.subr.mxu0 0.0
        %4472 = vmatpush1.xpose.msra.mxu0 0.0
        %4473 = vmatprep.subr.mxu0 0.0
        %4474 = vmatpush1.xpose.msra.mxu0 0.0
        %4475 = vmatprep.subr.mxu0 0.0
        %4476 = vmatpush1.xpose.msra.mxu0 %v4445
        %4477 = vmatprep.subr.mxu0 0.0
        %4478 = vmatpush1.xpose.msra.mxu0 %v4442
        %4479 = vmatprep.subr.mxu0 0.0
        %4480 = vmatpush2.xpose.msra.mxu0 0.0
        %4481 = vmatprep.subr.mxu0 0.0
        %4482 = vmatpush2.xpose.msra.mxu0 0.0
        %4483 = vmatprep.subr.mxu0 0.0
        %4484 = vmatpush2.xpose.msra.mxu0 0.0
        %4485 = vmatprep.subr.mxu0 0.0
        %4486 = vmatpush2.xpose.msra.mxu0 0.0
        %4487 = vmatprep.subr.mxu0 0.0
        %4488 = vmatpush2.xpose.msra.mxu0 0.0
        %4489 = vmatprep.subr.mxu0 0.0
        %4490 = vmatpush2.xpose.msra.mxu0 0.0
        %4491 = vmatprep.subr.mxu0 0.0
        %4492 = vmatpush2.xpose.msra.mxu0 0.0
        %4493 = vmatprep.subr.mxu0 0.0
        %4494 = vmatpush2.xpose.msra.mxu0 0.0
        %4495 = vmatprep.subr.mxu0 0.0
        %4496 = vmatpush2.xpose.msra.mxu0 0.0
        %4497 = vmatprep.subr.mxu0 0.0
        %4498 = vmatpush2.xpose.msra.mxu0 0.0
        %4499 = vmatprep.subr.mxu0 0.0
        %4500 = vmatpush2.xpose.msra.mxu0 0.0
        %4501 = vmatprep.subr.mxu0 0.0
        %4502 = vmatpush2.xpose.msra.mxu0 0.0
        %4503 = vmatprep.subr.mxu0 0.0
        %4504 = vmatpush2.xpose.msra.mxu0 0.0
        %4505 = vmatprep.subr.mxu0 0.0
        %4506 = vmatpush2.xpose.msra.mxu0 0.0
        %4507 = vmatprep.subr.mxu0 0.0
        %4508 = vmatpush2.xpose.msra.mxu0 0.0
        %4509 = vmatprep.subr.mxu0 0.0
        %4510 = vmatpush2.xpose.msra.mxu0 0.0
        %4511 = vmatprep.mubr.f32.mxu0 0.0
        %4512 = vmatmul.mubr.f32.gmra.mxu0 %v4439
        %v4513 = vpop.f32.mrf.mxu0
        %v4514 = vadd.f32 %v4436, %v4513
        %v4515 = vpop.f32.mrf.mxu0
        %4516 = vdwg.mxu0
        %v4518 = vsel %vm1285, %v3999, 0
        %v4521 = vsel %vm1285, %v4179, 0
        %v4524 = vsel %vm1285, %v4213, 0
        %4526 = vmatprep.subr.mxu0 0.0
        %4527 = vmatpush1.xpose.msra.mxu0 0.0
        %4528 = vmatprep.subr.mxu0 0.0
        %4529 = vmatpush1.xpose.msra.mxu0 0.0
        %4530 = vmatprep.subr.mxu0 0.0
        %4531 = vmatpush1.xpose.msra.mxu0 0.0
        %4532 = vmatprep.subr.mxu0 0.0
        %4533 = vmatpush1.xpose.msra.mxu0 0.0
        %4534 = vmatprep.subr.mxu0 0.0
        %4535 = vmatpush1.xpose.msra.mxu0 0.0
        %4536 = vmatprep.subr.mxu0 0.0
        %4537 = vmatpush1.xpose.msra.mxu0 0.0
        %4538 = vmatprep.subr.mxu0 0.0
        %4539 = vmatpush1.xpose.msra.mxu0 0.0
        %4540 = vmatprep.subr.mxu0 0.0
        %4541 = vmatpush1.xpose.msra.mxu0 0.0
        %4542 = vmatprep.subr.mxu0 0.0
        %4543 = vmatpush1.xpose.msra.mxu0 0.0
        %4544 = vmatprep.subr.mxu0 0.0
        %4545 = vmatpush1.xpose.msra.mxu0 0.0
        %4546 = vmatprep.subr.mxu0 0.0
        %4547 = vmatpush1.xpose.msra.mxu0 0.0
        %4548 = vmatprep.subr.mxu0 0.0
        %4549 = vmatpush1.xpose.msra.mxu0 0.0
        %4550 = vmatprep.subr.mxu0 0.0
        %4551 = vmatpush1.xpose.msra.mxu0 0.0
        %4552 = vmatprep.subr.mxu0 0.0
        %4553 = vmatpush1.xpose.msra.mxu0 0.0
        %4554 = vmatprep.subr.mxu0 0.0
        %4555 = vmatpush1.xpose.msra.mxu0 %v4524
        %4556 = vmatprep.subr.mxu0 0.0
        %4557 = vmatpush1.xpose.msra.mxu0 %v4521
        %4558 = vmatprep.subr.mxu0 0.0
        %4559 = vmatpush2.xpose.msra.mxu0 0.0
        %4560 = vmatprep.subr.mxu0 0.0
        %4561 = vmatpush2.xpose.msra.mxu0 0.0
        %4562 = vmatprep.subr.mxu0 0.0
        %4563 = vmatpush2.xpose.msra.mxu0 0.0
        %4564 = vmatprep.subr.mxu0 0.0
        %4565 = vmatpush2.xpose.msra.mxu0 0.0
        %4566 = vmatprep.subr.mxu0 0.0
        %4567 = vmatpush2.xpose.msra.mxu0 0.0
        %4568 = vmatprep.subr.mxu0 0.0
        %4569 = vmatpush2.xpose.msra.mxu0 0.0
        %4570 = vmatprep.subr.mxu0 0.0
        %4571 = vmatpush2.xpose.msra.mxu0 0.0
        %4572 = vmatprep.subr.mxu0 0.0
        %4573 = vmatpush2.xpose.msra.mxu0 0.0
        %4574 = vmatprep.subr.mxu0 0.0
        %4575 = vmatpush2.xpose.msra.mxu0 0.0
        %4576 = vmatprep.subr.mxu0 0.0
        %4577 = vmatpush2.xpose.msra.mxu0 0.0
        %4578 = vmatprep.subr.mxu0 0.0
        %4579 = vmatpush2.xpose.msra.mxu0 0.0
        %4580 = vmatprep.subr.mxu0 0.0
        %4581 = vmatpush2.xpose.msra.mxu0 0.0
        %4582 = vmatprep.subr.mxu0 0.0
        %4583 = vmatpush2.xpose.msra.mxu0 0.0
        %4584 = vmatprep.subr.mxu0 0.0
        %4585 = vmatpush2.xpose.msra.mxu0 0.0
        %4586 = vmatprep.subr.mxu0 0.0
        %4587 = vmatpush2.xpose.msra.mxu0 0.0
        %4588 = vmatprep.subr.mxu0 0.0
        %4589 = vmatpush2.xpose.msra.mxu0 0.0
        %4590 = vmatprep.mubr.f32.mxu0 0.0
        %4591 = vmatmul.mubr.f32.gmra.mxu0 %v4518
        %v4592 = vpop.f32.mrf.mxu0
        %v4593 = vadd.f32 %v4436, %v4592
        %v4594 = vpop.f32.mrf.mxu0
        %4595 = vdwg.mxu0
        %v4597 = vsel %vm1285, %v4000, 0
        %v4600 = vsel %vm1285, %v4180, 0
        %v4603 = vsel %vm1285, %v4212, 0
        %4605 = vmatprep.subr.mxu0 0.0
        %4606 = vmatpush1.xpose.msra.mxu0 0.0
        %4607 = vmatprep.subr.mxu0 0.0
        %4608 = vmatpush1.xpose.msra.mxu0 0.0
        %4609 = vmatprep.subr.mxu0 0.0
        %4610 = vmatpush1.xpose.msra.mxu0 0.0
        %4611 = vmatprep.subr.mxu0 0.0
        %4612 = vmatpush1.xpose.msra.mxu0 0.0
        %4613 = vmatprep.subr.mxu0 0.0
        %4614 = vmatpush1.xpose.msra.mxu0 0.0
        %4615 = vmatprep.subr.mxu0 0.0
        %4616 = vmatpush1.xpose.msra.mxu0 0.0
        %4617 = vmatprep.subr.mxu0 0.0
        %4618 = vmatpush1.xpose.msra.mxu0 0.0
        %4619 = vmatprep.subr.mxu0 0.0
        %4620 = vmatpush1.xpose.msra.mxu0 0.0
        %4621 = vmatprep.subr.mxu0 0.0
        %4622 = vmatpush1.xpose.msra.mxu0 0.0
        %4623 = vmatprep.subr.mxu0 0.0
        %4624 = vmatpush1.xpose.msra.mxu0 0.0
        %4625 = vmatprep.subr.mxu0 0.0
        %4626 = vmatpush1.xpose.msra.mxu0 0.0
        %4627 = vmatprep.subr.mxu0 0.0
        %4628 = vmatpush1.xpose.msra.mxu0 0.0
        %4629 = vmatprep.subr.mxu0 0.0
        %4630 = vmatpush1.xpose.msra.mxu0 0.0
        %4631 = vmatprep.subr.mxu0 0.0
        %4632 = vmatpush1.xpose.msra.mxu0 0.0
        %4633 = vmatprep.subr.mxu0 0.0
        %4634 = vmatpush1.xpose.msra.mxu0 %v4603
        %4635 = vmatprep.subr.mxu0 0.0
        %4636 = vmatpush1.xpose.msra.mxu0 %v4600
        %4637 = vmatprep.subr.mxu0 0.0
        %4638 = vmatpush2.xpose.msra.mxu0 0.0
        %4639 = vmatprep.subr.mxu0 0.0
        %4640 = vmatpush2.xpose.msra.mxu0 0.0
        %4641 = vmatprep.subr.mxu0 0.0
        %4642 = vmatpush2.xpose.msra.mxu0 0.0
        %4643 = vmatprep.subr.mxu0 0.0
        %4644 = vmatpush2.xpose.msra.mxu0 0.0
        %4645 = vmatprep.subr.mxu0 0.0
        %4646 = vmatpush2.xpose.msra.mxu0 0.0
        %4647 = vmatprep.subr.mxu0 0.0
        %4648 = vmatpush2.xpose.msra.mxu0 0.0
        %4649 = vmatprep.subr.mxu0 0.0
        %4650 = vmatpush2.xpose.msra.mxu0 0.0
        %4651 = vmatprep.subr.mxu0 0.0
        %4652 = vmatpush2.xpose.msra.mxu0 0.0
        %4653 = vmatprep.subr.mxu0 0.0
        %4654 = vmatpush2.xpose.msra.mxu0 0.0
        %4655 = vmatprep.subr.mxu0 0.0
        %4656 = vmatpush2.xpose.msra.mxu0 0.0
        %4657 = vmatprep.subr.mxu0 0.0
        %4658 = vmatpush2.xpose.msra.mxu0 0.0
        %4659 = vmatprep.subr.mxu0 0.0
        %4660 = vmatpush2.xpose.msra.mxu0 0.0
        %4661 = vmatprep.subr.mxu0 0.0
        %4662 = vmatpush2.xpose.msra.mxu0 0.0
        %4663 = vmatprep.subr.mxu0 0.0
        %4664 = vmatpush2.xpose.msra.mxu0 0.0
        %4665 = vmatprep.subr.mxu0 0.0
        %4666 = vmatpush2.xpose.msra.mxu0 0.0
        %4667 = vmatprep.subr.mxu0 0.0
        %4668 = vmatpush2.xpose.msra.mxu0 0.0
        %4669 = vmatprep.mubr.f32.mxu0 0.0
        %4670 = vmatmul.mubr.f32.gmra.mxu0 %v4597
        %v4671 = vpop.f32.mrf.mxu0
        %v4672 = vadd.f32 %v4436, %v4671
        %v4673 = vpop.f32.mrf.mxu0
        %4674 = vdwg.mxu0
        %v4676 = vsel %vm1285, %v4001, 0
        %v4679 = vsel %vm1285, %v4181, 0
        %v4682 = vsel %vm1285, %v4214, 0
        %4684 = vmatprep.subr.mxu0 0.0
        %4685 = vmatpush1.xpose.msra.mxu0 0.0
        %4686 = vmatprep.subr.mxu0 0.0
        %4687 = vmatpush1.xpose.msra.mxu0 0.0
        %4688 = vmatprep.subr.mxu0 0.0
        %4689 = vmatpush1.xpose.msra.mxu0 0.0
        %4690 = vmatprep.subr.mxu0 0.0
        %4691 = vmatpush1.xpose.msra.mxu0 0.0
        %4692 = vmatprep.subr.mxu0 0.0
        %4693 = vmatpush1.xpose.msra.mxu0 0.0
        %4694 = vmatprep.subr.mxu0 0.0
        %4695 = vmatpush1.xpose.msra.mxu0 0.0
        %4696 = vmatprep.subr.mxu0 0.0
        %4697 = vmatpush1.xpose.msra.mxu0 0.0
        %4698 = vmatprep.subr.mxu0 0.0
        %4699 = vmatpush1.xpose.msra.mxu0 0.0
        %4700 = vmatprep.subr.mxu0 0.0
        %4701 = vmatpush1.xpose.msra.mxu0 0.0
        %4702 = vmatprep.subr.mxu0 0.0
        %4703 = vmatpush1.xpose.msra.mxu0 0.0
        %4704 = vmatprep.subr.mxu0 0.0
        %4705 = vmatpush1.xpose.msra.mxu0 0.0
        %4706 = vmatprep.subr.mxu0 0.0
        %4707 = vmatpush1.xpose.msra.mxu0 0.0
        %4708 = vmatprep.subr.mxu0 0.0
        %4709 = vmatpush1.xpose.msra.mxu0 0.0
        %4710 = vmatprep.subr.mxu0 0.0
        %4711 = vmatpush1.xpose.msra.mxu0 0.0
        %4712 = vmatprep.subr.mxu0 0.0
        %4713 = vmatpush1.xpose.msra.mxu0 %v4682
        %4714 = vmatprep.subr.mxu0 0.0
        %4715 = vmatpush1.xpose.msra.mxu0 %v4679
        %4716 = vmatprep.subr.mxu0 0.0
        %4717 = vmatpush2.xpose.msra.mxu0 0.0
        %4718 = vmatprep.subr.mxu0 0.0
        %4719 = vmatpush2.xpose.msra.mxu0 0.0
        %4720 = vmatprep.subr.mxu0 0.0
        %4721 = vmatpush2.xpose.msra.mxu0 0.0
        %4722 = vmatprep.subr.mxu0 0.0
        %4723 = vmatpush2.xpose.msra.mxu0 0.0
        %4724 = vmatprep.subr.mxu0 0.0
        %4725 = vmatpush2.xpose.msra.mxu0 0.0
        %4726 = vmatprep.subr.mxu0 0.0
        %4727 = vmatpush2.xpose.msra.mxu0 0.0
        %4728 = vmatprep.subr.mxu0 0.0
        %4729 = vmatpush2.xpose.msra.mxu0 0.0
        %4730 = vmatprep.subr.mxu0 0.0
        %4731 = vmatpush2.xpose.msra.mxu0 0.0
        %4732 = vmatprep.subr.mxu0 0.0
        %4733 = vmatpush2.xpose.msra.mxu0 0.0
        %4734 = vmatprep.subr.mxu0 0.0
        %4735 = vmatpush2.xpose.msra.mxu0 0.0
        %4736 = vmatprep.subr.mxu0 0.0
        %4737 = vmatpush2.xpose.msra.mxu0 0.0
        %4738 = vmatprep.subr.mxu0 0.0
        %4739 = vmatpush2.xpose.msra.mxu0 0.0
        %4740 = vmatprep.subr.mxu0 0.0
        %4741 = vmatpush2.xpose.msra.mxu0 0.0
        %4742 = vmatprep.subr.mxu0 0.0
        %4743 = vmatpush2.xpose.msra.mxu0 0.0
        %4744 = vmatprep.subr.mxu0 0.0
        %4745 = vmatpush2.xpose.msra.mxu0 0.0
        %4746 = vmatprep.subr.mxu0 0.0
        %4747 = vmatpush2.xpose.msra.mxu0 0.0
        %4748 = vmatprep.mubr.f32.mxu0 0.0
        %4749 = vmatmul.mubr.f32.gmra.mxu0 %v4676
        %v4750 = vpop.f32.mrf.mxu0
        %v4751 = vadd.f32 %v4436, %v4750
        %v4752 = vpop.f32.mrf.mxu0
        %4753 = vdwg.mxu0
        %vm4754 = vcmask 80896
        %v4755 = vsel %vm4754, %v4514, -inf
        %4756 = vmax.xlane.f32.xlu0 %v4755
        %v4757 = vpop.xlane.xlu0 %4756
        %v4758 = vsel %vm4754, %v4593, -inf
        %4759 = vmax.xlane.f32.xlu0 %v4758
        %v4760 = vpop.xlane.xlu0 %4759
        %v4761 = vsel %vm4754, %v4672, -inf
        %4762 = vmax.xlane.f32.xlu0 %v4761
        %v4763 = vpop.xlane.xlu0 %4762
        %v4764 = vsel %vm4754, %v4751, -inf
        %4765 = vmax.xlane.f32.xlu0 %v4764
        %v4766 = vpop.xlane.xlu0 %4765
        %v4767 = vsub.f32 %v4514, %v4757
        %v4768 = vsub.f32 %v4593, %v4760
        %v4769 = vsub.f32 %v4672, %v4763
        %v4770 = vsub.f32 %v4751, %v4766
        %v4771 = vmul.f32 %v4767, 1.442695
        %v4772 = vpow.pop %v4771
        %v4773 = vmul.f32 %v4768, 1.442695
        %v4774 = vpow.pop %v4773
        %v4775 = vmul.f32 %v4769, 1.442695
        %v4776 = vpow.pop %v4775
        %v4777 = vmul.f32 %v4770, 1.442695
        %v4778 = vpow.pop %v4777
        %v4779 = vsel %vm4754, %v4772, 0.0
        %4780 = vadd.xlane.f32.xlu0 %v4779
        %v4781 = vpop.xlane.xlu0 %4780
        %v4782 = vsel %vm4754, %v4774, 0.0
        %4783 = vadd.xlane.f32.xlu0 %v4782
        %v4784 = vpop.xlane.xlu0 %4783
        %v4785 = vsel %vm4754, %v4776, 0.0
        %4786 = vadd.xlane.f32.xlu0 %v4785
        %v4787 = vpop.xlane.xlu0 %4786
        %v4788 = vsel %vm4754, %v4778, 0.0
        %4789 = vadd.xlane.f32.xlu0 %v4788
        %v4790 = vpop.xlane.xlu0 %4789
        %v4791 = vrcp.pop %v4781
        %v4792 = vrcp.pop %v4784
        %v4793 = vrcp.pop %v4787
        %v4794 = vrcp.pop %v4790
        %v4795 = vmul.f32 %v4772, %v4791
        %v4796 = vmul.f32 %v4774, %v4792
        %v4797 = vmul.f32 %v4776, %v4793
        %v4798 = vmul.f32 %v4778, %v4794
        %v4800 = vsel %vm4754, %v4795, 0
        %vm4802 = vcmask 1041408
        %v4804 = vsel %vm4802, %v4422, 0
        %4806 = vmatprep.subr.mxu0 0.0
        %4807 = vmatpush1.msra.mxu0 0.0
        %4808 = vmatprep.subr.mxu0 0.0
        %4809 = vmatpush1.msra.mxu0 0.0
        %4810 = vmatprep.subr.mxu0 0.0
        %4811 = vmatpush1.msra.mxu0 0.0
        %4812 = vmatprep.subr.mxu0 0.0
        %4813 = vmatpush1.msra.mxu0 0.0
        %4814 = vmatprep.subr.mxu0 0.0
        %4815 = vmatpush1.msra.mxu0 0.0
        %4816 = vmatprep.subr.mxu0 0.0
        %4817 = vmatpush1.msra.mxu0 0.0
        %4818 = vmatprep.subr.mxu0 0.0
        %4819 = vmatpush1.msra.mxu0 0.0
        %4820 = vmatprep.subr.mxu0 0.0
        %4821 = vmatpush1.msra.mxu0 0.0
        %4822 = vmatprep.subr.mxu0 0.0
        %4823 = vmatpush1.msra.mxu0 0.0
        %4824 = vmatprep.subr.mxu0 0.0
        %4825 = vmatpush1.msra.mxu0 0.0
        %4826 = vmatprep.subr.mxu0 0.0
        %4827 = vmatpush1.msra.mxu0 0.0
        %4828 = vmatprep.subr.mxu0 0.0
        %4829 = vmatpush1.msra.mxu0 0.0
        %4830 = vmatprep.subr.mxu0 0.0
        %4831 = vmatpush1.msra.mxu0 0.0
        %4832 = vmatprep.subr.mxu0 0.0
        %4833 = vmatpush1.msra.mxu0 0.0
        %4834 = vmatprep.subr.mxu0 0.0
        %4835 = vmatpush1.msra.mxu0 %v4804
        %4836 = vmatprep.subr.mxu0 0.0
        %4837 = vmatpush1.msra.mxu0 %v4395
        %4838 = vmatprep.subr.mxu0 0.0
        %4839 = vmatpush2.msra.mxu0 0.0
        %4840 = vmatprep.subr.mxu0 0.0
        %4841 = vmatpush2.msra.mxu0 0.0
        %4842 = vmatprep.subr.mxu0 0.0
        %4843 = vmatpush2.msra.mxu0 0.0
        %4844 = vmatprep.subr.mxu0 0.0
        %4845 = vmatpush2.msra.mxu0 0.0
        %4846 = vmatprep.subr.mxu0 0.0
        %4847 = vmatpush2.msra.mxu0 0.0
        %4848 = vmatprep.subr.mxu0 0.0
        %4849 = vmatpush2.msra.mxu0 0.0
        %4850 = vmatprep.subr.mxu0 0.0
        %4851 = vmatpush2.msra.mxu0 0.0
        %4852 = vmatprep.subr.mxu0 0.0
        %4853 = vmatpush2.msra.mxu0 0.0
        %4854 = vmatprep.subr.mxu0 0.0
        %4855 = vmatpush2.msra.mxu0 0.0
        %4856 = vmatprep.subr.mxu0 0.0
        %4857 = vmatpush2.msra.mxu0 0.0
        %4858 = vmatprep.subr.mxu0 0.0
        %4859 = vmatpush2.msra.mxu0 0.0
        %4860 = vmatprep.subr.mxu0 0.0
        %4861 = vmatpush2.msra.mxu0 0.0
        %4862 = vmatprep.subr.mxu0 0.0
        %4863 = vmatpush2.msra.mxu0 0.0
        %4864 = vmatprep.subr.mxu0 0.0
        %4865 = vmatpush2.msra.mxu0 0.0
        %4866 = vmatprep.subr.mxu0 0.0
        %4867 = vmatpush2.msra.mxu0 0.0
        %4868 = vmatprep.subr.mxu0 0.0
        %4869 = vmatpush2.msra.mxu0 0.0
        %4870 = vmatprep.mubr.f32.mxu0 0.0
        %4871 = vmatmul.mubr.f32.gmra.mxu0 %v4800
        %v4872 = vpop.f32.mrf.mxu0
        %v4873 = vadd.f32 0.0, %v4872
        %v4874 = vpop.f32.mrf.mxu0
        %4875 = vdwg.mxu0
        %v4877 = vsel %vm4754, %v4796, 0
        %v4880 = vsel %vm4802, %v4430, 0
        %4882 = vmatprep.subr.mxu0 0.0
        %4883 = vmatpush1.msra.mxu0 0.0
        %4884 = vmatprep.subr.mxu0 0.0
        %4885 = vmatpush1.msra.mxu0 0.0
        %4886 = vmatprep.subr.mxu0 0.0
        %4887 = vmatpush1.msra.mxu0 0.0
        %4888 = vmatprep.subr.mxu0 0.0
        %4889 = vmatpush1.msra.mxu0 0.0
        %4890 = vmatprep.subr.mxu0 0.0
        %4891 = vmatpush1.msra.mxu0 0.0
        %4892 = vmatprep.subr.mxu0 0.0
        %4893 = vmatpush1.msra.mxu0 0.0
        %4894 = vmatprep.subr.mxu0 0.0
        %4895 = vmatpush1.msra.mxu0 0.0
        %4896 = vmatprep.subr.mxu0 0.0
        %4897 = vmatpush1.msra.mxu0 0.0
        %4898 = vmatprep.subr.mxu0 0.0
        %4899 = vmatpush1.msra.mxu0 0.0
        %4900 = vmatprep.subr.mxu0 0.0
        %4901 = vmatpush1.msra.mxu0 0.0
        %4902 = vmatprep.subr.mxu0 0.0
        %4903 = vmatpush1.msra.mxu0 0.0
        %4904 = vmatprep.subr.mxu0 0.0
        %4905 = vmatpush1.msra.mxu0 0.0
        %4906 = vmatprep.subr.mxu0 0.0
        %4907 = vmatpush1.msra.mxu0 0.0
        %4908 = vmatprep.subr.mxu0 0.0
        %4909 = vmatpush1.msra.mxu0 0.0
        %4910 = vmatprep.subr.mxu0 0.0
        %4911 = vmatpush1.msra.mxu0 %v4880
        %4912 = vmatprep.subr.mxu0 0.0
        %4913 = vmatpush1.msra.mxu0 %v4396
        %4914 = vmatprep.subr.mxu0 0.0
        %4915 = vmatpush2.msra.mxu0 0.0
        %4916 = vmatprep.subr.mxu0 0.0
        %4917 = vmatpush2.msra.mxu0 0.0
        %4918 = vmatprep.subr.mxu0 0.0
        %4919 = vmatpush2.msra.mxu0 0.0
        %4920 = vmatprep.subr.mxu0 0.0
        %4921 = vmatpush2.msra.mxu0 0.0
        %4922 = vmatprep.subr.mxu0 0.0
        %4923 = vmatpush2.msra.mxu0 0.0
        %4924 = vmatprep.subr.mxu0 0.0
        %4925 = vmatpush2.msra.mxu0 0.0
        %4926 = vmatprep.subr.mxu0 0.0
        %4927 = vmatpush2.msra.mxu0 0.0
        %4928 = vmatprep.subr.mxu0 0.0
        %4929 = vmatpush2.msra.mxu0 0.0
        %4930 = vmatprep.subr.mxu0 0.0
        %4931 = vmatpush2.msra.mxu0 0.0
        %4932 = vmatprep.subr.mxu0 0.0
        %4933 = vmatpush2.msra.mxu0 0.0
        %4934 = vmatprep.subr.mxu0 0.0
        %4935 = vmatpush2.msra.mxu0 0.0
        %4936 = vmatprep.subr.mxu0 0.0
        %4937 = vmatpush2.msra.mxu0 0.0
        %4938 = vmatprep.subr.mxu0 0.0
        %4939 = vmatpush2.msra.mxu0 0.0
        %4940 = vmatprep.subr.mxu0 0.0
        %4941 = vmatpush2.msra.mxu0 0.0
        %4942 = vmatprep.subr.mxu0 0.0
        %4943 = vmatpush2.msra.mxu0 0.0
        %4944 = vmatprep.subr.mxu0 0.0
        %4945 = vmatpush2.msra.mxu0 0.0
        %4946 = vmatprep.mubr.f32.mxu0 0.0
        %4947 = vmatmul.mubr.f32.gmra.mxu0 %v4877
        %v4948 = vpop.f32.mrf.mxu0
        %v4949 = vadd.f32 0.0, %v4948
        %v4950 = vpop.f32.mrf.mxu0
        %4951 = vdwg.mxu0
        %v4953 = vsel %vm4754, %v4797, 0
        %v4956 = vsel %vm4802, %v4429, 0
        %4958 = vmatprep.subr.mxu0 0.0
        %4959 = vmatpush1.msra.mxu0 0.0
        %4960 = vmatprep.subr.mxu0 0.0
        %4961 = vmatpush1.msra.mxu0 0.0
        %4962 = vmatprep.subr.mxu0 0.0
        %4963 = vmatpush1.msra.mxu0 0.0
        %4964 = vmatprep.subr.mxu0 0.0
        %4965 = vmatpush1.msra.mxu0 0.0
        %4966 = vmatprep.subr.mxu0 0.0
        %4967 = vmatpush1.msra.mxu0 0.0
        %4968 = vmatprep.subr.mxu0 0.0
        %4969 = vmatpush1.msra.mxu0 0.0
        %4970 = vmatprep.subr.mxu0 0.0
        %4971 = vmatpush1.msra.mxu0 0.0
        %4972 = vmatprep.subr.mxu0 0.0
        %4973 = vmatpush1.msra.mxu0 0.0
        %4974 = vmatprep.subr.mxu0 0.0
        %4975 = vmatpush1.msra.mxu0 0.0
        %4976 = vmatprep.subr.mxu0 0.0
        %4977 = vmatpush1.msra.mxu0 0.0
        %4978 = vmatprep.subr.mxu0 0.0
        %4979 = vmatpush1.msra.mxu0 0.0
        %4980 = vmatprep.subr.mxu0 0.0
        %4981 = vmatpush1.msra.mxu0 0.0
        %4982 = vmatprep.subr.mxu0 0.0
        %4983 = vmatpush1.msra.mxu0 0.0
        %4984 = vmatprep.subr.mxu0 0.0
        %4985 = vmatpush1.msra.mxu0 0.0
        %4986 = vmatprep.subr.mxu0 0.0
        %4987 = vmatpush1.msra.mxu0 %v4956
        %4988 = vmatprep.subr.mxu0 0.0
        %4989 = vmatpush1.msra.mxu0 %v4397
        %4990 = vmatprep.subr.mxu0 0.0
        %4991 = vmatpush2.msra.mxu0 0.0
        %4992 = vmatprep.subr.mxu0 0.0
        %4993 = vmatpush2.msra.mxu0 0.0
        %4994 = vmatprep.subr.mxu0 0.0
        %4995 = vmatpush2.msra.mxu0 0.0
        %4996 = vmatprep.subr.mxu0 0.0
        %4997 = vmatpush2.msra.mxu0 0.0
        %4998 = vmatprep.subr.mxu0 0.0
        %4999 = vmatpush2.msra.mxu0 0.0
        %5000 = vmatprep.subr.mxu0 0.0
        %5001 = vmatpush2.msra.mxu0 0.0
        %5002 = vmatprep.subr.mxu0 0.0
        %5003 = vmatpush2.msra.mxu0 0.0
        %5004 = vmatprep.subr.mxu0 0.0
        %5005 = vmatpush2.msra.mxu0 0.0
        %5006 = vmatprep.subr.mxu0 0.0
        %5007 = vmatpush2.msra.mxu0 0.0
        %5008 = vmatprep.subr.mxu0 0.0
        %5009 = vmatpush2.msra.mxu0 0.0
        %5010 = vmatprep.subr.mxu0 0.0
        %5011 = vmatpush2.msra.mxu0 0.0
        %5012 = vmatprep.subr.mxu0 0.0
        %5013 = vmatpush2.msra.mxu0 0.0
        %5014 = vmatprep.subr.mxu0 0.0
        %5015 = vmatpush2.msra.mxu0 0.0
        %5016 = vmatprep.subr.mxu0 0.0
        %5017 = vmatpush2.msra.mxu0 0.0
        %5018 = vmatprep.subr.mxu0 0.0
        %5019 = vmatpush2.msra.mxu0 0.0
        %5020 = vmatprep.subr.mxu0 0.0
        %5021 = vmatpush2.msra.mxu0 0.0
        %5022 = vmatprep.mubr.f32.mxu0 0.0
        %5023 = vmatmul.mubr.f32.gmra.mxu0 %v4953
        %v5024 = vpop.f32.mrf.mxu0
        %v5025 = vadd.f32 0.0, %v5024
        %v5026 = vpop.f32.mrf.mxu0
        %5027 = vdwg.mxu0
        %v5029 = vsel %vm4754, %v4798, 0
        %v5032 = vsel %vm4802, %v4431, 0
        %5034 = vmatprep.subr.mxu0 0.0
        %5035 = vmatpush1.msra.mxu0 0.0
        %5036 = vmatprep.subr.mxu0 0.0
        %5037 = vmatpush1.msra.mxu0 0.0
        %5038 = vmatprep.subr.mxu0 0.0
        %5039 = vmatpush1.msra.mxu0 0.0
        %5040 = vmatprep.subr.mxu0 0.0
        %5041 = vmatpush1.msra.mxu0 0.0
        %5042 = vmatprep.subr.mxu0 0.0
        %5043 = vmatpush1.msra.mxu0 0.0
        %5044 = vmatprep.subr.mxu0 0.0
        %5045 = vmatpush1.msra.mxu0 0.0
        %5046 = vmatprep.subr.mxu0 0.0
        %5047 = vmatpush1.msra.mxu0 0.0
        %5048 = vmatprep.subr.mxu0 0.0
        %5049 = vmatpush1.msra.mxu0 0.0
        %5050 = vmatprep.subr.mxu0 0.0
        %5051 = vmatpush1.msra.mxu0 0.0
        %5052 = vmatprep.subr.mxu0 0.0
        %5053 = vmatpush1.msra.mxu0 0.0
        %5054 = vmatprep.subr.mxu0 0.0
        %5055 = vmatpush1.msra.mxu0 0.0
        %5056 = vmatprep.subr.mxu0 0.0
        %5057 = vmatpush1.msra.mxu0 0.0
        %5058 = vmatprep.subr.mxu0 0.0
        %5059 = vmatpush1.msra.mxu0 0.0
        %5060 = vmatprep.subr.mxu0 0.0
        %5061 = vmatpush1.msra.mxu0 0.0
        %5062 = vmatprep.subr.mxu0 0.0
        %5063 = vmatpush1.msra.mxu0 %v5032
        %5064 = vmatprep.subr.mxu0 0.0
        %5065 = vmatpush1.msra.mxu0 %v4398
        %5066 = vmatprep.subr.mxu0 0.0
        %5067 = vmatpush2.msra.mxu0 0.0
        %5068 = vmatprep.subr.mxu0 0.0
        %5069 = vmatpush2.msra.mxu0 0.0
        %5070 = vmatprep.subr.mxu0 0.0
        %5071 = vmatpush2.msra.mxu0 0.0
        %5072 = vmatprep.subr.mxu0 0.0
        %5073 = vmatpush2.msra.mxu0 0.0
        %5074 = vmatprep.subr.mxu0 0.0
        %5075 = vmatpush2.msra.mxu0 0.0
        %5076 = vmatprep.subr.mxu0 0.0
        %5077 = vmatpush2.msra.mxu0 0.0
        %5078 = vmatprep.subr.mxu0 0.0
        %5079 = vmatpush2.msra.mxu0 0.0
        %5080 = vmatprep.subr.mxu0 0.0
        %5081 = vmatpush2.msra.mxu0 0.0
        %5082 = vmatprep.subr.mxu0 0.0
        %5083 = vmatpush2.msra.mxu0 0.0
        %5084 = vmatprep.subr.mxu0 0.0
        %5085 = vmatpush2.msra.mxu0 0.0
        %5086 = vmatprep.subr.mxu0 0.0
        %5087 = vmatpush2.msra.mxu0 0.0
        %5088 = vmatprep.subr.mxu0 0.0
        %5089 = vmatpush2.msra.mxu0 0.0
        %5090 = vmatprep.subr.mxu0 0.0
        %5091 = vmatpush2.msra.mxu0 0.0
        %5092 = vmatprep.subr.mxu0 0.0
        %5093 = vmatpush2.msra.mxu0 0.0
        %5094 = vmatprep.subr.mxu0 0.0
        %5095 = vmatpush2.msra.mxu0 0.0
        %5096 = vmatprep.subr.mxu0 0.0
        %5097 = vmatpush2.msra.mxu0 0.0
        %5098 = vmatprep.mubr.f32.mxu0 0.0
        %5099 = vmatmul.mubr.f32.gmra.mxu0 %v5029
        %v5100 = vpop.f32.mrf.mxu0
        %v5101 = vadd.f32 0.0, %v5100
        %v5102 = vpop.f32.mrf.mxu0
        %5103 = vdwg.mxu0
        %v5104 = vcombine.low %v4873, %v5025
        %v5105 = vcombine.high %v4873, %v5025
        %v5107 = vunpack.c.l.s4 1983009808
        %v5108 = vunpack.c.0.s8 %v5107
        %v5109 = vlaneseq
        %v5110 = vshrl.u32 %v5109, 7
        %v5111 = vsub.s32 %v5108, %v5110
        %v5112 = vrot.slane %v5104, %v5111
        %v5114 = vunpack.c.l.s4 1983009808
        %v5115 = vunpack.c.0.s8 %v5114
        %v5116 = vlaneseq
        %v5117 = vshrl.u32 %v5116, 7
        %v5118 = vsub.s32 %v5115, %v5117
        %v5119 = vrot.slane %v5105, %v5118
        %v5120 = vcombine.low %v4949, %v5101
        %v5121 = vcombine.high %v4949, %v5101
        %v5123 = vunpack.c.l.s4 1983009808
        %v5124 = vunpack.c.0.s8 %v5123
        %v5125 = vlaneseq
        %v5126 = vshrl.u32 %v5125, 7
        %v5127 = vsub.s32 %v5124, %v5126
        %v5128 = vrot.slane %v5120, %v5127
        %v5130 = vunpack.c.l.s4 1983009808
        %v5131 = vunpack.c.0.s8 %v5130
        %v5132 = vlaneseq
        %v5133 = vshrl.u32 %v5132, 7
        %v5134 = vsub.s32 %v5131, %v5133
        %v5135 = vrot.slane %v5121, %v5134
        %v5136 = vcombine.low %v5112, %v5128
        %v5137 = vcombine.high %v5112, %v5128
        %v5139 = vunpack.c.l.s4 1934713408
        %v5140 = vunpack.c.0.s8 %v5139
        %v5141 = vlaneseq
        %v5142 = vshrl.u32 %v5141, 7
        %v5143 = vsub.s32 %v5140, %v5142
        %v5144 = vrot.slane %v5136, %v5143
        %v5146 = vunpack.c.l.s4 1934713408
        %v5147 = vunpack.c.0.s8 %v5146
        %v5148 = vlaneseq
        %v5149 = vshrl.u32 %v5148, 7
        %v5150 = vsub.s32 %v5147, %v5149
        %v5151 = vrot.slane %v5137, %v5150
        %v5152 = vcombine.low %v5119, %v5135
        %v5153 = vcombine.high %v5119, %v5135
        %v5155 = vunpack.c.l.s4 1934713408
        %v5156 = vunpack.c.0.s8 %v5155
        %v5157 = vlaneseq
        %v5158 = vshrl.u32 %v5157, 7
        %v5159 = vsub.s32 %v5156, %v5158
        %v5160 = vrot.slane %v5152, %v5159
        %v5162 = vunpack.c.l.s4 1934713408
        %v5163 = vunpack.c.0.s8 %v5162
        %v5164 = vlaneseq
        %v5165 = vshrl.u32 %v5164, 7
        %v5166 = vsub.s32 %v5163, %v5165
        %v5167 = vrot.slane %v5153, %v5166
        %v5168 = vcombine.high %v5144, 0.0
        %v5169 = vcombine.high %v5151, 0.0
        %v5170 = vcombine.high %v5160, 0.0
        %v5171 = vcombine.high %v5167, 0.0
        %v5172 = vcombine.low %v5144, %v5151
        %v5174 = vunpack.c.l.s4 1983009808
        %v5175 = vunpack.c.0.s8 %v5174
        %v5176 = vlaneseq
        %v5177 = vshrl.u32 %v5176, 7
        %v5178 = vsub.s32 %v5175, %v5177
        %v5179 = vrot.slane %v5172, %v5178
        %v5180 = vcombine.low %v5168, %v5169
        %v5182 = vunpack.c.l.s4 1983009808
        %v5183 = vunpack.c.0.s8 %v5182
        %v5184 = vlaneseq
        %v5185 = vshrl.u32 %v5184, 7
        %v5186 = vsub.s32 %v5183, %v5185
        %v5187 = vrot.slane %v5180, %v5186
        %v5188 = vcombine.low %v5160, %v5167
        %v5190 = vunpack.c.l.s4 1983009808
        %v5191 = vunpack.c.0.s8 %v5190
        %v5192 = vlaneseq
        %v5193 = vshrl.u32 %v5192, 7
        %v5194 = vsub.s32 %v5191, %v5193
        %v5195 = vrot.slane %v5188, %v5194
        %v5196 = vcombine.low %v5170, %v5171
        %v5198 = vunpack.c.l.s4 1983009808
        %v5199 = vunpack.c.0.s8 %v5198
        %v5200 = vlaneseq
        %v5201 = vshrl.u32 %v5200, 7
        %v5202 = vsub.s32 %v5199, %v5201
        %v5203 = vrot.slane %v5196, %v5202
        %v5204 = vcombine.low %v5179, %v5187
        %v5205 = vcombine.high %v5179, %v5187
        %v5207 = vunpack.c.l.s4 1934713408
        %v5208 = vunpack.c.0.s8 %v5207
        %v5209 = vlaneseq
        %v5210 = vshrl.u32 %v5209, 7
        %v5211 = vsub.s32 %v5208, %v5210
        %v5212 = vrot.slane %v5204, %v5211
        %v5214 = vunpack.c.l.s4 1934713408
        %v5215 = vunpack.c.0.s8 %v5214
        %v5216 = vlaneseq
        %v5217 = vshrl.u32 %v5216, 7
        %v5218 = vsub.s32 %v5215, %v5217
        %v5219 = vrot.slane %v5205, %v5218
        %v5220 = vcombine.low %v5195, %v5203
        %v5221 = vcombine.high %v5195, %v5203
        %v5223 = vunpack.c.l.s4 1934713408
        %v5224 = vunpack.c.0.s8 %v5223
        %v5225 = vlaneseq
        %v5226 = vshrl.u32 %v5225, 7
        %v5227 = vsub.s32 %v5224, %v5226
        %v5228 = vrot.slane %v5220, %v5227
        %v5230 = vunpack.c.l.s4 1934713408
        %v5231 = vunpack.c.0.s8 %v5230
        %v5232 = vlaneseq
        %v5233 = vshrl.u32 %v5232, 7
        %v5234 = vsub.s32 %v5231, %v5233
        %v5235 = vrot.slane %v5221, %v5234
        %v5236 = vcombine.low %v5212, %v5228
        %v5237 = vcombine.high %v5212, %v5228
        %v5238 = vcombine.low %v5219, %v5235
        %v5239 = vcombine.high %v5219, %v5235
        %5241 = vrot.lane.b32.xlu0 %v5237, 8
        %v5242 = vpop.permute.xlu0 %5241
        %5245 = vrot.lane.b32.xlu0 %v5238, 16
        %v5246 = vpop.permute.xlu0 %5245
        %5249 = vrot.lane.b32.xlu0 %v5239, 24
        %v5250 = vpop.permute.xlu0 %5249
        %v5252 = vsel %vm1285, %v5236, %v5242
        %v5253 = vsel %vm2075, %v5252, %v5246
        %v5254 = vsel %vm2077, %v5253, %v5250
        %v5255 = vsel %vm3352, %v3390, 0.0
        %v5256 = vsel %vm3352, %v3392, 0.0
        %v5257 = vadd.f32 %v5255, %v5256
        %v5258 = vsel %vm3352, %v3394, 0.0
        %v5259 = vadd.f32 %v5257, %v5258
        %v5260 = vsel %vm3352, %v3396, 0.0
        %v5261 = vadd.f32 %v5259, %v5260
        %v5262 = vrcp.pop 4.0
        %v5263 = vmul.f32 %v5261, %v5262
        %v5264 = vsel %vm3352, %v5263, 0.0
        %5265 = vst [vmem:[%s722] sm:$0xff] %v5264
        %5267 = vrot.lane.b32.xlu0 %v5254, 32
        %v5268 = vpop.permute.xlu0 %5267
        %v5270 = vsel %vm760, %v3852, %v5268
        %v5271 = vld [vmem:[%s15] sm:$0xff]
        %v5272 = vld [vmem:[%s15 + $0x8] sm:$0xff]
        %v5273 = vld [vmem:[%s15 + $0x10] sm:$0xff]
        %v5274 = vld [vmem:[%s15 + $0x18] sm:$0xff]
        %v5275 = vld [vmem:[%s15 + $0x20] sm:$0xff]
        %v5276 = vld [vmem:[%s15 + $0x28] sm:$0xff]
        %v5277 = vld [vmem:[%s15 + $0x30] sm:$0xff]
        %v5278 = vld [vmem:[%s15 + $0x38] sm:$0xff]
        %v5279 = vld [vmem:[%s16] sm:$0x1]
        %v5281 = vlaneseq
        %v5282 = vshrl.u32 %v5281, 7
        %v5283 = vsub.s32 0, %v5282
        %v5284 = vrot.slane %v5279, %v5283
        %vm5286 = vcmask 523264
        %v5288 = vsel %vm5286, %v5270, 0
        %5290 = vmatprep.subr.mxu0 0.0
        %5291 = vmatpush1.msra.mxu0 0.0
        %5292 = vmatprep.subr.mxu0 0.0
        %5293 = vmatpush1.msra.mxu0 0.0
        %5294 = vmatprep.subr.mxu0 0.0
        %5295 = vmatpush1.msra.mxu0 0.0
        %5296 = vmatprep.subr.mxu0 0.0
        %5297 = vmatpush1.msra.mxu0 0.0
        %5298 = vmatprep.subr.mxu0 0.0
        %5299 = vmatpush1.msra.mxu0 0.0
        %5300 = vmatprep.subr.mxu0 0.0
        %5301 = vmatpush1.msra.mxu0 0.0
        %5302 = vmatprep.subr.mxu0 0.0
        %5303 = vmatpush1.msra.mxu0 0.0
        %5304 = vmatprep.subr.mxu0 0.0
        %5305 = vmatpush1.msra.mxu0 0.0
        %5306 = vmatprep.subr.mxu0 0.0
        %5307 = vmatpush1.msra.mxu0 %v5278
        %5308 = vmatprep.subr.mxu0 0.0
        %5309 = vmatpush1.msra.mxu0 %v5277
        %5310 = vmatprep.subr.mxu0 0.0
        %5311 = vmatpush1.msra.mxu0 %v5276
        %5312 = vmatprep.subr.mxu0 0.0
        %5313 = vmatpush1.msra.mxu0 %v5275
        %5314 = vmatprep.subr.mxu0 0.0
        %5315 = vmatpush1.msra.mxu0 %v5274
        %5316 = vmatprep.subr.mxu0 0.0
        %5317 = vmatpush1.msra.mxu0 %v5273
        %5318 = vmatprep.subr.mxu0 0.0
        %5319 = vmatpush1.msra.mxu0 %v5272
        %5320 = vmatprep.subr.mxu0 0.0
        %5321 = vmatpush1.msra.mxu0 %v5271
        %5322 = vmatprep.subr.mxu0 0.0
        %5323 = vmatpush2.msra.mxu0 0.0
        %5324 = vmatprep.subr.mxu0 0.0
        %5325 = vmatpush2.msra.mxu0 0.0
        %5326 = vmatprep.subr.mxu0 0.0
        %5327 = vmatpush2.msra.mxu0 0.0
        %5328 = vmatprep.subr.mxu0 0.0
        %5329 = vmatpush2.msra.mxu0 0.0
        %5330 = vmatprep.subr.mxu0 0.0
        %5331 = vmatpush2.msra.mxu0 0.0
        %5332 = vmatprep.subr.mxu0 0.0
        %5333 = vmatpush2.msra.mxu0 0.0
        %5334 = vmatprep.subr.mxu0 0.0
        %5335 = vmatpush2.msra.mxu0 0.0
        %5336 = vmatprep.subr.mxu0 0.0
        %5337 = vmatpush2.msra.mxu0 0.0
        %5338 = vmatprep.subr.mxu0 0.0
        %5339 = vmatpush2.msra.mxu0 0.0
        %5340 = vmatprep.subr.mxu0 0.0
        %5341 = vmatpush2.msra.mxu0 0.0
        %5342 = vmatprep.subr.mxu0 0.0
        %5343 = vmatpush2.msra.mxu0 0.0
        %5344 = vmatprep.subr.mxu0 0.0
        %5345 = vmatpush2.msra.mxu0 0.0
        %5346 = vmatprep.subr.mxu0 0.0
        %5347 = vmatpush2.msra.mxu0 0.0
        %5348 = vmatprep.subr.mxu0 0.0
        %5349 = vmatpush2.msra.mxu0 0.0
        %5350 = vmatprep.subr.mxu0 0.0
        %5351 = vmatpush2.msra.mxu0 0.0
        %5352 = vmatprep.subr.mxu0 0.0
        %5353 = vmatpush2.msra.mxu0 0.0
        %5354 = vmatprep.mubr.f32.mxu0 0.0
        %5355 = vmatmul.mubr.f32.gmra.mxu0 %v5288
        %v5356 = vpop.f32.mrf.mxu0
        %v5357 = vadd.f32 %v5284, %v5356
        %v5358 = vpop.f32.mrf.mxu0
        %5359 = vdwg.mxu0
        %v5360 = vmul.f32 %v5357, 0.5
        %v5361 = vadd.f32 %v2163, %v5360
        %v5362 = vld [vmem:[%s17] sm:$0xff]
        %v5363 = vld [vmem:[%s17 + $0x8] sm:$0xff]
        %v5364 = vld [vmem:[%s17 + $0x10] sm:$0xff]
        %v5365 = vld [vmem:[%s17 + $0x18] sm:$0xff]
        %v5366 = vld [vmem:[%s18] sm:$0x1]
        %v5368 = vlaneseq
        %v5369 = vshrl.u32 %v5368, 7
        %v5370 = vsub.s32 0, %v5369
        %v5371 = vrot.slane %v5366, %v5370
        %v5374 = vsel %vm760, %v5361, 0
        %5376 = vmatprep.subr.mxu0 0.0
        %5377 = vmatpush1.msra.mxu0 0.0
        %5378 = vmatprep.subr.mxu0 0.0
        %5379 = vmatpush1.msra.mxu0 0.0
        %5380 = vmatprep.subr.mxu0 0.0
        %5381 = vmatpush1.msra.mxu0 0.0
        %5382 = vmatprep.subr.mxu0 0.0
        %5383 = vmatpush1.msra.mxu0 0.0
        %5384 = vmatprep.subr.mxu0 0.0
        %5385 = vmatpush1.msra.mxu0 0.0
        %5386 = vmatprep.subr.mxu0 0.0
        %5387 = vmatpush1.msra.mxu0 0.0
        %5388 = vmatprep.subr.mxu0 0.0
        %5389 = vmatpush1.msra.mxu0 0.0
        %5390 = vmatprep.subr.mxu0 0.0
        %5391 = vmatpush1.msra.mxu0 0.0
        %5392 = vmatprep.subr.mxu0 0.0
        %5393 = vmatpush1.msra.mxu0 0.0
        %5394 = vmatprep.subr.mxu0 0.0
        %5395 = vmatpush1.msra.mxu0 0.0
        %5396 = vmatprep.subr.mxu0 0.0
        %5397 = vmatpush1.msra.mxu0 0.0
        %5398 = vmatprep.subr.mxu0 0.0
        %5399 = vmatpush1.msra.mxu0 0.0
        %5400 = vmatprep.subr.mxu0 0.0
        %5401 = vmatpush1.msra.mxu0 %v5365
        %5402 = vmatprep.subr.mxu0 0.0
        %5403 = vmatpush1.msra.mxu0 %v5364
        %5404 = vmatprep.subr.mxu0 0.0
        %5405 = vmatpush1.msra.mxu0 %v5363
        %5406 = vmatprep.subr.mxu0 0.0
        %5407 = vmatpush1.msra.mxu0 %v5362
        %5408 = vmatprep.subr.mxu0 0.0
        %5409 = vmatpush2.msra.mxu0 0.0
        %5410 = vmatprep.subr.mxu0 0.0
        %5411 = vmatpush2.msra.mxu0 0.0
        %5412 = vmatprep.subr.mxu0 0.0
        %5413 = vmatpush2.msra.mxu0 0.0
        %5414 = vmatprep.subr.mxu0 0.0
        %5415 = vmatpush2.msra.mxu0 0.0
        %5416 = vmatprep.subr.mxu0 0.0
        %5417 = vmatpush2.msra.mxu0 0.0
        %5418 = vmatprep.subr.mxu0 0.0
        %5419 = vmatpush2.msra.mxu0 0.0
        %5420 = vmatprep.subr.mxu0 0.0
        %5421 = vmatpush2.msra.mxu0 0.0
        %5422 = vmatprep.subr.mxu0 0.0
        %5423 = vmatpush2.msra.mxu0 0.0
        %5424 = vmatprep.subr.mxu0 0.0
        %5425 = vmatpush2.msra.mxu0 0.0
        %5426 = vmatprep.subr.mxu0 0.0
        %5427 = vmatpush2.msra.mxu0 0.0
        %5428 = vmatprep.subr.mxu0 0.0
        %5429 = vmatpush2.msra.mxu0 0.0
        %5430 = vmatprep.subr.mxu0 0.0
        %5431 = vmatpush2.msra.mxu0 0.0
        %5432 = vmatprep.subr.mxu0 0.0
        %5433 = vmatpush2.msra.mxu0 0.0
        %5434 = vmatprep.subr.mxu0 0.0
        %5435 = vmatpush2.msra.mxu0 0.0
        %5436 = vmatprep.subr.mxu0 0.0
        %5437 = vmatpush2.msra.mxu0 0.0
        %5438 = vmatprep.subr.mxu0 0.0
        %5439 = vmatpush2.msra.mxu0 0.0
        %5440 = vmatprep.mubr.f32.mxu0 0.0
        %5441 = vmatmul.mubr.f32.gmra.mxu0 %v5374
        %v5442 = vpop.f32.mrf.mxu0
        %v5443 = vadd.f32 %v5371, %v5442
        %v5444 = vpop.f32.mrf.mxu0
        %5445 = vdwg.mxu0
        %v5446 = vmax.f32 %v5443, 0.0
        %v5447 = vld [vmem:[%s19] sm:$0xff]
        %v5448 = vld [vmem:[%s19 + $0x8] sm:$0xff]
        %v5449 = vld [vmem:[%s19 + $0x10] sm:$0xff]
        %v5450 = vld [vmem:[%s19 + $0x18] sm:$0xff]
        %v5451 = vld [vmem:[%s19 + $0x20] sm:$0xff]
        %v5452 = vld [vmem:[%s19 + $0x28] sm:$0xff]
        %v5453 = vld [vmem:[%s19 + $0x30] sm:$0xff]
        %v5454 = vld [vmem:[%s19 + $0x38] sm:$0xff]
        %v5455 = vld [vmem:[%s20] sm:$0x1]
        %v5457 = vlaneseq
        %v5458 = vshrl.u32 %v5457, 7
        %v5459 = vsub.s32 0, %v5458
        %v5460 = vrot.slane %v5455, %v5459
        %v5463 = vsel %vm5286, %v5446, 0
        %5465 = vmatprep.subr.mxu0 0.0
        %5466 = vmatpush1.msra.mxu0 0.0
        %5467 = vmatprep.subr.mxu0 0.0
        %5468 = vmatpush1.msra.mxu0 0.0
        %5469 = vmatprep.subr.mxu0 0.0
        %5470 = vmatpush1.msra.mxu0 0.0
        %5471 = vmatprep.subr.mxu0 0.0
        %5472 = vmatpush1.msra.mxu0 0.0
        %5473 = vmatprep.subr.mxu0 0.0
        %5474 = vmatpush1.msra.mxu0 0.0
        %5475 = vmatprep.subr.mxu0 0.0
        %5476 = vmatpush1.msra.mxu0 0.0
        %5477 = vmatprep.subr.mxu0 0.0
        %5478 = vmatpush1.msra.mxu0 0.0
        %5479 = vmatprep.subr.mxu0 0.0
        %5480 = vmatpush1.msra.mxu0 0.0
        %5481 = vmatprep.subr.mxu0 0.0
        %5482 = vmatpush1.msra.mxu0 %v5454
        %5483 = vmatprep.subr.mxu0 0.0
        %5484 = vmatpush1.msra.mxu0 %v5453
        %5485 = vmatprep.subr.mxu0 0.0
        %5486 = vmatpush1.msra.mxu0 %v5452
        %5487 = vmatprep.subr.mxu0 0.0
        %5488 = vmatpush1.msra.mxu0 %v5451
        %5489 = vmatprep.subr.mxu0 0.0
        %5490 = vmatpush1.msra.mxu0 %v5450
        %5491 = vmatprep.subr.mxu0 0.0
        %5492 = vmatpush1.msra.mxu0 %v5449
        %5493 = vmatprep.subr.mxu0 0.0
        %5494 = vmatpush1.msra.mxu0 %v5448
        %5495 = vmatprep.subr.mxu0 0.0
        %5496 = vmatpush1.msra.mxu0 %v5447
        %5497 = vmatprep.subr.mxu0 0.0
        %5498 = vmatpush2.msra.mxu0 0.0
        %5499 = vmatprep.subr.mxu0 0.0
        %5500 = vmatpush2.msra.mxu0 0.0
        %5501 = vmatprep.subr.mxu0 0.0
        %5502 = vmatpush2.msra.mxu0 0.0
        %5503 = vmatprep.subr.mxu0 0.0
        %5504 = vmatpush2.msra.mxu0 0.0
        %5505 = vmatprep.subr.mxu0 0.0
        %5506 = vmatpush2.msra.mxu0 0.0
        %5507 = vmatprep.subr.mxu0 0.0
        %5508 = vmatpush2.msra.mxu0 0.0
        %5509 = vmatprep.subr.mxu0 0.0
        %5510 = vmatpush2.msra.mxu0 0.0
        %5511 = vmatprep.subr.mxu0 0.0
        %5512 = vmatpush2.msra.mxu0 0.0
        %5513 = vmatprep.subr.mxu0 0.0
        %5514 = vmatpush2.msra.mxu0 0.0
        %5515 = vmatprep.subr.mxu0 0.0
        %5516 = vmatpush2.msra.mxu0 0.0
        %5517 = vmatprep.subr.mxu0 0.0
        %5518 = vmatpush2.msra.mxu0 0.0
        %5519 = vmatprep.subr.mxu0 0.0
        %5520 = vmatpush2.msra.mxu0 0.0
        %5521 = vmatprep.subr.mxu0 0.0
        %5522 = vmatpush2.msra.mxu0 0.0
        %5523 = vmatprep.subr.mxu0 0.0
        %5524 = vmatpush2.msra.mxu0 0.0
        %5525 = vmatprep.subr.mxu0 0.0
        %5526 = vmatpush2.msra.mxu0 0.0
        %5527 = vmatprep.subr.mxu0 0.0
        %5528 = vmatpush2.msra.mxu0 0.0
        %5529 = vmatprep.mubr.f32.mxu0 0.0
        %5530 = vmatmul.mubr.f32.gmra.mxu0 %v5463
        %v5531 = vpop.f32.mrf.mxu0
        %v5532 = vadd.f32 %v5460, %v5531
        %v5533 = vpop.f32.mrf.mxu0
        %5534 = vdwg.mxu0
        %v5535 = vadd.f32 %v5361, %v5532
        %5536 = vst.msk [vmem:[%s743] sm:$0xff] %vm760, %v5535
        %p5537 = scmp.lt.s32.totalorder %s37, 1
        %s5538 = scalar_select %p5537, %s37, 1
        %s5539 = smul.addr %s5538, 8
        %s5540 = scalar_lea.vmem %s21, %s5539
        %s5541 = sand.u32 %s532, 1
        %s5542 = scalar_lea.sflag [#allocation3], %s5541
        %s5543 = sand.u32 %s532, 1
        %s5544 = smul.addr %s5543, 8
        %s5545 = scalar_lea.vmem [#allocation2], %s5544
        // Predicated region
        $region105: #{decoder_layer_forward.1} parent=103 // pred_check
          %p5546 = pneg %p516
        $region106: #{decoder_layer_forward.1} parent=103 // pred_check_branch
          %5548 = sbr.rel (%p5546) target = $region108
        $region107: #{decoder_layer_forward.1} parent=103 // pred_region
          _
        $region108: #{decoder_layer_forward.1} parent=103 // pred_fallthru
          _
        // Predicated region
        $region109: #{decoder_layer_forward.1} parent=103 // pred_check
          %p5549 = pneg %p542
        $region110: #{decoder_layer_forward.1} parent=103 // pred_check_branch
          %5551 = sbr.rel (%p5549) target = $region112
        $region111: #{decoder_layer_forward.1} parent=103 // pred_region
          %s5553 = ssub.s32 128, 128
          %5554 = vsyncadd %s5542, %s5553
          %s5555 = smul.addr %s37, 128
          %s5556 = scalar_lea.hbm %s22, %s5555
          %s5558 = sshll.u32 %s5545, 4
          %s5559 = int_to_ptr.vmem [resolvable:$true] %s5558
          %5561 = dma.vmem_to_hbm [thread:$0]  %s5559, 128, %s5556, %s5542
        $region112: #{decoder_layer_forward.1} parent=103 // pred_fallthru
          _
      $region104: #{decoder_layer_forward.1} parent=5 // pred_fallthru
        _
      %p5562 = scmp.le.s32.totalorder 2, %s32
      // Predicated region
      $region113: #{decoder_layer_forward.1} parent=5 // pred_check
        %p5563 = pneg %p5562
      $region114: #{decoder_layer_forward.1} parent=5 // pred_check_branch
        %5565 = sbr.rel (%p5563) target = $region116
      $region115: #{decoder_layer_forward.1} parent=5 // pred_region
        %s5566 = ssub.s32 %s32, 2
        // Predicated region
        $region117: #{decoder_layer_forward.1} parent=115 // pred_check
          %p5567 = pneg %p522
        $region118: #{decoder_layer_forward.1} parent=115 // pred_check_branch
          %5569 = sbr.rel (%p5567) target = $region120
        $region119: #{decoder_layer_forward.1} parent=115 // pred_region
          %p5570 = scmp.lt.s32.totalorder %s38, 1
          %s5571 = scalar_select %p5570, %s38, 1
          %s5572 = smul.addr %s5571, 8
          %s5573 = scalar_lea.vmem %s21, %s5572
        $region120: #{decoder_layer_forward.1} parent=115 // pred_fallthru
          _
        // Predicated region
        $region121: #{decoder_layer_forward.1} parent=115 // pred_check
          %p5574 = pneg %p548
        $region122: #{decoder_layer_forward.1} parent=115 // pred_check_branch
          %5576 = sbr.rel (%p5574) target = $region124
        $region123: #{decoder_layer_forward.1} parent=115 // pred_region
          %s5577 = sand.u32 %s533, 1
          %s5578 = scalar_lea.sflag [#allocation3], %s5577
          %s5579 = sand.u32 %s533, 1
          %s5580 = smul.addr %s5579, 8
          %s5581 = scalar_lea.vmem [#allocation2], %s5580
          %5582 = dma.done %s5578, 128
        $region124: #{decoder_layer_forward.1} parent=115 // pred_fallthru
          _
      $region116: #{decoder_layer_forward.1} parent=5 // pred_fallthru
        _
    $region6: #{decoder_layer_forward.1} parent=1 // loop_footer
      %s36 = sadd.s32 1, %s32
    $region7: #{decoder_layer_forward.1} parent=1 // loop_footer_branch
      %31 = sbr.rel target = $region3
    $region8: #{decoder_layer_forward.1} parent=1 // loop_exit
      _
    %5583 = vsyncpa [#allocation3], 1
    %s5584 = scalar_lea.sflag [#allocation3], 1
    %5585 = vsyncpa %s5584, 1

</llo_original>
